<compile_context>
chip_gen: v7x
topology: tpu7x:2x2x1
jax: 0.10.0
libtpu: 0.0.40
codegen_flags: <defaults>
</compile_context>

<pallas_src>
import jax
import jax.numpy as jnp
from jax import lax
from jax.experimental import pallas as pl
from jax.experimental.pallas import tpu as pltpu

# ----------------------------- config ---------------------------------------
B = 2            # batch
S = 8            # sequence length
H = 32           # hidden size
NUM_HEADS = 2
HEAD_DIM = H // NUM_HEADS
FFN = 64         # intermediate size
NUM_LAYERS = 2
VOCAB = 50
TYPE_VOCAB = 2
MAX_POS = 16
NUM_LABELS = 5
LPAD = 128       # label axis padded to a full lane group
LN_EPS = 1e-12   # BERT LayerNorm eps
NEG = -1e30      # fill for padded label lanes (never wins max / logsumexp)
SCALE = 1.0 / float(HEAD_DIM) ** 0.5


# --------------------------- in-kernel helpers --------------------------------
def _ln(x, g, b):
    mu = jnp.mean(x, axis=-1, keepdims=True)
    d = x - mu
    var = jnp.mean(d * d, axis=-1, keepdims=True)
    return d * lax.rsqrt(var + LN_EPS) * g + b


def _gelu(y):
    # TODO(synk): HF BERT default is exact erf-GELU; tanh approximation used here.
    c = jnp.float32(0.7978845608028654)  # sqrt(2/pi)
    return 0.5 * y * (1.0 + jnp.tanh(c * (y + 0.044715 * y * y * y)))


# --------------------------- fused encoder kernel -----------------------------
def _encoder_kernel(emb_ref, bias_ref, eg_ref, eb_ref,
                    qkvw_ref, qkvb_ref, ow_ref, ob_ref, g1_ref, b1_ref,
                    f1w_ref, f1b_ref, f2w_ref, f2b_ref, g2_ref, b2_ref,
                    clsw_ref, clsb_ref, out_ref):
    # One grid step = one batch element; everything below stays in VMEM/vregs.
    x = _ln(emb_ref[...], eg_ref[...], eb_ref[...])          # (S, H)
    bias = bias_ref[0]                                        # (1, S) additive mask

    for l in range(NUM_LAYERS):                               # static unroll
        # fused QKV projection: one (S,H)x(H,3H) MXU push
        qkv = jnp.dot(x, qkvw_ref[l],
                      preferred_element_type=jnp.float32) + qkvb_ref[l]   # (S, 3H)
        o_w = ow_ref[l]                                       # (H, H)
        attn = ob_ref[l]                                      # (1, H) -> broadcasts
        for h in range(NUM_HEADS):                            # static unroll
            q = qkv[:, h * HEAD_DIM:(h + 1) * HEAD_DIM]
            k = qkv[:, H + h * HEAD_DIM:H + (h + 1) * HEAD_DIM]
            v = qkv[:, 2 * H + h * HEAD_DIM:2 * H + (h + 1) * HEAD_DIM]
            s = lax.dot_general(q, k, (((1,), (1,)), ((), ())),
                                preferred_element_type=jnp.float32) * SCALE
            s = s + bias
            s = s - jnp.max(s, axis=-1, keepdims=True)
            p = jnp.exp(s)
            p = p * pl.reciprocal(jnp.sum(p, axis=-1, keepdims=True), approx=True)
            ctx_h = jnp.dot(p, v, preferred_element_type=jnp.float32)     # (S, Dh)
            # accumulate directly through the matching rows of the O projection
            attn = attn + jnp.dot(ctx_h, o_w[h * HEAD_DIM:(h + 1) * HEAD_DIM, :],
                                  preferred_element_type=jnp.float32)
        x = _ln(attn + x, g1_ref[l], b1_ref[l])               # add & LN epilogue

        ff = jnp.dot(x, f1w_ref[l],
                     preferred_element_type=jnp.float32) + f1b_ref[l]
        ff = _gelu(ff)
        ff = jnp.dot(ff, f2w_ref[l],
                     preferred_element_type=jnp.float32) + f2b_ref[l]
        x = _ln(ff + x, g2_ref[l], b2_ref[l])                 # add & LN epilogue

    # classifier head, padded to 128 lanes (pad lanes get -1e30 via the bias)
    out_ref[...] = (jnp.dot(x, clsw_ref[...],
                            preferred_element_type=jnp.float32)
                    + clsb_ref[...]).astype(out_ref.dtype)


def pallas_encoder(packed, emb, attn_bias):
    zero2 = lambda b: (0, 0)
    zero3 = lambda b: (0, 0, 0)
    return pl.pallas_call(
        _encoder_kernel,
        out_shape=jax.ShapeDtypeStruct((B * S, LPAD), jnp.float32),
        grid=(B,),
        in_specs=[
            pl.BlockSpec((S, H), lambda b: (b, 0)),               # emb
            pl.BlockSpec((1, 1, S), lambda b: (b, 0, 0)),         # attn bias
            pl.BlockSpec((1, H), zero2),                          # emb_ln_g
            pl.BlockSpec((1, H), zero2),                          # emb_ln_b
            pl.BlockSpec((NUM_LAYERS, H, 3 * H), zero3),          # qkv_w
            pl.BlockSpec((NUM_LAYERS, 1, 3 * H), zero3),          # qkv_b
            pl.BlockSpec((NUM_LAYERS, H, H), zero3),              # o_w
            pl.BlockSpec((NUM_LAYERS, 1, H), zero3),              # o_b
            pl.BlockSpec((NUM_LAYERS, 1, H), zero3),              # ln1_g
            pl.BlockSpec((NUM_LAYERS, 1, H), zero3),              # ln1_b
            pl.BlockSpec((NUM_LAYERS, H, FFN), zero3),            # ff1_w
            pl.BlockSpec((NUM_LAYERS, 1, FFN), zero3),            # ff1_b
            pl.BlockSpec((NUM_LAYERS, FFN, H), zero3),            # ff2_w
            pl.BlockSpec((NUM_LAYERS, 1, H), zero3),              # ff2_b
            pl.BlockSpec((NUM_LAYERS, 1, H), zero3),              # ln2_g
            pl.BlockSpec((NUM_LAYERS, 1, H), zero3),              # ln2_b
            pl.BlockSpec((H, LPAD), zero2),                       # cls_w (padded)
            pl.BlockSpec((1, LPAD), zero2),                       # cls_b (padded)
        ],
        out_specs=pl.BlockSpec((S, LPAD), lambda b: (b, 0)),
        compiler_params=pltpu.CompilerParams(
            dimension_semantics=("parallel",)),                   # 2 TCs on v7x
    )(emb, attn_bias,
      packed["emb_ln_g"], packed["emb_ln_b"],
      packed["qkv_w"], packed["qkv_b"], packed["o_w"], packed["o_b"],
      packed["ln1_g"], packed["ln1_b"],
      packed["ff1_w"], packed["ff1_b"], packed["ff2_w"], packed["ff2_b"],
      packed["ln2_g"], packed["ln2_b"],
      packed["cls_w"], packed["cls_b"])


# ------------------------------ CRF kernels ------------------------------------
def _crf_loss_kernel(em_ref, lab_ref, mask_ref, st_ref, en_ref, tr_ref, trt_ref,
                     o_ref):
    st = st_ref[...]                      # (1, LPAD), pads = NEG
    en = en_ref[...]                      # (1, LPAD), pads = NEG
    tr = tr_ref[...]                      # (LPAD, LPAD), pads = NEG
    trt = trt_ref[...]                    # transitions.T

    em0 = em_ref[0]                       # (B, LPAD)
    lab0 = lab_ref[0]                     # (B, LPAD) one-hot (pads = 0)
    num = jnp.sum(lab0 * (st + em0), axis=-1, keepdims=True)          # (B, 1)
    alpha = st + em0                                                  # (B, LPAD)
    last_lab = lab0

    for i in range(1, S):                 # static unroll over time
        em_i = em_ref[i]
        lab_i = lab_ref[i]
        lab_prev = lab_ref[i - 1]
        m_i = mask_ref[i]                 # (B, 1)
        # gold-path (numerator) increments
        trans_gold = jnp.sum(
            jnp.dot(lab_prev, tr, preferred_element_type=jnp.float32) * lab_i,
            axis=-1, keepdims=True)
        em_gold = jnp.sum(lab_i * em_i, axis=-1, keepdims=True)
        num = num + m_i * (trans_gold + em_gold)
        # forward algorithm (denominator): VPU broadcast-add logsumexp
        # score3[b, j, k] = alpha[b, k] + transitions[k, j]
        score3 = alpha[:, None, :] + trt[None, :, :]
        amax = jnp.max(score3, axis=-1)                               # (B, LPAD)
        nxt = amax + jnp.log(jnp.sum(jnp.exp(score3 - amax[..., None]),
                                     axis=-1)) + em_i
        alpha = jnp.where(m_i > 0, nxt, alpha)
        last_lab = jnp.where(m_i > 0, lab_i, last_lab)

    num = num + jnp.sum(last_lab * en, axis=-1, keepdims=True)
    alpha = alpha + en
    amax = jnp.max(alpha, axis=-1, keepdims=True)
    den = amax + jnp.log(jnp.sum(jnp.exp(alpha - amax), axis=-1, keepdims=True))
    llh = num - den                                                   # (B, 1)
    o_ref[...] = (-jnp.mean(llh, keepdims=True)).astype(jnp.float32)  # 'mean' red.


def pallas_crf_loss(em_tm, lab_tm, mask_tm, st_pad, en_pad, tr_pad):
    loss = pl.pallas_call(
        _crf_loss_kernel,
        out_shape=jax.ShapeDtypeStruct((1, 1), jnp.float32),
        grid=(1,),
        in_specs=[pl.BlockSpec((S, B, LPAD), lambda i: (0, 0, 0)),
                  pl.BlockSpec((S, B, LPAD), lambda i: (0, 0, 0)),
                  pl.BlockSpec((S, B, 1), lambda i: (0, 0, 0)),
                  pl.BlockSpec((1, LPAD), lambda i: (0, 0)),
                  pl.BlockSpec((1, LPAD), lambda i: (0, 0)),
                  pl.BlockSpec((LPAD, LPAD), lambda i: (0, 0)),
                  pl.BlockSpec((LPAD, LPAD), lambda i: (0, 0))],
        out_specs=pl.BlockSpec((1, 1), lambda i: (0, 0)),
    )(em_tm, lab_tm, mask_tm, st_pad, en_pad, tr_pad, tr_pad.T)
    return loss[0, 0]


def _crf_decode_kernel(em_ref, mask_ref, st_ref, en_ref, trt_ref, tags_ref,
                       hist_ref):
    st = st_ref[...]                      # (1, LPAD)
    en = en_ref[...]
    trt = trt_ref[...]                    # trt[j, k] = transitions[k, j]

    iota_l = lax.broadcasted_iota(jnp.int32, (B, LPAD), 1)
    iota3 = lax.broadcasted_iota(jnp.int32, (B, LPAD, LPAD), 2)

    alpha = st + em_ref[0]                # (B, LPAD)

    for i in range(1, S):                 # static unroll (Viterbi forward)
        em_i = em_ref[i]
        m_i = mask_ref[i]                 # (B, 1)
        score3 = alpha[:, None, :] + trt[None, :, :]
        mx = jnp.max(score3, axis=-1)                                     # (B, LPAD)
        idx = jnp.min(jnp.where(score3 >= mx[..., None], iota3, LPAD), axis=-1)
        hist_ref[i] = idx
        nxt = mx + em_i
        alpha = jnp.where(m_i > 0, nxt, alpha)

    alpha = alpha + en
    amax = jnp.max(alpha, axis=-1, keepdims=True)
    cur = jnp.min(jnp.where(alpha >= amax, iota_l, LPAD),
                  axis=-1, keepdims=True)                                 # (B, 1)

    for k in range(1, S):                 # static unroll (backtracking)
        t = S - k
        m_t = mask_ref[t]                 # (B, 1)
        tags_ref[t] = jnp.where(m_t > 0, cur, jnp.int32(-1))
        hist_t = hist_ref[t]
        cur_oh = iota_l == cur
        new = jnp.sum(jnp.where(cur_oh, hist_t, 0), axis=-1, keepdims=True)
        cur = jnp.where(m_t > 0, new, cur)

    tags_ref[0] = cur                     # t = 0 always valid


def pallas_crf_decode(em_tm, mask_tm, st_pad, en_pad, tr_pad):
    tags = pl.pallas_call(
        _crf_decode_kernel,
        out_shape=jax.ShapeDtypeStruct((S, B, 1), jnp.int32),
        grid=(1,),
        in_specs=[pl.BlockSpec((S, B, LPAD), lambda i: (0, 0, 0)),
                  pl.BlockSpec((S, B, 1), lambda i: (0, 0, 0)),
                  pl.BlockSpec((1, LPAD), lambda i: (0, 0)),
                  pl.BlockSpec((1, LPAD), lambda i: (0, 0)),
                  pl.BlockSpec((LPAD, LPAD), lambda i: (0, 0))],
        out_specs=pl.BlockSpec((S, B, 1), lambda i: (0, 0, 0)),
        scratch_shapes=[pltpu.VMEM((S, B, LPAD), jnp.int32)],
    )(em_tm, mask_tm, st_pad, en_pad, tr_pad.T)
    return jnp.transpose(tags[:, :, 0], (1, 0))                           # (B, S)


# ----------------------------- parameters -----------------------------------
def init_params(key):
    keys = iter(jax.random.split(key, 128))

    def nrm(shape):
        return 0.02 * jax.random.normal(next(keys), shape, jnp.float32)

    def uni(shape):
        return jax.random.uniform(next(keys), shape, jnp.float32, -0.1, 0.1)

    p = {
        "word_emb": nrm((VOCAB, H)),
        "pos_emb": nrm((MAX_POS, H)),
        "type_emb": nrm((TYPE_VOCAB, H)),
        "emb_ln_g": jnp.ones((H,), jnp.float32),
        "emb_ln_b": jnp.zeros((H,), jnp.float32),
        "layers": [],
        "cls_w": nrm((H, NUM_LABELS)),
        "cls_b": jnp.zeros((NUM_LABELS,), jnp.float32),
        "crf_start": uni((NUM_LABELS,)),
        "crf_end": uni((NUM_LABELS,)),
        "crf_trans": uni((NUM_LABELS, NUM_LABELS)),
    }
    for _ in range(NUM_LAYERS):
        p["layers"].append({
            "q_w": nrm((H, H)), "q_b": jnp.zeros((H,), jnp.float32),
            "k_w": nrm((H, H)), "k_b": jnp.zeros((H,), jnp.float32),
            "v_w": nrm((H, H)), "v_b": jnp.zeros((H,), jnp.float32),
            "o_w": nrm((H, H)), "o_b": jnp.zeros((H,), jnp.float32),
            "ln1_g": jnp.ones((H,), jnp.float32), "ln1_b": jnp.zeros((H,), jnp.float32),
            "ff1_w": nrm((H, FFN)), "ff1_b": jnp.zeros((FFN,), jnp.float32),
            "ff2_w": nrm((FFN, H)), "ff2_b": jnp.zeros((H,), jnp.float32),
            "ln2_g": jnp.ones((H,), jnp.float32), "ln2_b": jnp.zeros((H,), jnp.float32),
        })
    return p


def pack_params(p):
    """Stack per-layer weights on a leading axis, fuse QKV, lane-pad label dim."""
    L = p["layers"]

    def stk_w(name):
        return jnp.stack([lp[name] for lp in L])                      # (NL, in, out)

    def stk_b(name):
        return jnp.stack([lp[name][None, :] for lp in L])             # (NL, 1, out)

    packed = {
        "emb_ln_g": p["emb_ln_g"].reshape(1, H),
        "emb_ln_b": p["emb_ln_b"].reshape(1, H),
        "qkv_w": jnp.stack([jnp.concatenate([lp["q_w"], lp["k_w"], lp["v_w"]], axis=1)
                            for lp in L]),                            # (NL, H, 3H)
        "qkv_b": jnp.stack([jnp.concatenate([lp["q_b"], lp["k_b"], lp["v_b"]])[None, :]
                            for lp in L]),                            # (NL, 1, 3H)
        "o_w": stk_w("o_w"), "o_b": stk_b("o_b"),
        "ln1_g": stk_b("ln1_g"), "ln1_b": stk_b("ln1_b"),
        "ff1_w": stk_w("ff1_w"), "ff1_b": stk_b("ff1_b"),
        "ff2_w": stk_w("ff2_w"), "ff2_b": stk_b("ff2_b"),
        "ln2_g": stk_b("ln2_g"), "ln2_b": stk_b("ln2_b"),
        # classifier padded to LPAD lanes; pad lanes get -1e30 via the bias so
        # padded emissions never win max / logsumexp in the CRF.
        "cls_w": jnp.zeros((H, LPAD), jnp.float32).at[:, :NUM_LABELS].set(p["cls_w"]),
        "cls_b": jnp.full((1, LPAD), NEG, jnp.float32).at[0, :NUM_LABELS].set(p["cls_b"]),
        "crf_start": jnp.full((1, LPAD), NEG, jnp.float32).at[0, :NUM_LABELS].set(p["crf_start"]),
        "crf_end": jnp.full((1, LPAD), NEG, jnp.float32).at[0, :NUM_LABELS].set(p["crf_end"]),
        "crf_trans": jnp.full((LPAD, LPAD), NEG, jnp.float32)
                        .at[:NUM_LABELS, :NUM_LABELS].set(p["crf_trans"]),
        "word_emb": p["word_emb"], "pos_emb": p["pos_emb"], "type_emb": p["type_emb"],
    }
    return packed


# ------------------------------ forward -------------------------------------
def bert_token_emissions(packed, input_ids, attention_mask):
    mask_f = attention_mask.astype(jnp.float32)                       # (B, S)
    emb = (packed["word_emb"][input_ids]                              # gather: plain-JAX glue
           + packed["pos_emb"][:S][None, :, :]
           + packed["type_emb"][0][None, None, :]).reshape(B * S, H)
    attn_bias = ((1.0 - mask_f) * (-1e9)).reshape(B, 1, S)            # additive mask
    emissions = pallas_encoder(packed, emb, attn_bias)                # (B*S, LPAD)
    return emissions.reshape(B, S, LPAD)


def bert_crf_forward(packed, input_ids, attention_mask, labels=None):
    """Mirrors BertCrfForNER.forward: loss if labels given, else CRF decode."""
    emissions = bert_token_emissions(packed, input_ids, attention_mask)  # (B, S, LPAD)
    em_tm = jnp.transpose(emissions, (1, 0, 2))                          # (S, B, LPAD)
    mask_tm = jnp.transpose(attention_mask.astype(jnp.float32),
                            (1, 0))[:, :, None]                          # (S, B, 1)
    if labels is not None:
        lab_tm = jnp.transpose(jax.nn.one_hot(labels, LPAD, dtype=jnp.float32),
                               (1, 0, 2))                                # (S, B, LPAD)
        return pallas_crf_loss(em_tm, lab_tm, mask_tm,
                               packed["crf_start"], packed["crf_end"],
                               packed["crf_trans"])
    return pallas_crf_decode(em_tm, mask_tm,
                             packed["crf_start"], packed["crf_end"],
                             packed["crf_trans"])


# ------------------------------- main ----------------------------------------
if __name__ == "__main__":
    key = jax.random.PRNGKey(0)
    pkey, ikey, lkey = jax.random.split(key, 3)

    params = init_params(pkey)
    packed = pack_params(params)

    input_ids = jax.random.randint(ikey, (B, S), 0, VOCAB, dtype=jnp.int32)
    lengths = jnp.array([S, 5], dtype=jnp.int32)                      # variable-length batch
    attention_mask = (jnp.arange(S)[None, :] < lengths[:, None]).astype(jnp.int32)
    labels = jax.random.randint(lkey, (B, S), 0, NUM_LABELS, dtype=jnp.int32)

    # training branch: -CRF log-likelihood (reduction='mean' over batch)
    loss = bert_crf_forward(packed, input_ids, attention_mask, labels)
    # inference branch: Viterbi decode (padded with -1 past each sequence length)
    tags = bert_crf_forward(packed, input_ids, attention_mask)

    jax.block_until_ready((loss, tags))
    print("KERNEL_OK")
</pallas_src>

<mosaic_0001>
module attributes {stable_mosaic.version = 11 : i64} {
  func.func @_encoder_kernel(%arg0: i32, %arg1: memref<8x32xf32, #tpu.memory_space<vmem>>, %arg2: memref<1x1x8xf32, #tpu.memory_space<vmem>>, %arg3: memref<1x32xf32, #tpu.memory_space<vmem>>, %arg4: memref<1x32xf32, #tpu.memory_space<vmem>>, %arg5: memref<2x32x96xf32, #tpu.memory_space<vmem>>, %arg6: memref<2x1x96xf32, #tpu.memory_space<vmem>>, %arg7: memref<2x32x32xf32, #tpu.memory_space<vmem>>, %arg8: memref<2x1x32xf32, #tpu.memory_space<vmem>>, %arg9: memref<2x1x32xf32, #tpu.memory_space<vmem>>, %arg10: memref<2x1x32xf32, #tpu.memory_space<vmem>>, %arg11: memref<2x32x64xf32, #tpu.memory_space<vmem>>, %arg12: memref<2x1x64xf32, #tpu.memory_space<vmem>>, %arg13: memref<2x64x32xf32, #tpu.memory_space<vmem>>, %arg14: memref<2x1x32xf32, #tpu.memory_space<vmem>>, %arg15: memref<2x1x32xf32, #tpu.memory_space<vmem>>, %arg16: memref<2x1x32xf32, #tpu.memory_space<vmem>>, %arg17: memref<32x128xf32, #tpu.memory_space<vmem>>, %arg18: memref<1x128xf32, #tpu.memory_space<vmem>>, %arg19: memref<8x128xf32, #tpu.memory_space<vmem>>) attributes {dimension_semantics = [#tpu.dimension_semantics<parallel>], iteration_bounds = array<i64: 2>, scalar_prefetch = 0 : i64, scratch_operands = 0 : i64, tpu.core_type = #tpu.core_type<tc>, window_params = [{transform_indices = @transform_0, window_bounds = array<i64: 8, 32>}, {transform_indices = @transform_1, window_bounds = array<i64: 1, 1, 8>}, {pipeline_mode = #tpu.pipeline_mode<synchronous>, transform_indices = @transform_2, window_bounds = array<i64: 1, 32>}, {pipeline_mode = #tpu.pipeline_mode<synchronous>, transform_indices = @transform_3, window_bounds = array<i64: 1, 32>}, {pipeline_mode = #tpu.pipeline_mode<synchronous>, transform_indices = @transform_4, window_bounds = array<i64: 2, 32, 96>}, {pipeline_mode = #tpu.pipeline_mode<synchronous>, transform_indices = @transform_5, window_bounds = array<i64: 2, 1, 96>}, {pipeline_mode = #tpu.pipeline_mode<synchronous>, transform_indices = @transform_6, window_bounds = array<i64: 2, 32, 32>}, {pipeline_mode = #tpu.pipeline_mode<synchronous>, transform_indices = @transform_7, window_bounds = array<i64: 2, 1, 32>}, {pipeline_mode = #tpu.pipeline_mode<synchronous>, transform_indices = @transform_8, window_bounds = array<i64: 2, 1, 32>}, {pipeline_mode = #tpu.pipeline_mode<synchronous>, transform_indices = @transform_9, window_bounds = array<i64: 2, 1, 32>}, {pipeline_mode = #tpu.pipeline_mode<synchronous>, transform_indices = @transform_10, window_bounds = array<i64: 2, 32, 64>}, {pipeline_mode = #tpu.pipeline_mode<synchronous>, transform_indices = @transform_11, window_bounds = array<i64: 2, 1, 64>}, {pipeline_mode = #tpu.pipeline_mode<synchronous>, transform_indices = @transform_12, window_bounds = array<i64: 2, 64, 32>}, {pipeline_mode = #tpu.pipeline_mode<synchronous>, transform_indices = @transform_13, window_bounds = array<i64: 2, 1, 32>}, {pipeline_mode = #tpu.pipeline_mode<synchronous>, transform_indices = @transform_14, window_bounds = array<i64: 2, 1, 32>}, {pipeline_mode = #tpu.pipeline_mode<synchronous>, transform_indices = @transform_15, window_bounds = array<i64: 2, 1, 32>}, {pipeline_mode = #tpu.pipeline_mode<synchronous>, transform_indices = @transform_16, window_bounds = array<i64: 32, 128>}, {pipeline_mode = #tpu.pipeline_mode<synchronous>, transform_indices = @transform_17, window_bounds = array<i64: 1, 128>}, {transform_indices = @transform_18, window_bounds = array<i64: 8, 128>}]} {
    %c0 = arith.constant 0 : index
    %c0_0 = arith.constant 0 : index
    %0 = vector.load %arg1[%c0, %c0_0] : memref<8x32xf32, #tpu.memory_space<vmem>>, vector<8x32xf32>
    %c0_1 = arith.constant 0 : index
    %c0_2 = arith.constant 0 : index
    %1 = vector.load %arg3[%c0_1, %c0_2] : memref<1x32xf32, #tpu.memory_space<vmem>>, vector<1x32xf32>
    %c0_3 = arith.constant 0 : index
    %c0_4 = arith.constant 0 : index
    %2 = vector.load %arg4[%c0_3, %c0_4] : memref<1x32xf32, #tpu.memory_space<vmem>>, vector<1x32xf32>
    %cst = arith.constant dense<0.000000e+00> : vector<8xf32>
    %3 = vector.multi_reduction <add>, %0, %cst [1] : vector<8x32xf32> to vector<8xf32>
    %4 = vector.shape_cast %3 : vector<8xf32> to vector<8x1xf32>
    %cst_5 = arith.constant 3.200000e+01 : f32
    %5 = vector.broadcast %cst_5 : f32 to vector<8x1xf32>
    %6 = arith.divf %4, %5 : vector<8x1xf32>
    %7 = vector.broadcast %6 : vector<8x1xf32> to vector<8x32xf32>
    %8 = arith.subf %0, %7 : vector<8x32xf32>
    %9 = arith.mulf %8, %8 : vector<8x32xf32>
    %cst_6 = arith.constant dense<0.000000e+00> : vector<8xf32>
    %10 = vector.multi_reduction <add>, %9, %cst_6 [1] : vector<8x32xf32> to vector<8xf32>
    %11 = vector.shape_cast %10 : vector<8xf32> to vector<8x1xf32>
    %cst_7 = arith.constant 3.200000e+01 : f32
    %12 = vector.broadcast %cst_7 : f32 to vector<8x1xf32>
    %13 = arith.divf %11, %12 : vector<8x1xf32>
    %cst_8 = arith.constant 9.99999996E-13 : f32
    %14 = vector.broadcast %cst_8 : f32 to vector<8x1xf32>
    %15 = arith.addf %13, %14 : vector<8x1xf32>
    %16 = math.rsqrt %15 : vector<8x1xf32>
    %17 = vector.broadcast %16 : vector<8x1xf32> to vector<8x32xf32>
    %18 = arith.mulf %8, %17 : vector<8x32xf32>
    %19 = vector.broadcast %1 : vector<1x32xf32> to vector<8x32xf32>
    %20 = arith.mulf %18, %19 : vector<8x32xf32>
    %21 = vector.broadcast %2 : vector<1x32xf32> to vector<8x32xf32>
    %22 = arith.addf %20, %21 : vector<8x32xf32>
    %c0_9 = arith.constant 0 : index
    %c0_10 = arith.constant 0 : index
    %c0_11 = arith.constant 0 : index
    %23 = vector.load %arg2[%c0_9, %c0_10, %c0_11] : memref<1x1x8xf32, #tpu.memory_space<vmem>>, vector<1x1x8xf32>
    %24 = vector.shape_cast %23 : vector<1x1x8xf32> to vector<1x8xf32>
    %c0_12 = arith.constant 0 : index
    %c0_13 = arith.constant 0 : index
    %c0_14 = arith.constant 0 : index
    %25 = vector.load %arg5[%c0_12, %c0_13, %c0_14] : memref<2x32x96xf32, #tpu.memory_space<vmem>>, vector<1x32x96xf32>
    %26 = vector.shape_cast %25 : vector<1x32x96xf32> to vector<32x96xf32>
    %cst_15 = arith.constant dense<0.000000e+00> : vector<8x96xf32>
    %27 = tpu.matmul %22, %26, %cst_15 {dimension_numbers = #tpu.dot_dimension_numbers<[1], [0], [0], [1], [0, 0, 1, 1], [], []>} : vector<8x32xf32>, vector<32x96xf32>, vector<8x96xf32> -> vector<8x96xf32>
    %c0_16 = arith.constant 0 : index
    %c0_17 = arith.constant 0 : index
    %c0_18 = arith.constant 0 : index
    %28 = vector.load %arg6[%c0_16, %c0_17, %c0_18] : memref<2x1x96xf32, #tpu.memory_space<vmem>>, vector<1x1x96xf32>
    %29 = vector.shape_cast %28 : vector<1x1x96xf32> to vector<1x96xf32>
    %30 = vector.broadcast %29 : vector<1x96xf32> to vector<8x96xf32>
    %31 = arith.addf %27, %30 : vector<8x96xf32>
    %c0_19 = arith.constant 0 : index
    %c0_20 = arith.constant 0 : index
    %c0_21 = arith.constant 0 : index
    %32 = vector.load %arg7[%c0_19, %c0_20, %c0_21] : memref<2x32x32xf32, #tpu.memory_space<vmem>>, vector<1x32x32xf32>
    %33 = vector.shape_cast %32 : vector<1x32x32xf32> to vector<32x32xf32>
    %c0_22 = arith.constant 0 : index
    %c0_23 = arith.constant 0 : index
    %c0_24 = arith.constant 0 : index
    %34 = vector.load %arg8[%c0_22, %c0_23, %c0_24] : memref<2x1x32xf32, #tpu.memory_space<vmem>>, vector<1x1x32xf32>
    %35 = vector.shape_cast %34 : vector<1x1x32xf32> to vector<1x32xf32>
    %36 = vector.extract_strided_slice %31 {offsets = [0, 0], sizes = [8, 16], strides = [1, 1]} : vector<8x96xf32> to vector<8x16xf32>
    %37 = vector.extract_strided_slice %31 {offsets = [0, 32], sizes = [8, 16], strides = [1, 1]} : vector<8x96xf32> to vector<8x16xf32>
    %38 = vector.extract_strided_slice %31 {offsets = [0, 64], sizes = [8, 16], strides = [1, 1]} : vector<8x96xf32> to vector<8x16xf32>
    %cst_25 = arith.constant dense<0.000000e+00> : vector<8x8xf32>
    %39 = tpu.matmul %36, %37, %cst_25 {dimension_numbers = #tpu.dot_dimension_numbers<[1], [1], [0], [0], [0, 0, 1, 0], [], []>} : vector<8x16xf32>, vector<8x16xf32>, vector<8x8xf32> -> vector<8x8xf32>
    %cst_26 = arith.constant 2.500000e-01 : f32
    %40 = vector.broadcast %cst_26 : f32 to vector<8x8xf32>
    %41 = arith.mulf %39, %40 : vector<8x8xf32>
    %42 = vector.broadcast %24 : vector<1x8xf32> to vector<8x8xf32>
    %43 = arith.addf %41, %42 : vector<8x8xf32>
    %cst_27 = arith.constant dense<0xFF800000> : vector<8xf32>
    %44 = vector.multi_reduction <maximumf>, %43, %cst_27 [1] : vector<8x8xf32> to vector<8xf32>
    %45 = vector.shape_cast %44 : vector<8xf32> to vector<8x1xf32>
    %46 = vector.broadcast %45 : vector<8x1xf32> to vector<8x8xf32>
    %47 = arith.subf %43, %46 : vector<8x8xf32>
    %48 = math.exp %47 : vector<8x8xf32>
    %cst_28 = arith.constant dense<0.000000e+00> : vector<8xf32>
    %49 = vector.multi_reduction <add>, %48, %cst_28 [1] : vector<8x8xf32> to vector<8xf32>
    %50 = vector.shape_cast %49 : vector<8xf32> to vector<8x1xf32>
    %51 = tpu.reciprocal %50 {approx = true} : vector<8x1xf32> -> vector<8x1xf32>
    %52 = vector.broadcast %51 : vector<8x1xf32> to vector<8x8xf32>
    %53 = arith.mulf %48, %52 : vector<8x8xf32>
    %cst_29 = arith.constant dense<0.000000e+00> : vector<8x16xf32>
    %54 = tpu.matmul %53, %38, %cst_29 {dimension_numbers = #tpu.dot_dimension_numbers<[1], [0], [0], [1], [0, 0, 1, 1], [], []>} : vector<8x8xf32>, vector<8x16xf32>, vector<8x16xf32> -> vector<8x16xf32>
    %55 = vector.extract_strided_slice %33 {offsets = [0, 0], sizes = [16, 32], strides = [1, 1]} : vector<32x32xf32> to vector<16x32xf32>
    %cst_30 = arith.constant dense<0.000000e+00> : vector<8x32xf32>
    %56 = tpu.matmul %54, %55, %cst_30 {dimension_numbers = #tpu.dot_dimension_numbers<[1], [0], [0], [1], [0, 0, 1, 1], [], []>} : vector<8x16xf32>, vector<16x32xf32>, vector<8x32xf32> -> vector<8x32xf32>
    %57 = vector.broadcast %35 : vector<1x32xf32> to vector<8x32xf32>
    %58 = arith.addf %57, %56 : vector<8x32xf32>
    %59 = vector.extract_strided_slice %31 {offsets = [0, 16], sizes = [8, 16], strides = [1, 1]} : vector<8x96xf32> to vector<8x16xf32>
    %60 = vector.extract_strided_slice %31 {offsets = [0, 48], sizes = [8, 16], strides = [1, 1]} : vector<8x96xf32> to vector<8x16xf32>
    %61 = vector.extract_strided_slice %31 {offsets = [0, 80], sizes = [8, 16], strides = [1, 1]} : vector<8x96xf32> to vector<8x16xf32>
    %cst_31 = arith.constant dense<0.000000e+00> : vector<8x8xf32>
    %62 = tpu.matmul %59, %60, %cst_31 {dimension_numbers = #tpu.dot_dimension_numbers<[1], [1], [0], [0], [0, 0, 1, 0], [], []>} : vector<8x16xf32>, vector<8x16xf32>, vector<8x8xf32> -> vector<8x8xf32>
    %cst_32 = arith.constant 2.500000e-01 : f32
    %63 = vector.broadcast %cst_32 : f32 to vector<8x8xf32>
    %64 = arith.mulf %62, %63 : vector<8x8xf32>
    %65 = vector.broadcast %24 : vector<1x8xf32> to vector<8x8xf32>
    %66 = arith.addf %64, %65 : vector<8x8xf32>
    %cst_33 = arith.constant dense<0xFF800000> : vector<8xf32>
    %67 = vector.multi_reduction <maximumf>, %66, %cst_33 [1] : vector<8x8xf32> to vector<8xf32>
    %68 = vector.shape_cast %67 : vector<8xf32> to vector<8x1xf32>
    %69 = vector.broadcast %68 : vector<8x1xf32> to vector<8x8xf32>
    %70 = arith.subf %66, %69 : vector<8x8xf32>
    %71 = math.exp %70 : vector<8x8xf32>
    %cst_34 = arith.constant dense<0.000000e+00> : vector<8xf32>
    %72 = vector.multi_reduction <add>, %71, %cst_34 [1] : vector<8x8xf32> to vector<8xf32>
    %73 = vector.shape_cast %72 : vector<8xf32> to vector<8x1xf32>
    %74 = tpu.reciprocal %73 {approx = true} : vector<8x1xf32> -> vector<8x1xf32>
    %75 = vector.broadcast %74 : vector<8x1xf32> to vector<8x8xf32>
    %76 = arith.mulf %71, %75 : vector<8x8xf32>
    %cst_35 = arith.constant dense<0.000000e+00> : vector<8x16xf32>
    %77 = tpu.matmul %76, %61, %cst_35 {dimension_numbers = #tpu.dot_dimension_numbers<[1], [0], [0], [1], [0, 0, 1, 1], [], []>} : vector<8x8xf32>, vector<8x16xf32>, vector<8x16xf32> -> vector<8x16xf32>
    %78 = vector.extract_strided_slice %33 {offsets = [16, 0], sizes = [16, 32], strides = [1, 1]} : vector<32x32xf32> to vector<16x32xf32>
    %cst_36 = arith.constant dense<0.000000e+00> : vector<8x32xf32>
    %79 = tpu.matmul %77, %78, %cst_36 {dimension_numbers = #tpu.dot_dimension_numbers<[1], [0], [0], [1], [0, 0, 1, 1], [], []>} : vector<8x16xf32>, vector<16x32xf32>, vector<8x32xf32> -> vector<8x32xf32>
    %80 = arith.addf %58, %79 : vector<8x32xf32>
    %81 = arith.addf %80, %22 : vector<8x32xf32>
    %c0_37 = arith.constant 0 : index
    %c0_38 = arith.constant 0 : index
    %c0_39 = arith.constant 0 : index
    %82 = vector.load %arg9[%c0_37, %c0_38, %c0_39] : memref<2x1x32xf32, #tpu.memory_space<vmem>>, vector<1x1x32xf32>
    %83 = vector.shape_cast %82 : vector<1x1x32xf32> to vector<1x32xf32>
    %c0_40 = arith.constant 0 : index
    %c0_41 = arith.constant 0 : index
    %c0_42 = arith.constant 0 : index
    %84 = vector.load %arg10[%c0_40, %c0_41, %c0_42] : memref<2x1x32xf32, #tpu.memory_space<vmem>>, vector<1x1x32xf32>
    %85 = vector.shape_cast %84 : vector<1x1x32xf32> to vector<1x32xf32>
    %cst_43 = arith.constant dense<0.000000e+00> : vector<8xf32>
    %86 = vector.multi_reduction <add>, %81, %cst_43 [1] : vector<8x32xf32> to vector<8xf32>
    %87 = vector.shape_cast %86 : vector<8xf32> to vector<8x1xf32>
    %cst_44 = arith.constant 3.200000e+01 : f32
    %88 = vector.broadcast %cst_44 : f32 to vector<8x1xf32>
    %89 = arith.divf %87, %88 : vector<8x1xf32>
    %90 = vector.broadcast %89 : vector<8x1xf32> to vector<8x32xf32>
    %91 = arith.subf %81, %90 : vector<8x32xf32>
    %92 = arith.mulf %91, %91 : vector<8x32xf32>
    %cst_45 = arith.constant dense<0.000000e+00> : vector<8xf32>
    %93 = vector.multi_reduction <add>, %92, %cst_45 [1] : vector<8x32xf32> to vector<8xf32>
    %94 = vector.shape_cast %93 : vector<8xf32> to vector<8x1xf32>
    %cst_46 = arith.constant 3.200000e+01 : f32
    %95 = vector.broadcast %cst_46 : f32 to vector<8x1xf32>
    %96 = arith.divf %94, %95 : vector<8x1xf32>
    %cst_47 = arith.constant 9.99999996E-13 : f32
    %97 = vector.broadcast %cst_47 : f32 to vector<8x1xf32>
    %98 = arith.addf %96, %97 : vector<8x1xf32>
    %99 = math.rsqrt %98 : vector<8x1xf32>
    %100 = vector.broadcast %99 : vector<8x1xf32> to vector<8x32xf32>
    %101 = arith.mulf %91, %100 : vector<8x32xf32>
    %102 = vector.broadcast %83 : vector<1x32xf32> to vector<8x32xf32>
    %103 = arith.mulf %101, %102 : vector<8x32xf32>
    %104 = vector.broadcast %85 : vector<1x32xf32> to vector<8x32xf32>
    %105 = arith.addf %103, %104 : vector<8x32xf32>
    %c0_48 = arith.constant 0 : index
    %c0_49 = arith.constant 0 : index
    %c0_50 = arith.constant 0 : index
    %106 = vector.load %arg11[%c0_48, %c0_49, %c0_50] : memref<2x32x64xf32, #tpu.memory_space<vmem>>, vector<1x32x64xf32>
    %107 = vector.shape_cast %106 : vector<1x32x64xf32> to vector<32x64xf32>
    %cst_51 = arith.constant dense<0.000000e+00> : vector<8x64xf32>
    %108 = tpu.matmul %105, %107, %cst_51 {dimension_numbers = #tpu.dot_dimension_numbers<[1], [0], [0], [1], [0, 0, 1, 1], [], []>} : vector<8x32xf32>, vector<32x64xf32>, vector<8x64xf32> -> vector<8x64xf32>
    %c0_52 = arith.constant 0 : index
    %c0_53 = arith.constant 0 : index
    %c0_54 = arith.constant 0 : index
    %109 = vector.load %arg12[%c0_52, %c0_53, %c0_54] : memref<2x1x64xf32, #tpu.memory_space<vmem>>, vector<1x1x64xf32>
    %110 = vector.shape_cast %109 : vector<1x1x64xf32> to vector<1x64xf32>
    %111 = vector.broadcast %110 : vector<1x64xf32> to vector<8x64xf32>
    %112 = arith.addf %108, %111 : vector<8x64xf32>
    %cst_55 = arith.constant 5.000000e-01 : f32
    %113 = vector.broadcast %cst_55 : f32 to vector<8x64xf32>
    %114 = arith.mulf %113, %112 : vector<8x64xf32>
    %cst_56 = arith.constant 4.471500e-02 : f32
    %115 = vector.broadcast %cst_56 : f32 to vector<8x64xf32>
    %116 = arith.mulf %115, %112 : vector<8x64xf32>
    %117 = arith.mulf %116, %112 : vector<8x64xf32>
    %118 = arith.mulf %117, %112 : vector<8x64xf32>
    %119 = arith.addf %112, %118 : vector<8x64xf32>
    %cst_57 = arith.constant 0.797884583 : f32
    %120 = vector.broadcast %cst_57 : f32 to vector<8x64xf32>
    %121 = arith.mulf %120, %119 : vector<8x64xf32>
    %122 = math.tanh %121 : vector<8x64xf32>
    %cst_58 = arith.constant 1.000000e+00 : f32
    %123 = vector.broadcast %cst_58 : f32 to vector<8x64xf32>
    %124 = arith.addf %123, %122 : vector<8x64xf32>
    %125 = arith.mulf %114, %124 : vector<8x64xf32>
    %c0_59 = arith.constant 0 : index
    %c0_60 = arith.constant 0 : index
    %c0_61 = arith.constant 0 : index
    %126 = vector.load %arg13[%c0_59, %c0_60, %c0_61] : memref<2x64x32xf32, #tpu.memory_space<vmem>>, vector<1x64x32xf32>
    %127 = vector.shape_cast %126 : vector<1x64x32xf32> to vector<64x32xf32>
    %cst_62 = arith.constant dense<0.000000e+00> : vector<8x32xf32>
    %128 = tpu.matmul %125, %127, %cst_62 {dimension_numbers = #tpu.dot_dimension_numbers<[1], [0], [0], [1], [0, 0, 1, 1], [], []>} : vector<8x64xf32>, vector<64x32xf32>, vector<8x32xf32> -> vector<8x32xf32>
    %c0_63 = arith.constant 0 : index
    %c0_64 = arith.constant 0 : index
    %c0_65 = arith.constant 0 : index
    %129 = vector.load %arg14[%c0_63, %c0_64, %c0_65] : memref<2x1x32xf32, #tpu.memory_space<vmem>>, vector<1x1x32xf32>
    %130 = vector.shape_cast %129 : vector<1x1x32xf32> to vector<1x32xf32>
    %131 = vector.broadcast %130 : vector<1x32xf32> to vector<8x32xf32>
    %132 = arith.addf %128, %131 : vector<8x32xf32>
    %133 = arith.addf %132, %105 : vector<8x32xf32>
    %c0_66 = arith.constant 0 : index
    %c0_67 = arith.constant 0 : index
    %c0_68 = arith.constant 0 : index
    %134 = vector.load %arg15[%c0_66, %c0_67, %c0_68] : memref<2x1x32xf32, #tpu.memory_space<vmem>>, vector<1x1x32xf32>
    %135 = vector.shape_cast %134 : vector<1x1x32xf32> to vector<1x32xf32>
    %c0_69 = arith.constant 0 : index
    %c0_70 = arith.constant 0 : index
    %c0_71 = arith.constant 0 : index
    %136 = vector.load %arg16[%c0_69, %c0_70, %c0_71] : memref<2x1x32xf32, #tpu.memory_space<vmem>>, vector<1x1x32xf32>
    %137 = vector.shape_cast %136 : vector<1x1x32xf32> to vector<1x32xf32>
    %cst_72 = arith.constant dense<0.000000e+00> : vector<8xf32>
    %138 = vector.multi_reduction <add>, %133, %cst_72 [1] : vector<8x32xf32> to vector<8xf32>
    %139 = vector.shape_cast %138 : vector<8xf32> to vector<8x1xf32>
    %cst_73 = arith.constant 3.200000e+01 : f32
    %140 = vector.broadcast %cst_73 : f32 to vector<8x1xf32>
    %141 = arith.divf %139, %140 : vector<8x1xf32>
    %142 = vector.broadcast %141 : vector<8x1xf32> to vector<8x32xf32>
    %143 = arith.subf %133, %142 : vector<8x32xf32>
    %144 = arith.mulf %143, %143 : vector<8x32xf32>
    %cst_74 = arith.constant dense<0.000000e+00> : vector<8xf32>
    %145 = vector.multi_reduction <add>, %144, %cst_74 [1] : vector<8x32xf32> to vector<8xf32>
    %146 = vector.shape_cast %145 : vector<8xf32> to vector<8x1xf32>
    %cst_75 = arith.constant 3.200000e+01 : f32
    %147 = vector.broadcast %cst_75 : f32 to vector<8x1xf32>
    %148 = arith.divf %146, %147 : vector<8x1xf32>
    %cst_76 = arith.constant 9.99999996E-13 : f32
    %149 = vector.broadcast %cst_76 : f32 to vector<8x1xf32>
    %150 = arith.addf %148, %149 : vector<8x1xf32>
    %151 = math.rsqrt %150 : vector<8x1xf32>
    %152 = vector.broadcast %151 : vector<8x1xf32> to vector<8x32xf32>
    %153 = arith.mulf %143, %152 : vector<8x32xf32>
    %154 = vector.broadcast %135 : vector<1x32xf32> to vector<8x32xf32>
    %155 = arith.mulf %153, %154 : vector<8x32xf32>
    %156 = vector.broadcast %137 : vector<1x32xf32> to vector<8x32xf32>
    %157 = arith.addf %155, %156 : vector<8x32xf32>
    %c1 = arith.constant 1 : index
    %c0_77 = arith.constant 0 : index
    %c0_78 = arith.constant 0 : index
    %158 = vector.load %arg5[%c1, %c0_77, %c0_78] : memref<2x32x96xf32, #tpu.memory_space<vmem>>, vector<1x32x96xf32>
    %159 = vector.shape_cast %158 : vector<1x32x96xf32> to vector<32x96xf32>
    %cst_79 = arith.constant dense<0.000000e+00> : vector<8x96xf32>
    %160 = tpu.matmul %157, %159, %cst_79 {dimension_numbers = #tpu.dot_dimension_numbers<[1], [0], [0], [1], [0, 0, 1, 1], [], []>} : vector<8x32xf32>, vector<32x96xf32>, vector<8x96xf32> -> vector<8x96xf32>
    %c1_80 = arith.constant 1 : index
    %c0_81 = arith.constant 0 : index
    %c0_82 = arith.constant 0 : index
    %161 = vector.load %arg6[%c1_80, %c0_81, %c0_82] : memref<2x1x96xf32, #tpu.memory_space<vmem>>, vector<1x1x96xf32>
    %162 = vector.shape_cast %161 : vector<1x1x96xf32> to vector<1x96xf32>
    %163 = vector.broadcast %162 : vector<1x96xf32> to vector<8x96xf32>
    %164 = arith.addf %160, %163 : vector<8x96xf32>
    %c1_83 = arith.constant 1 : index
    %c0_84 = arith.constant 0 : index
    %c0_85 = arith.constant 0 : index
    %165 = vector.load %arg7[%c1_83, %c0_84, %c0_85] : memref<2x32x32xf32, #tpu.memory_space<vmem>>, vector<1x32x32xf32>
    %166 = vector.shape_cast %165 : vector<1x32x32xf32> to vector<32x32xf32>
    %c1_86 = arith.constant 1 : index
    %c0_87 = arith.constant 0 : index
    %c0_88 = arith.constant 0 : index
    %167 = vector.load %arg8[%c1_86, %c0_87, %c0_88] : memref<2x1x32xf32, #tpu.memory_space<vmem>>, vector<1x1x32xf32>
    %168 = vector.shape_cast %167 : vector<1x1x32xf32> to vector<1x32xf32>
    %169 = vector.extract_strided_slice %164 {offsets = [0, 0], sizes = [8, 16], strides = [1, 1]} : vector<8x96xf32> to vector<8x16xf32>
    %170 = vector.extract_strided_slice %164 {offsets = [0, 32], sizes = [8, 16], strides = [1, 1]} : vector<8x96xf32> to vector<8x16xf32>
    %171 = vector.extract_strided_slice %164 {offsets = [0, 64], sizes = [8, 16], strides = [1, 1]} : vector<8x96xf32> to vector<8x16xf32>
    %cst_89 = arith.constant dense<0.000000e+00> : vector<8x8xf32>
    %172 = tpu.matmul %169, %170, %cst_89 {dimension_numbers = #tpu.dot_dimension_numbers<[1], [1], [0], [0], [0, 0, 1, 0], [], []>} : vector<8x16xf32>, vector<8x16xf32>, vector<8x8xf32> -> vector<8x8xf32>
    %cst_90 = arith.constant 2.500000e-01 : f32
    %173 = vector.broadcast %cst_90 : f32 to vector<8x8xf32>
    %174 = arith.mulf %172, %173 : vector<8x8xf32>
    %175 = vector.broadcast %24 : vector<1x8xf32> to vector<8x8xf32>
    %176 = arith.addf %174, %175 : vector<8x8xf32>
    %cst_91 = arith.constant dense<0xFF800000> : vector<8xf32>
    %177 = vector.multi_reduction <maximumf>, %176, %cst_91 [1] : vector<8x8xf32> to vector<8xf32>
    %178 = vector.shape_cast %177 : vector<8xf32> to vector<8x1xf32>
    %179 = vector.broadcast %178 : vector<8x1xf32> to vector<8x8xf32>
    %180 = arith.subf %176, %179 : vector<8x8xf32>
    %181 = math.exp %180 : vector<8x8xf32>
    %cst_92 = arith.constant dense<0.000000e+00> : vector<8xf32>
    %182 = vector.multi_reduction <add>, %181, %cst_92 [1] : vector<8x8xf32> to vector<8xf32>
    %183 = vector.shape_cast %182 : vector<8xf32> to vector<8x1xf32>
    %184 = tpu.reciprocal %183 {approx = true} : vector<8x1xf32> -> vector<8x1xf32>
    %185 = vector.broadcast %184 : vector<8x1xf32> to vector<8x8xf32>
    %186 = arith.mulf %181, %185 : vector<8x8xf32>
    %cst_93 = arith.constant dense<0.000000e+00> : vector<8x16xf32>
    %187 = tpu.matmul %186, %171, %cst_93 {dimension_numbers = #tpu.dot_dimension_numbers<[1], [0], [0], [1], [0, 0, 1, 1], [], []>} : vector<8x8xf32>, vector<8x16xf32>, vector<8x16xf32> -> vector<8x16xf32>
    %188 = vector.extract_strided_slice %166 {offsets = [0, 0], sizes = [16, 32], strides = [1, 1]} : vector<32x32xf32> to vector<16x32xf32>
    %cst_94 = arith.constant dense<0.000000e+00> : vector<8x32xf32>
    %189 = tpu.matmul %187, %188, %cst_94 {dimension_numbers = #tpu.dot_dimension_numbers<[1], [0], [0], [1], [0, 0, 1, 1], [], []>} : vector<8x16xf32>, vector<16x32xf32>, vector<8x32xf32> -> vector<8x32xf32>
    %190 = vector.broadcast %168 : vector<1x32xf32> to vector<8x32xf32>
    %191 = arith.addf %190, %189 : vector<8x32xf32>
    %192 = vector.extract_strided_slice %164 {offsets = [0, 16], sizes = [8, 16], strides = [1, 1]} : vector<8x96xf32> to vector<8x16xf32>
    %193 = vector.extract_strided_slice %164 {offsets = [0, 48], sizes = [8, 16], strides = [1, 1]} : vector<8x96xf32> to vector<8x16xf32>
    %194 = vector.extract_strided_slice %164 {offsets = [0, 80], sizes = [8, 16], strides = [1, 1]} : vector<8x96xf32> to vector<8x16xf32>
    %cst_95 = arith.constant dense<0.000000e+00> : vector<8x8xf32>
    %195 = tpu.matmul %192, %193, %cst_95 {dimension_numbers = #tpu.dot_dimension_numbers<[1], [1], [0], [0], [0, 0, 1, 0], [], []>} : vector<8x16xf32>, vector<8x16xf32>, vector<8x8xf32> -> vector<8x8xf32>
    %cst_96 = arith.constant 2.500000e-01 : f32
    %196 = vector.broadcast %cst_96 : f32 to vector<8x8xf32>
    %197 = arith.mulf %195, %196 : vector<8x8xf32>
    %198 = vector.broadcast %24 : vector<1x8xf32> to vector<8x8xf32>
    %199 = arith.addf %197, %198 : vector<8x8xf32>
    %cst_97 = arith.constant dense<0xFF800000> : vector<8xf32>
    %200 = vector.multi_reduction <maximumf>, %199, %cst_97 [1] : vector<8x8xf32> to vector<8xf32>
    %201 = vector.shape_cast %200 : vector<8xf32> to vector<8x1xf32>
    %202 = vector.broadcast %201 : vector<8x1xf32> to vector<8x8xf32>
    %203 = arith.subf %199, %202 : vector<8x8xf32>
    %204 = math.exp %203 : vector<8x8xf32>
    %cst_98 = arith.constant dense<0.000000e+00> : vector<8xf32>
    %205 = vector.multi_reduction <add>, %204, %cst_98 [1] : vector<8x8xf32> to vector<8xf32>
    %206 = vector.shape_cast %205 : vector<8xf32> to vector<8x1xf32>
    %207 = tpu.reciprocal %206 {approx = true} : vector<8x1xf32> -> vector<8x1xf32>
    %208 = vector.broadcast %207 : vector<8x1xf32> to vector<8x8xf32>
    %209 = arith.mulf %204, %208 : vector<8x8xf32>
    %cst_99 = arith.constant dense<0.000000e+00> : vector<8x16xf32>
    %210 = tpu.matmul %209, %194, %cst_99 {dimension_numbers = #tpu.dot_dimension_numbers<[1], [0], [0], [1], [0, 0, 1, 1], [], []>} : vector<8x8xf32>, vector<8x16xf32>, vector<8x16xf32> -> vector<8x16xf32>
    %211 = vector.extract_strided_slice %166 {offsets = [16, 0], sizes = [16, 32], strides = [1, 1]} : vector<32x32xf32> to vector<16x32xf32>
    %cst_100 = arith.constant dense<0.000000e+00> : vector<8x32xf32>
    %212 = tpu.matmul %210, %211, %cst_100 {dimension_numbers = #tpu.dot_dimension_numbers<[1], [0], [0], [1], [0, 0, 1, 1], [], []>} : vector<8x16xf32>, vector<16x32xf32>, vector<8x32xf32> -> vector<8x32xf32>
    %213 = arith.addf %191, %212 : vector<8x32xf32>
    %214 = arith.addf %213, %157 : vector<8x32xf32>
    %c1_101 = arith.constant 1 : index
    %c0_102 = arith.constant 0 : index
    %c0_103 = arith.constant 0 : index
    %215 = vector.load %arg9[%c1_101, %c0_102, %c0_103] : memref<2x1x32xf32, #tpu.memory_space<vmem>>, vector<1x1x32xf32>
    %216 = vector.shape_cast %215 : vector<1x1x32xf32> to vector<1x32xf32>
    %c1_104 = arith.constant 1 : index
    %c0_105 = arith.constant 0 : index
    %c0_106 = arith.constant 0 : index
    %217 = vector.load %arg10[%c1_104, %c0_105, %c0_106] : memref<2x1x32xf32, #tpu.memory_space<vmem>>, vector<1x1x32xf32>
    %218 = vector.shape_cast %217 : vector<1x1x32xf32> to vector<1x32xf32>
    %cst_107 = arith.constant dense<0.000000e+00> : vector<8xf32>
    %219 = vector.multi_reduction <add>, %214, %cst_107 [1] : vector<8x32xf32> to vector<8xf32>
    %220 = vector.shape_cast %219 : vector<8xf32> to vector<8x1xf32>
    %cst_108 = arith.constant 3.200000e+01 : f32
    %221 = vector.broadcast %cst_108 : f32 to vector<8x1xf32>
    %222 = arith.divf %220, %221 : vector<8x1xf32>
    %223 = vector.broadcast %222 : vector<8x1xf32> to vector<8x32xf32>
    %224 = arith.subf %214, %223 : vector<8x32xf32>
    %225 = arith.mulf %224, %224 : vector<8x32xf32>
    %cst_109 = arith.constant dense<0.000000e+00> : vector<8xf32>
    %226 = vector.multi_reduction <add>, %225, %cst_109 [1] : vector<8x32xf32> to vector<8xf32>
    %227 = vector.shape_cast %226 : vector<8xf32> to vector<8x1xf32>
    %cst_110 = arith.constant 3.200000e+01 : f32
    %228 = vector.broadcast %cst_110 : f32 to vector<8x1xf32>
    %229 = arith.divf %227, %228 : vector<8x1xf32>
    %cst_111 = arith.constant 9.99999996E-13 : f32
    %230 = vector.broadcast %cst_111 : f32 to vector<8x1xf32>
    %231 = arith.addf %229, %230 : vector<8x1xf32>
    %232 = math.rsqrt %231 : vector<8x1xf32>
    %233 = vector.broadcast %232 : vector<8x1xf32> to vector<8x32xf32>
    %234 = arith.mulf %224, %233 : vector<8x32xf32>
    %235 = vector.broadcast %216 : vector<1x32xf32> to vector<8x32xf32>
    %236 = arith.mulf %234, %235 : vector<8x32xf32>
    %237 = vector.broadcast %218 : vector<1x32xf32> to vector<8x32xf32>
    %238 = arith.addf %236, %237 : vector<8x32xf32>
    %c1_112 = arith.constant 1 : index
    %c0_113 = arith.constant 0 : index
    %c0_114 = arith.constant 0 : index
    %239 = vector.load %arg11[%c1_112, %c0_113, %c0_114] : memref<2x32x64xf32, #tpu.memory_space<vmem>>, vector<1x32x64xf32>
    %240 = vector.shape_cast %239 : vector<1x32x64xf32> to vector<32x64xf32>
    %cst_115 = arith.constant dense<0.000000e+00> : vector<8x64xf32>
    %241 = tpu.matmul %238, %240, %cst_115 {dimension_numbers = #tpu.dot_dimension_numbers<[1], [0], [0], [1], [0, 0, 1, 1], [], []>} : vector<8x32xf32>, vector<32x64xf32>, vector<8x64xf32> -> vector<8x64xf32>
    %c1_116 = arith.constant 1 : index
    %c0_117 = arith.constant 0 : index
    %c0_118 = arith.constant 0 : index
    %242 = vector.load %arg12[%c1_116, %c0_117, %c0_118] : memref<2x1x64xf32, #tpu.memory_space<vmem>>, vector<1x1x64xf32>
    %243 = vector.shape_cast %242 : vector<1x1x64xf32> to vector<1x64xf32>
    %244 = vector.broadcast %243 : vector<1x64xf32> to vector<8x64xf32>
    %245 = arith.addf %241, %244 : vector<8x64xf32>
    %cst_119 = arith.constant 5.000000e-01 : f32
    %246 = vector.broadcast %cst_119 : f32 to vector<8x64xf32>
    %247 = arith.mulf %246, %245 : vector<8x64xf32>
    %cst_120 = arith.constant 4.471500e-02 : f32
    %248 = vector.broadcast %cst_120 : f32 to vector<8x64xf32>
    %249 = arith.mulf %248, %245 : vector<8x64xf32>
    %250 = arith.mulf %249, %245 : vector<8x64xf32>
    %251 = arith.mulf %250, %245 : vector<8x64xf32>
    %252 = arith.addf %245, %251 : vector<8x64xf32>
    %cst_121 = arith.constant 0.797884583 : f32
    %253 = vector.broadcast %cst_121 : f32 to vector<8x64xf32>
    %254 = arith.mulf %253, %252 : vector<8x64xf32>
    %255 = math.tanh %254 : vector<8x64xf32>
    %cst_122 = arith.constant 1.000000e+00 : f32
    %256 = vector.broadcast %cst_122 : f32 to vector<8x64xf32>
    %257 = arith.addf %256, %255 : vector<8x64xf32>
    %258 = arith.mulf %247, %257 : vector<8x64xf32>
    %c1_123 = arith.constant 1 : index
    %c0_124 = arith.constant 0 : index
    %c0_125 = arith.constant 0 : index
    %259 = vector.load %arg13[%c1_123, %c0_124, %c0_125] : memref<2x64x32xf32, #tpu.memory_space<vmem>>, vector<1x64x32xf32>
    %260 = vector.shape_cast %259 : vector<1x64x32xf32> to vector<64x32xf32>
    %cst_126 = arith.constant dense<0.000000e+00> : vector<8x32xf32>
    %261 = tpu.matmul %258, %260, %cst_126 {dimension_numbers = #tpu.dot_dimension_numbers<[1], [0], [0], [1], [0, 0, 1, 1], [], []>} : vector<8x64xf32>, vector<64x32xf32>, vector<8x32xf32> -> vector<8x32xf32>
    %c1_127 = arith.constant 1 : index
    %c0_128 = arith.constant 0 : index
    %c0_129 = arith.constant 0 : index
    %262 = vector.load %arg14[%c1_127, %c0_128, %c0_129] : memref<2x1x32xf32, #tpu.memory_space<vmem>>, vector<1x1x32xf32>
    %263 = vector.shape_cast %262 : vector<1x1x32xf32> to vector<1x32xf32>
    %264 = vector.broadcast %263 : vector<1x32xf32> to vector<8x32xf32>
    %265 = arith.addf %261, %264 : vector<8x32xf32>
    %266 = arith.addf %265, %238 : vector<8x32xf32>
    %c1_130 = arith.constant 1 : index
    %c0_131 = arith.constant 0 : index
    %c0_132 = arith.constant 0 : index
    %267 = vector.load %arg15[%c1_130, %c0_131, %c0_132] : memref<2x1x32xf32, #tpu.memory_space<vmem>>, vector<1x1x32xf32>
    %268 = vector.shape_cast %267 : vector<1x1x32xf32> to vector<1x32xf32>
    %c1_133 = arith.constant 1 : index
    %c0_134 = arith.constant 0 : index
    %c0_135 = arith.constant 0 : index
    %269 = vector.load %arg16[%c1_133, %c0_134, %c0_135] : memref<2x1x32xf32, #tpu.memory_space<vmem>>, vector<1x1x32xf32>
    %270 = vector.shape_cast %269 : vector<1x1x32xf32> to vector<1x32xf32>
    %cst_136 = arith.constant dense<0.000000e+00> : vector<8xf32>
    %271 = vector.multi_reduction <add>, %266, %cst_136 [1] : vector<8x32xf32> to vector<8xf32>
    %272 = vector.shape_cast %271 : vector<8xf32> to vector<8x1xf32>
    %cst_137 = arith.constant 3.200000e+01 : f32
    %273 = vector.broadcast %cst_137 : f32 to vector<8x1xf32>
    %274 = arith.divf %272, %273 : vector<8x1xf32>
    %275 = vector.broadcast %274 : vector<8x1xf32> to vector<8x32xf32>
    %276 = arith.subf %266, %275 : vector<8x32xf32>
    %277 = arith.mulf %276, %276 : vector<8x32xf32>
    %cst_138 = arith.constant dense<0.000000e+00> : vector<8xf32>
    %278 = vector.multi_reduction <add>, %277, %cst_138 [1] : vector<8x32xf32> to vector<8xf32>
    %279 = vector.shape_cast %278 : vector<8xf32> to vector<8x1xf32>
    %cst_139 = arith.constant 3.200000e+01 : f32
    %280 = vector.broadcast %cst_139 : f32 to vector<8x1xf32>
    %281 = arith.divf %279, %280 : vector<8x1xf32>
    %cst_140 = arith.constant 9.99999996E-13 : f32
    %282 = vector.broadcast %cst_140 : f32 to vector<8x1xf32>
    %283 = arith.addf %281, %282 : vector<8x1xf32>
    %284 = math.rsqrt %283 : vector<8x1xf32>
    %285 = vector.broadcast %284 : vector<8x1xf32> to vector<8x32xf32>
    %286 = arith.mulf %276, %285 : vector<8x32xf32>
    %287 = vector.broadcast %268 : vector<1x32xf32> to vector<8x32xf32>
    %288 = arith.mulf %286, %287 : vector<8x32xf32>
    %289 = vector.broadcast %270 : vector<1x32xf32> to vector<8x32xf32>
    %290 = arith.addf %288, %289 : vector<8x32xf32>
    %c0_141 = arith.constant 0 : index
    %c0_142 = arith.constant 0 : index
    %291 = vector.load %arg17[%c0_141, %c0_142] : memref<32x128xf32, #tpu.memory_space<vmem>>, vector<32x128xf32>
    %cst_143 = arith.constant dense<0.000000e+00> : vector<8x128xf32>
    %292 = tpu.matmul %290, %291, %cst_143 {dimension_numbers = #tpu.dot_dimension_numbers<[1], [0], [0], [1], [0, 0, 1, 1], [], []>} : vector<8x32xf32>, vector<32x128xf32>, vector<8x128xf32> -> vector<8x128xf32>
    %c0_144 = arith.constant 0 : index
    %c0_145 = arith.constant 0 : index
    %293 = vector.load %arg18[%c0_144, %c0_145] : memref<1x128xf32, #tpu.memory_space<vmem>>, vector<1x128xf32>
    %294 = vector.broadcast %293 : vector<1x128xf32> to vector<8x128xf32>
    %295 = arith.addf %292, %294 : vector<8x128xf32>
    %c0_146 = arith.constant 0 : index
    %c0_147 = arith.constant 0 : index
    %296 = vector.load %arg19[%c0_146, %c0_147] : memref<8x128xf32, #tpu.memory_space<vmem>>, vector<8x128xf32>
    tpu.vector_store %arg19[%c0_146, %c0_147], %295 {strides = array<i32>} : memref<8x128xf32, #tpu.memory_space<vmem>>, vector<8x128xf32>,
    return
  }
  func.func @transform_0(%arg0: i32) -> (i32, i32) {
    %c0_i32 = arith.constant 0 : i32
    %c0_i32_0 = arith.constant 0 : i32
    return %arg0, %c0_i32 : i32, i32
  }
  func.func @transform_1(%arg0: i32) -> (i32, i32, i32) {
    %c0_i32 = arith.constant 0 : i32
    %c0_i32_0 = arith.constant 0 : i32
    %c0_i32_1 = arith.constant 0 : i32
    return %arg0, %c0_i32, %c0_i32_0 : i32, i32, i32
  }
  func.func @transform_2(%arg0: i32) -> (i32, i32) {
    %c0_i32 = arith.constant 0 : i32
    %c0_i32_0 = arith.constant 0 : i32
    %c0_i32_1 = arith.constant 0 : i32
    return %c0_i32, %c0_i32_0 : i32, i32
  }
  func.func @transform_3(%arg0: i32) -> (i32, i32) {
    %c0_i32 = arith.constant 0 : i32
    %c0_i32_0 = arith.constant 0 : i32
    %c0_i32_1 = arith.constant 0 : i32
    return %c0_i32, %c0_i32_0 : i32, i32
  }
  func.func @transform_4(%arg0: i32) -> (i32, i32, i32) {
    %c0_i32 = arith.constant 0 : i32
    %c0_i32_0 = arith.constant 0 : i32
    %c0_i32_1 = arith.constant 0 : i32
    %c0_i32_2 = arith.constant 0 : i32
    return %c0_i32, %c0_i32_0, %c0_i32_1 : i32, i32, i32
  }
  func.func @transform_5(%arg0: i32) -> (i32, i32, i32) {
    %c0_i32 = arith.constant 0 : i32
    %c0_i32_0 = arith.constant 0 : i32
    %c0_i32_1 = arith.constant 0 : i32
    %c0_i32_2 = arith.constant 0 : i32
    return %c0_i32, %c0_i32_0, %c0_i32_1 : i32, i32, i32
  }
  func.func @transform_6(%arg0: i32) -> (i32, i32, i32) {
    %c0_i32 = arith.constant 0 : i32
    %c0_i32_0 = arith.constant 0 : i32
    %c0_i32_1 = arith.constant 0 : i32
    %c0_i32_2 = arith.constant 0 : i32
    return %c0_i32, %c0_i32_0, %c0_i32_1 : i32, i32, i32
  }
  func.func @transform_7(%arg0: i32) -> (i32, i32, i32) {
    %c0_i32 = arith.constant 0 : i32
    %c0_i32_0 = arith.constant 0 : i32
    %c0_i32_1 = arith.constant 0 : i32
    %c0_i32_2 = arith.constant 0 : i32
    return %c0_i32, %c0_i32_0, %c0_i32_1 : i32, i32, i32
  }
  func.func @transform_8(%arg0: i32) -> (i32, i32, i32) {
    %c0_i32 = arith.constant 0 : i32
    %c0_i32_0 = arith.constant 0 : i32
    %c0_i32_1 = arith.constant 0 : i32
    %c0_i32_2 = arith.constant 0 : i32
    return %c0_i32, %c0_i32_0, %c0_i32_1 : i32, i32, i32
  }
  func.func @transform_9(%arg0: i32) -> (i32, i32, i32) {
    %c0_i32 = arith.constant 0 : i32
    %c0_i32_0 = arith.constant 0 : i32
    %c0_i32_1 = arith.constant 0 : i32
    %c0_i32_2 = arith.constant 0 : i32
    return %c0_i32, %c0_i32_0, %c0_i32_1 : i32, i32, i32
  }
  func.func @transform_10(%arg0: i32) -> (i32, i32, i32) {
    %c0_i32 = arith.constant 0 : i32
    %c0_i32_0 = arith.constant 0 : i32
    %c0_i32_1 = arith.constant 0 : i32
    %c0_i32_2 = arith.constant 0 : i32
    return %c0_i32, %c0_i32_0, %c0_i32_1 : i32, i32, i32
  }
  func.func @transform_11(%arg0: i32) -> (i32, i32, i32) {
    %c0_i32 = arith.constant 0 : i32
    %c0_i32_0 = arith.constant 0 : i32
    %c0_i32_1 = arith.constant 0 : i32
    %c0_i32_2 = arith.constant 0 : i32
    return %c0_i32, %c0_i32_0, %c0_i32_1 : i32, i32, i32
  }
  func.func @transform_12(%arg0: i32) -> (i32, i32, i32) {
    %c0_i32 = arith.constant 0 : i32
    %c0_i32_0 = arith.constant 0 : i32
    %c0_i32_1 = arith.constant 0 : i32
    %c0_i32_2 = arith.constant 0 : i32
    return %c0_i32, %c0_i32_0, %c0_i32_1 : i32, i32, i32
  }
  func.func @transform_13(%arg0: i32) -> (i32, i32, i32) {
    %c0_i32 = arith.constant 0 : i32
    %c0_i32_0 = arith.constant 0 : i32
    %c0_i32_1 = arith.constant 0 : i32
    %c0_i32_2 = arith.constant 0 : i32
    return %c0_i32, %c0_i32_0, %c0_i32_1 : i32, i32, i32
  }
  func.func @transform_14(%arg0: i32) -> (i32, i32, i32) {
    %c0_i32 = arith.constant 0 : i32
    %c0_i32_0 = arith.constant 0 : i32
    %c0_i32_1 = arith.constant 0 : i32
    %c0_i32_2 = arith.constant 0 : i32
    return %c0_i32, %c0_i32_0, %c0_i32_1 : i32, i32, i32
  }
  func.func @transform_15(%arg0: i32) -> (i32, i32, i32) {
    %c0_i32 = arith.constant 0 : i32
    %c0_i32_0 = arith.constant 0 : i32
    %c0_i32_1 = arith.constant 0 : i32
    %c0_i32_2 = arith.constant 0 : i32
    return %c0_i32, %c0_i32_0, %c0_i32_1 : i32, i32, i32
  }
  func.func @transform_16(%arg0: i32) -> (i32, i32) {
    %c0_i32 = arith.constant 0 : i32
    %c0_i32_0 = arith.constant 0 : i32
    %c0_i32_1 = arith.constant 0 : i32
    return %c0_i32, %c0_i32_0 : i32, i32
  }
  func.func @transform_17(%arg0: i32) -> (i32, i32) {
    %c0_i32 = arith.constant 0 : i32
    %c0_i32_0 = arith.constant 0 : i32
    %c0_i32_1 = arith.constant 0 : i32
    return %c0_i32, %c0_i32_0 : i32, i32
  }
  func.func @transform_18(%arg0: i32) -> (i32, i32) {
    %c0_i32 = arith.constant 0 : i32
    %c0_i32_0 = arith.constant 0 : i32
    return %arg0, %c0_i32 : i32, i32
  }
}

</mosaic_0001>

<llo_original>
// kernel: tpu_custom_call.1
$region0: #{tpu_custom_call.1}
  #allocation0 [shape = 'u32[]', space=smem, size = 0x4, offset = 0x4, fixed_abs, tag = 'smem constant byte address 0x4 - core index']
  #allocation1 [shape = 'u32[144,128]{1,0:T(1,128)}', space=vmem, size = 0x12000, scoped, tag = 'internal scratch']
  %s0 = inlined_call_operand.hbm [shape: f32[16,32], index: 0, kind: input, shape index: {}]
  %s1 = inlined_call_operand.vmem [shape: f32[2,1,8], index: 1, kind: input, shape index: {}]
  %s2 = inlined_call_operand.hbm [shape: f32[1,32], index: 2, kind: input, shape index: {}]
  %s3 = inlined_call_operand.hbm [shape: f32[1,32], index: 3, kind: input, shape index: {}]
  %s4 = inlined_call_operand.vmem [shape: f32[2,32,96], index: 4, kind: input, shape index: {}]
  %s5 = inlined_call_operand.hbm [shape: f32[2,1,96], index: 5, kind: input, shape index: {}]
  %s6 = inlined_call_operand.vmem [shape: f32[2,32,32], index: 6, kind: input, shape index: {}]
  %s7 = inlined_call_operand.hbm [shape: f32[2,1,32], index: 7, kind: input, shape index: {}]
  %s8 = inlined_call_operand.hbm [shape: f32[2,1,32], index: 8, kind: input, shape index: {}]
  %s9 = inlined_call_operand.hbm [shape: f32[2,1,32], index: 9, kind: input, shape index: {}]
  %s10 = inlined_call_operand.vmem [shape: f32[2,32,64], index: 10, kind: input, shape index: {}]
  %s11 = inlined_call_operand.vmem [shape: f32[2,1,64], index: 11, kind: input, shape index: {}]
  %s12 = inlined_call_operand.vmem [shape: f32[2,64,32], index: 12, kind: input, shape index: {}]
  %s13 = inlined_call_operand.vmem [shape: f32[2,1,32], index: 13, kind: input, shape index: {}]
  %s14 = inlined_call_operand.vmem [shape: f32[2,1,32], index: 14, kind: input, shape index: {}]
  %s15 = inlined_call_operand.vmem [shape: f32[2,1,32], index: 15, kind: input, shape index: {}]
  %s16 = inlined_call_operand.vmem [shape: f32[32,128], index: 16, kind: input, shape index: {}]
  %s17 = inlined_call_operand.vmem [shape: f32[1,128], index: 17, kind: input, shape index: {}]
  %s18 = inlined_call_operand.hbm [shape: f32[16,128], index: 18, kind: output, shape index: {}]
  %s19 = sld [smem:[#allocation0]]
  $region133: #{tpu_custom_call.1} parent=0
    _
  %s21 = ssub.s32 1, %s19
  %s22 = scalar_select 0, %s21, %s19
  $region1: #{tpu_custom_call.1} parent=0
    #allocation2 [shape = 'u8[8192]{0}', space=vmem, size = 0x2000, scoped, tag = 'input window, operand 0']
    #allocation3 [shape = 's32[2]{0}', space=sflag, size = 0x8, scoped, tag = 'scoped memory for tpu_custom_call.1']
    #allocation4 [shape = 's32[2]{0}', space=sflag, size = 0x8, scoped, tag = 'scoped memory for tpu_custom_call.1']
    #allocation5 [shape = 'u8[512]{0}', space=vmem, size = 0x400, scoped, tag = 'input window, operand 2, single buffered']
    #allocation6 [shape = 's32[1]{0}', space=sflag, size = 0x4, scoped, tag = 'scoped memory for tpu_custom_call.1']
    #allocation7 [shape = 'u8[512]{0}', space=vmem, size = 0x400, scoped, tag = 'input window, operand 3, single buffered']
    #allocation8 [shape = 'u8[1024]{0}', space=vmem, size = 0x400, scoped, tag = 'input window, operand 5, single buffered']
    #allocation9 [shape = 's32[1]{0}', space=sflag, size = 0x4, scoped, tag = 'scoped memory for tpu_custom_call.1']
    #allocation10 [shape = 'u8[1024]{0}', space=vmem, size = 0x400, scoped, tag = 'input window, operand 7, single buffered']
    #allocation11 [shape = 'u8[1024]{0}', space=vmem, size = 0x400, scoped, tag = 'input window, operand 8, single buffered']
    #allocation12 [shape = 's32[1]{0}', space=sflag, size = 0x4, scoped, tag = 'scoped memory for tpu_custom_call.1']
    #allocation13 [shape = 'u8[1024]{0}', space=vmem, size = 0x400, scoped, tag = 'input window, operand 9, single buffered']
    #allocation14 [shape = 'u8[8192]{0}', space=vmem, size = 0x2000, scoped, tag = 'output window, operand 0']
    %23 = vsyncpa [#allocation3], 0
    %s24 = scalar_lea.sflag [#allocation3], 1
    %25 = vsyncpa %s24, 0
    %26 = vsyncpa [#allocation6], 0
    %27 = vsyncpa [#allocation9], 0
    %28 = vsyncpa [#allocation12], 0
    %29 = vsyncpa [#allocation4], 0
    %s30 = scalar_lea.sflag [#allocation4], 1
    %31 = vsyncpa %s30, 0
    loop: start=0, step=1, limit=4
    $region2: #{tpu_custom_call.1} parent=1 // loop_pre_header
      _
    $region3: #{tpu_custom_call.1} parent=1 // loop_header
      %s33 = sphi 0, %s37
      %p34 = scmp.ge.s32.totalorder %s33, 4
      %s43 = sphi 0, %s45
      %s46 = sphi 0, %s43
      %s47 = sphi 0, %s46
      %s63 = sphi 0, %s47
      %s69 = sphi 0, %s71
      %s72 = sphi 0, %s69
      %s73 = sphi 0, %s72
      %s89 = sphi 0, %s73
      %s93 = sphi 0, %s93
      %s95 = sphi 0, %s93
      %s96 = sphi 0, %s95
      %s110 = sphi 0, %s96
      %s114 = sphi 0, %s114
      %s116 = sphi 0, %s114
      %s117 = sphi 0, %s116
      %s131 = sphi 0, %s117
      %s135 = sphi 0, %s135
      %s137 = sphi 0, %s135
      %s138 = sphi 0, %s137
      %s152 = sphi 0, %s138
      %s156 = sphi 0, %s156
      %s158 = sphi 0, %s156
      %s159 = sphi 0, %s158
      %s173 = sphi 0, %s159
      %s177 = sphi 0, %s177
      %s179 = sphi 0, %s177
      %s180 = sphi 0, %s179
      %s194 = sphi 0, %s180
      %s198 = sphi 0, %s198
      %s200 = sphi 0, %s198
      %s201 = sphi 0, %s200
      %s215 = sphi 0, %s201
      %s219 = sphi 0, %s219
      %s221 = sphi 0, %s219
      %s222 = sphi 0, %s221
      %s236 = sphi 0, %s222
      %s240 = sphi 0, %s240
      %s242 = sphi 0, %s240
      %s243 = sphi 0, %s242
      %s257 = sphi 0, %s243
      %s261 = sphi 0, %s261
      %s263 = sphi 0, %s261
      %s264 = sphi 0, %s263
      %s278 = sphi 0, %s264
      %s282 = sphi 0, %s282
      %s284 = sphi 0, %s282
      %s285 = sphi 0, %s284
      %s299 = sphi 0, %s285
      %s303 = sphi 0, %s303
      %s305 = sphi 0, %s303
      %s306 = sphi 0, %s305
      %s320 = sphi 0, %s306
      %s324 = sphi 0, %s324
      %s326 = sphi 0, %s324
      %s327 = sphi 0, %s326
      %s341 = sphi 0, %s327
      %s345 = sphi 0, %s345
      %s347 = sphi 0, %s345
      %s348 = sphi 0, %s347
      %s362 = sphi 0, %s348
      %s366 = sphi 0, %s366
      %s368 = sphi 0, %s366
      %s369 = sphi 0, %s368
      %s383 = sphi 0, %s369
      %s387 = sphi 0, %s387
      %s389 = sphi 0, %s387
      %s390 = sphi 0, %s389
      %s404 = sphi 0, %s390
      %s408 = sphi 0, %s408
      %s410 = sphi 0, %s408
      %s411 = sphi 0, %s410
      %s425 = sphi 0, %s411
      %s431 = sphi 0, %s433
      %s434 = sphi 0, %s431
      %s435 = sphi 0, %s434
      %s451 = sphi 0, %s435
    $region4: #{tpu_custom_call.1} parent=1 // loop_header_branch
      %36 = sbr.rel (%p34) target = $region8
    $region5: #{tpu_custom_call.1} parent=1 // loop_body
      %s38 = ssub.s32 %s33, 1
      %s39 = ssub.s32 %s33, 2
      %s40 = sadd.s32 %s33, 1
      %s41 = ssub.s32 %s33, %s40
      %p42 = scmp.eq.s32.totalorder %s41, 0
      %s44 = sadd.s32 %s43, 1
      %s45 = scalar_select %p42, %s43, %s44
      %p48 = pneg %p42
      %p49 = scmp.eq.s32.totalorder %s33, 1
      %p50 = por %p48, %p49
      %p51 = scmp.ne.s32.totalorder %s43, %s46
      %p52 = scmp.eq.s32.totalorder %s33, 0
      %p53 = por %p51, %p52
      %p54 = scmp.ne.s32.totalorder %s43, %s46
      %p55 = scmp.eq.s32.totalorder %s38, 1
      %p56 = por %p54, %p55
      %p57 = scmp.ne.s32.totalorder %s46, %s47
      %p58 = scmp.eq.s32.totalorder %s38, 0
      %p59 = por %p57, %p58
      %p60 = scmp.ne.s32.totalorder %s46, %s47
      %p61 = scmp.eq.s32.totalorder %s39, 1
      %p62 = por %p60, %p61
      %p64 = scmp.ne.s32.totalorder %s47, %s63
      %p65 = scmp.eq.s32.totalorder %s39, 0
      %p66 = por %p64, %p65
      %s67 = ssub.s32 %s33, %s40
      %p68 = scmp.eq.s32.totalorder %s67, 0
      %s70 = sadd.s32 %s69, 1
      %s71 = scalar_select %p68, %s69, %s70
      %p74 = pneg %p68
      %p75 = scmp.eq.s32.totalorder %s33, 1
      %p76 = por %p74, %p75
      %p77 = scmp.ne.s32.totalorder %s69, %s72
      %p78 = scmp.eq.s32.totalorder %s33, 0
      %p79 = por %p77, %p78
      %p80 = scmp.ne.s32.totalorder %s69, %s72
      %p81 = scmp.eq.s32.totalorder %s38, 1
      %p82 = por %p80, %p81
      %p83 = scmp.ne.s32.totalorder %s72, %s73
      %p84 = scmp.eq.s32.totalorder %s38, 0
      %p85 = por %p83, %p84
      %p86 = scmp.ne.s32.totalorder %s72, %s73
      %p87 = scmp.eq.s32.totalorder %s39, 1
      %p88 = por %p86, %p87
      %p90 = scmp.ne.s32.totalorder %s73, %s89
      %p91 = scmp.eq.s32.totalorder %s39, 0
      %p92 = por %p90, %p91
      %s94 = sadd.s32 %s93, 1
      %p97 = scmp.eq.s32.totalorder %s33, 1
      %p98 = scmp.ne.s32.totalorder %s93, %s95
      %p99 = scmp.eq.s32.totalorder %s33, 0
      %p100 = por %p98, %p99
      %p101 = scmp.ne.s32.totalorder %s93, %s95
      %p102 = scmp.eq.s32.totalorder %s38, 1
      %p103 = por %p101, %p102
      %p104 = scmp.ne.s32.totalorder %s95, %s96
      %p105 = scmp.eq.s32.totalorder %s38, 0
      %p106 = por %p104, %p105
      %p107 = scmp.ne.s32.totalorder %s95, %s96
      %p108 = scmp.eq.s32.totalorder %s39, 1
      %p109 = por %p107, %p108
      %p111 = scmp.ne.s32.totalorder %s96, %s110
      %p112 = scmp.eq.s32.totalorder %s39, 0
      %p113 = por %p111, %p112
      %s115 = sadd.s32 %s114, 1
      %p118 = scmp.eq.s32.totalorder %s33, 1
      %p119 = scmp.ne.s32.totalorder %s114, %s116
      %p120 = scmp.eq.s32.totalorder %s33, 0
      %p121 = por %p119, %p120
      %p122 = scmp.ne.s32.totalorder %s114, %s116
      %p123 = scmp.eq.s32.totalorder %s38, 1
      %p124 = por %p122, %p123
      %p125 = scmp.ne.s32.totalorder %s116, %s117
      %p126 = scmp.eq.s32.totalorder %s38, 0
      %p127 = por %p125, %p126
      %p128 = scmp.ne.s32.totalorder %s116, %s117
      %p129 = scmp.eq.s32.totalorder %s39, 1
      %p130 = por %p128, %p129
      %p132 = scmp.ne.s32.totalorder %s117, %s131
      %p133 = scmp.eq.s32.totalorder %s39, 0
      %p134 = por %p132, %p133
      %s136 = sadd.s32 %s135, 1
      %p139 = scmp.eq.s32.totalorder %s33, 1
      %p140 = scmp.ne.s32.totalorder %s135, %s137
      %p141 = scmp.eq.s32.totalorder %s33, 0
      %p142 = por %p140, %p141
      %p143 = scmp.ne.s32.totalorder %s135, %s137
      %p144 = scmp.eq.s32.totalorder %s38, 1
      %p145 = por %p143, %p144
      %p146 = scmp.ne.s32.totalorder %s137, %s138
      %p147 = scmp.eq.s32.totalorder %s38, 0
      %p148 = por %p146, %p147
      %p149 = scmp.ne.s32.totalorder %s137, %s138
      %p150 = scmp.eq.s32.totalorder %s39, 1
      %p151 = por %p149, %p150
      %p153 = scmp.ne.s32.totalorder %s138, %s152
      %p154 = scmp.eq.s32.totalorder %s39, 0
      %p155 = por %p153, %p154
      %s157 = sadd.s32 %s156, 1
      %p160 = scmp.eq.s32.totalorder %s33, 1
      %p161 = scmp.ne.s32.totalorder %s156, %s158
      %p162 = scmp.eq.s32.totalorder %s33, 0
      %p163 = por %p161, %p162
      %p164 = scmp.ne.s32.totalorder %s156, %s158
      %p165 = scmp.eq.s32.totalorder %s38, 1
      %p166 = por %p164, %p165
      %p167 = scmp.ne.s32.totalorder %s158, %s159
      %p168 = scmp.eq.s32.totalorder %s38, 0
      %p169 = por %p167, %p168
      %p170 = scmp.ne.s32.totalorder %s158, %s159
      %p171 = scmp.eq.s32.totalorder %s39, 1
      %p172 = por %p170, %p171
      %p174 = scmp.ne.s32.totalorder %s159, %s173
      %p175 = scmp.eq.s32.totalorder %s39, 0
      %p176 = por %p174, %p175
      %s178 = sadd.s32 %s177, 1
      %p181 = scmp.eq.s32.totalorder %s33, 1
      %p182 = scmp.ne.s32.totalorder %s177, %s179
      %p183 = scmp.eq.s32.totalorder %s33, 0
      %p184 = por %p182, %p183
      %p185 = scmp.ne.s32.totalorder %s177, %s179
      %p186 = scmp.eq.s32.totalorder %s38, 1
      %p187 = por %p185, %p186
      %p188 = scmp.ne.s32.totalorder %s179, %s180
      %p189 = scmp.eq.s32.totalorder %s38, 0
      %p190 = por %p188, %p189
      %p191 = scmp.ne.s32.totalorder %s179, %s180
      %p192 = scmp.eq.s32.totalorder %s39, 1
      %p193 = por %p191, %p192
      %p195 = scmp.ne.s32.totalorder %s180, %s194
      %p196 = scmp.eq.s32.totalorder %s39, 0
      %p197 = por %p195, %p196
      %s199 = sadd.s32 %s198, 1
      %p202 = scmp.eq.s32.totalorder %s33, 1
      %p203 = scmp.ne.s32.totalorder %s198, %s200
      %p204 = scmp.eq.s32.totalorder %s33, 0
      %p205 = por %p203, %p204
      %p206 = scmp.ne.s32.totalorder %s198, %s200
      %p207 = scmp.eq.s32.totalorder %s38, 1
      %p208 = por %p206, %p207
      %p209 = scmp.ne.s32.totalorder %s200, %s201
      %p210 = scmp.eq.s32.totalorder %s38, 0
      %p211 = por %p209, %p210
      %p212 = scmp.ne.s32.totalorder %s200, %s201
      %p213 = scmp.eq.s32.totalorder %s39, 1
      %p214 = por %p212, %p213
      %p216 = scmp.ne.s32.totalorder %s201, %s215
      %p217 = scmp.eq.s32.totalorder %s39, 0
      %p218 = por %p216, %p217
      %s220 = sadd.s32 %s219, 1
      %p223 = scmp.eq.s32.totalorder %s33, 1
      %p224 = scmp.ne.s32.totalorder %s219, %s221
      %p225 = scmp.eq.s32.totalorder %s33, 0
      %p226 = por %p224, %p225
      %p227 = scmp.ne.s32.totalorder %s219, %s221
      %p228 = scmp.eq.s32.totalorder %s38, 1
      %p229 = por %p227, %p228
      %p230 = scmp.ne.s32.totalorder %s221, %s222
      %p231 = scmp.eq.s32.totalorder %s38, 0
      %p232 = por %p230, %p231
      %p233 = scmp.ne.s32.totalorder %s221, %s222
      %p234 = scmp.eq.s32.totalorder %s39, 1
      %p235 = por %p233, %p234
      %p237 = scmp.ne.s32.totalorder %s222, %s236
      %p238 = scmp.eq.s32.totalorder %s39, 0
      %p239 = por %p237, %p238
      %s241 = sadd.s32 %s240, 1
      %p244 = scmp.eq.s32.totalorder %s33, 1
      %p245 = scmp.ne.s32.totalorder %s240, %s242
      %p246 = scmp.eq.s32.totalorder %s33, 0
      %p247 = por %p245, %p246
      %p248 = scmp.ne.s32.totalorder %s240, %s242
      %p249 = scmp.eq.s32.totalorder %s38, 1
      %p250 = por %p248, %p249
      %p251 = scmp.ne.s32.totalorder %s242, %s243
      %p252 = scmp.eq.s32.totalorder %s38, 0
      %p253 = por %p251, %p252
      %p254 = scmp.ne.s32.totalorder %s242, %s243
      %p255 = scmp.eq.s32.totalorder %s39, 1
      %p256 = por %p254, %p255
      %p258 = scmp.ne.s32.totalorder %s243, %s257
      %p259 = scmp.eq.s32.totalorder %s39, 0
      %p260 = por %p258, %p259
      %s262 = sadd.s32 %s261, 1
      %p265 = scmp.eq.s32.totalorder %s33, 1
      %p266 = scmp.ne.s32.totalorder %s261, %s263
      %p267 = scmp.eq.s32.totalorder %s33, 0
      %p268 = por %p266, %p267
      %p269 = scmp.ne.s32.totalorder %s261, %s263
      %p270 = scmp.eq.s32.totalorder %s38, 1
      %p271 = por %p269, %p270
      %p272 = scmp.ne.s32.totalorder %s263, %s264
      %p273 = scmp.eq.s32.totalorder %s38, 0
      %p274 = por %p272, %p273
      %p275 = scmp.ne.s32.totalorder %s263, %s264
      %p276 = scmp.eq.s32.totalorder %s39, 1
      %p277 = por %p275, %p276
      %p279 = scmp.ne.s32.totalorder %s264, %s278
      %p280 = scmp.eq.s32.totalorder %s39, 0
      %p281 = por %p279, %p280
      %s283 = sadd.s32 %s282, 1
      %p286 = scmp.eq.s32.totalorder %s33, 1
      %p287 = scmp.ne.s32.totalorder %s282, %s284
      %p288 = scmp.eq.s32.totalorder %s33, 0
      %p289 = por %p287, %p288
      %p290 = scmp.ne.s32.totalorder %s282, %s284
      %p291 = scmp.eq.s32.totalorder %s38, 1
      %p292 = por %p290, %p291
      %p293 = scmp.ne.s32.totalorder %s284, %s285
      %p294 = scmp.eq.s32.totalorder %s38, 0
      %p295 = por %p293, %p294
      %p296 = scmp.ne.s32.totalorder %s284, %s285
      %p297 = scmp.eq.s32.totalorder %s39, 1
      %p298 = por %p296, %p297
      %p300 = scmp.ne.s32.totalorder %s285, %s299
      %p301 = scmp.eq.s32.totalorder %s39, 0
      %p302 = por %p300, %p301
      %s304 = sadd.s32 %s303, 1
      %p307 = scmp.eq.s32.totalorder %s33, 1
      %p308 = scmp.ne.s32.totalorder %s303, %s305
      %p309 = scmp.eq.s32.totalorder %s33, 0
      %p310 = por %p308, %p309
      %p311 = scmp.ne.s32.totalorder %s303, %s305
      %p312 = scmp.eq.s32.totalorder %s38, 1
      %p313 = por %p311, %p312
      %p314 = scmp.ne.s32.totalorder %s305, %s306
      %p315 = scmp.eq.s32.totalorder %s38, 0
      %p316 = por %p314, %p315
      %p317 = scmp.ne.s32.totalorder %s305, %s306
      %p318 = scmp.eq.s32.totalorder %s39, 1
      %p319 = por %p317, %p318
      %p321 = scmp.ne.s32.totalorder %s306, %s320
      %p322 = scmp.eq.s32.totalorder %s39, 0
      %p323 = por %p321, %p322
      %s325 = sadd.s32 %s324, 1
      %p328 = scmp.eq.s32.totalorder %s33, 1
      %p329 = scmp.ne.s32.totalorder %s324, %s326
      %p330 = scmp.eq.s32.totalorder %s33, 0
      %p331 = por %p329, %p330
      %p332 = scmp.ne.s32.totalorder %s324, %s326
      %p333 = scmp.eq.s32.totalorder %s38, 1
      %p334 = por %p332, %p333
      %p335 = scmp.ne.s32.totalorder %s326, %s327
      %p336 = scmp.eq.s32.totalorder %s38, 0
      %p337 = por %p335, %p336
      %p338 = scmp.ne.s32.totalorder %s326, %s327
      %p339 = scmp.eq.s32.totalorder %s39, 1
      %p340 = por %p338, %p339
      %p342 = scmp.ne.s32.totalorder %s327, %s341
      %p343 = scmp.eq.s32.totalorder %s39, 0
      %p344 = por %p342, %p343
      %s346 = sadd.s32 %s345, 1
      %p349 = scmp.eq.s32.totalorder %s33, 1
      %p350 = scmp.ne.s32.totalorder %s345, %s347
      %p351 = scmp.eq.s32.totalorder %s33, 0
      %p352 = por %p350, %p351
      %p353 = scmp.ne.s32.totalorder %s345, %s347
      %p354 = scmp.eq.s32.totalorder %s38, 1
      %p355 = por %p353, %p354
      %p356 = scmp.ne.s32.totalorder %s347, %s348
      %p357 = scmp.eq.s32.totalorder %s38, 0
      %p358 = por %p356, %p357
      %p359 = scmp.ne.s32.totalorder %s347, %s348
      %p360 = scmp.eq.s32.totalorder %s39, 1
      %p361 = por %p359, %p360
      %p363 = scmp.ne.s32.totalorder %s348, %s362
      %p364 = scmp.eq.s32.totalorder %s39, 0
      %p365 = por %p363, %p364
      %s367 = sadd.s32 %s366, 1
      %p370 = scmp.eq.s32.totalorder %s33, 1
      %p371 = scmp.ne.s32.totalorder %s366, %s368
      %p372 = scmp.eq.s32.totalorder %s33, 0
      %p373 = por %p371, %p372
      %p374 = scmp.ne.s32.totalorder %s366, %s368
      %p375 = scmp.eq.s32.totalorder %s38, 1
      %p376 = por %p374, %p375
      %p377 = scmp.ne.s32.totalorder %s368, %s369
      %p378 = scmp.eq.s32.totalorder %s38, 0
      %p379 = por %p377, %p378
      %p380 = scmp.ne.s32.totalorder %s368, %s369
      %p381 = scmp.eq.s32.totalorder %s39, 1
      %p382 = por %p380, %p381
      %p384 = scmp.ne.s32.totalorder %s369, %s383
      %p385 = scmp.eq.s32.totalorder %s39, 0
      %p386 = por %p384, %p385
      %s388 = sadd.s32 %s387, 1
      %p391 = scmp.eq.s32.totalorder %s33, 1
      %p392 = scmp.ne.s32.totalorder %s387, %s389
      %p393 = scmp.eq.s32.totalorder %s33, 0
      %p394 = por %p392, %p393
      %p395 = scmp.ne.s32.totalorder %s387, %s389
      %p396 = scmp.eq.s32.totalorder %s38, 1
      %p397 = por %p395, %p396
      %p398 = scmp.ne.s32.totalorder %s389, %s390
      %p399 = scmp.eq.s32.totalorder %s38, 0
      %p400 = por %p398, %p399
      %p401 = scmp.ne.s32.totalorder %s389, %s390
      %p402 = scmp.eq.s32.totalorder %s39, 1
      %p403 = por %p401, %p402
      %p405 = scmp.ne.s32.totalorder %s390, %s404
      %p406 = scmp.eq.s32.totalorder %s39, 0
      %p407 = por %p405, %p406
      %s409 = sadd.s32 %s408, 1
      %p412 = scmp.eq.s32.totalorder %s33, 1
      %p413 = scmp.ne.s32.totalorder %s408, %s410
      %p414 = scmp.eq.s32.totalorder %s33, 0
      %p415 = por %p413, %p414
      %p416 = scmp.ne.s32.totalorder %s408, %s410
      %p417 = scmp.eq.s32.totalorder %s38, 1
      %p418 = por %p416, %p417
      %p419 = scmp.ne.s32.totalorder %s410, %s411
      %p420 = scmp.eq.s32.totalorder %s38, 0
      %p421 = por %p419, %p420
      %p422 = scmp.ne.s32.totalorder %s410, %s411
      %p423 = scmp.eq.s32.totalorder %s39, 1
      %p424 = por %p422, %p423
      %p426 = scmp.ne.s32.totalorder %s411, %s425
      %p427 = scmp.eq.s32.totalorder %s39, 0
      %p428 = por %p426, %p427
      %s429 = ssub.s32 %s33, %s40
      %p430 = scmp.eq.s32.totalorder %s429, 0
      %s432 = sadd.s32 %s431, 1
      %s433 = scalar_select %p430, %s431, %s432
      %p436 = pneg %p430
      %p437 = scmp.eq.s32.totalorder %s33, 1
      %p438 = por %p436, %p437
      %p439 = scmp.ne.s32.totalorder %s431, %s434
      %p440 = scmp.eq.s32.totalorder %s33, 0
      %p441 = por %p439, %p440
      %p442 = scmp.ne.s32.totalorder %s431, %s434
      %p443 = scmp.eq.s32.totalorder %s38, 1
      %p444 = por %p442, %p443
      %p445 = scmp.ne.s32.totalorder %s434, %s435
      %p446 = scmp.eq.s32.totalorder %s38, 0
      %p447 = por %p445, %p446
      %p448 = scmp.ne.s32.totalorder %s434, %s435
      %p449 = scmp.eq.s32.totalorder %s39, 1
      %p450 = por %p448, %p449
      %p452 = scmp.ne.s32.totalorder %s435, %s451
      %p453 = scmp.eq.s32.totalorder %s39, 0
      %p454 = por %p452, %p453
      %p455 = scmp.le.s32.totalorder 1, %s33
      %p456 = scmp.lt.s32.totalorder %s33, 3
      %p457 = pnand %p455, %p456
      %p458 = pneg %p457
      // Predicated region
      $region9: #{tpu_custom_call.1} parent=5 // pred_check
        _
      $region10: #{tpu_custom_call.1} parent=5 // pred_check_branch
        %460 = sbr.rel (%p457) target = $region12
      $region11: #{tpu_custom_call.1} parent=5 // pred_region
        %s461 = ssub.s32 %s33, 1
        // Predicated region
        $region13: #{tpu_custom_call.1} parent=11 // pred_check
          %p462 = pneg %p106
        $region14: #{tpu_custom_call.1} parent=11 // pred_check_branch
          %464 = sbr.rel (%p462) target = $region16
        $region15: #{tpu_custom_call.1} parent=11 // pred_region
          %s466 = ssub.s32 16, 16
          %467 = vsyncadd [#allocation6], %s466
          %s469 = sshll.u32 [#allocation5], 4
          %s470 = int_to_ptr.vmem [resolvable:$true] %s469
          %472 = dma.hbm_to_vmem [thread:$0]  %s2, 16, %s470, [#allocation6]
        $region16: #{tpu_custom_call.1} parent=11 // pred_fallthru
          _
        // Predicated region
        $region17: #{tpu_custom_call.1} parent=11 // pred_check
          %p473 = pneg %p127
        $region18: #{tpu_custom_call.1} parent=11 // pred_check_branch
          %475 = sbr.rel (%p473) target = $region20
        $region19: #{tpu_custom_call.1} parent=11 // pred_region
          %s477 = ssub.s32 16, 16
          %478 = vsyncadd [#allocation6], %s477
          %s480 = sshll.u32 [#allocation7], 4
          %s481 = int_to_ptr.vmem [resolvable:$true] %s480
          %483 = dma.hbm_to_vmem [thread:$0]  %s3, 16, %s481, [#allocation6]
        $region20: #{tpu_custom_call.1} parent=11 // pred_fallthru
          _
        // Predicated region
        $region21: #{tpu_custom_call.1} parent=11 // pred_check
          %p484 = pneg %p148
        $region22: #{tpu_custom_call.1} parent=11 // pred_check_branch
          %486 = sbr.rel (%p484) target = $region24
        $region23: #{tpu_custom_call.1} parent=11 // pred_region
          _
        $region24: #{tpu_custom_call.1} parent=11 // pred_fallthru
          _
        // Predicated region
        $region25: #{tpu_custom_call.1} parent=11 // pred_check
          %p487 = pneg %p169
        $region26: #{tpu_custom_call.1} parent=11 // pred_check_branch
          %489 = sbr.rel (%p487) target = $region28
        $region27: #{tpu_custom_call.1} parent=11 // pred_region
          %s491 = ssub.s32 32, 32
          %492 = vsyncadd [#allocation9], %s491
          %s493 = sshll.u32 [#allocation8], 4
          %s494 = int_to_ptr.vmem [resolvable:$true] %s493
          %499 = dma.hbm_to_vmem [thread:$0]  %s5, 32, %s494, [#allocation9], 16, 16, 1
        $region28: #{tpu_custom_call.1} parent=11 // pred_fallthru
          _
        // Predicated region
        $region29: #{tpu_custom_call.1} parent=11 // pred_check
          %p500 = pneg %p190
        $region30: #{tpu_custom_call.1} parent=11 // pred_check_branch
          %502 = sbr.rel (%p500) target = $region32
        $region31: #{tpu_custom_call.1} parent=11 // pred_region
          _
        $region32: #{tpu_custom_call.1} parent=11 // pred_fallthru
          _
        // Predicated region
        $region33: #{tpu_custom_call.1} parent=11 // pred_check
          %p503 = pneg %p211
        $region34: #{tpu_custom_call.1} parent=11 // pred_check_branch
          %505 = sbr.rel (%p503) target = $region36
        $region35: #{tpu_custom_call.1} parent=11 // pred_region
          %s507 = ssub.s32 32, 32
          %508 = vsyncadd [#allocation9], %s507
          %s509 = sshll.u32 [#allocation10], 4
          %s510 = int_to_ptr.vmem [resolvable:$true] %s509
          %515 = dma.hbm_to_vmem [thread:$0]  %s7, 32, %s510, [#allocation9], 16, 16, 1
        $region36: #{tpu_custom_call.1} parent=11 // pred_fallthru
          _
        // Predicated region
        $region37: #{tpu_custom_call.1} parent=11 // pred_check
          %p516 = pneg %p232
        $region38: #{tpu_custom_call.1} parent=11 // pred_check_branch
          %518 = sbr.rel (%p516) target = $region40
        $region39: #{tpu_custom_call.1} parent=11 // pred_region
          %s520 = ssub.s32 32, 32
          %521 = vsyncadd [#allocation12], %s520
          %s522 = sshll.u32 [#allocation11], 4
          %s523 = int_to_ptr.vmem [resolvable:$true] %s522
          %528 = dma.hbm_to_vmem [thread:$0]  %s8, 32, %s523, [#allocation12], 16, 16, 1
        $region40: #{tpu_custom_call.1} parent=11 // pred_fallthru
          _
        // Predicated region
        $region41: #{tpu_custom_call.1} parent=11 // pred_check
          %p529 = pneg %p253
        $region42: #{tpu_custom_call.1} parent=11 // pred_check_branch
          %531 = sbr.rel (%p529) target = $region44
        $region43: #{tpu_custom_call.1} parent=11 // pred_region
          %s533 = ssub.s32 32, 32
          %534 = vsyncadd [#allocation12], %s533
          %s535 = sshll.u32 [#allocation13], 4
          %s536 = int_to_ptr.vmem [resolvable:$true] %s535
          %541 = dma.hbm_to_vmem [thread:$0]  %s9, 32, %s536, [#allocation12], 16, 16, 1
        $region44: #{tpu_custom_call.1} parent=11 // pred_fallthru
          _
        // Predicated region
        $region45: #{tpu_custom_call.1} parent=11 // pred_check
          %p542 = pneg %p274
        $region46: #{tpu_custom_call.1} parent=11 // pred_check_branch
          %544 = sbr.rel (%p542) target = $region48
        $region47: #{tpu_custom_call.1} parent=11 // pred_region
          _
        $region48: #{tpu_custom_call.1} parent=11 // pred_fallthru
          _
        // Predicated region
        $region49: #{tpu_custom_call.1} parent=11 // pred_check
          %p545 = pneg %p295
        $region50: #{tpu_custom_call.1} parent=11 // pred_check_branch
          %547 = sbr.rel (%p545) target = $region52
        $region51: #{tpu_custom_call.1} parent=11 // pred_region
          _
        $region52: #{tpu_custom_call.1} parent=11 // pred_fallthru
          _
        // Predicated region
        $region53: #{tpu_custom_call.1} parent=11 // pred_check
          %p548 = pneg %p316
        $region54: #{tpu_custom_call.1} parent=11 // pred_check_branch
          %550 = sbr.rel (%p548) target = $region56
        $region55: #{tpu_custom_call.1} parent=11 // pred_region
          _
        $region56: #{tpu_custom_call.1} parent=11 // pred_fallthru
          _
        // Predicated region
        $region57: #{tpu_custom_call.1} parent=11 // pred_check
          %p551 = pneg %p337
        $region58: #{tpu_custom_call.1} parent=11 // pred_check_branch
          %553 = sbr.rel (%p551) target = $region60
        $region59: #{tpu_custom_call.1} parent=11 // pred_region
          _
        $region60: #{tpu_custom_call.1} parent=11 // pred_fallthru
          _
        // Predicated region
        $region61: #{tpu_custom_call.1} parent=11 // pred_check
          %p554 = pneg %p358
        $region62: #{tpu_custom_call.1} parent=11 // pred_check_branch
          %556 = sbr.rel (%p554) target = $region64
        $region63: #{tpu_custom_call.1} parent=11 // pred_region
          _
        $region64: #{tpu_custom_call.1} parent=11 // pred_fallthru
          _
        // Predicated region
        $region65: #{tpu_custom_call.1} parent=11 // pred_check
          %p557 = pneg %p379
        $region66: #{tpu_custom_call.1} parent=11 // pred_check_branch
          %559 = sbr.rel (%p557) target = $region68
        $region67: #{tpu_custom_call.1} parent=11 // pred_region
          _
        $region68: #{tpu_custom_call.1} parent=11 // pred_fallthru
          _
        // Predicated region
        $region69: #{tpu_custom_call.1} parent=11 // pred_check
          %p560 = pneg %p400
        $region70: #{tpu_custom_call.1} parent=11 // pred_check_branch
          %562 = sbr.rel (%p560) target = $region72
        $region71: #{tpu_custom_call.1} parent=11 // pred_region
          _
        $region72: #{tpu_custom_call.1} parent=11 // pred_fallthru
          _
        // Predicated region
        $region73: #{tpu_custom_call.1} parent=11 // pred_check
          %p563 = pneg %p421
        $region74: #{tpu_custom_call.1} parent=11 // pred_check_branch
          %565 = sbr.rel (%p563) target = $region76
        $region75: #{tpu_custom_call.1} parent=11 // pred_region
          _
        $region76: #{tpu_custom_call.1} parent=11 // pred_fallthru
          _
      $region12: #{tpu_custom_call.1} parent=5 // pred_fallthru
        _
      %p566 = scmp.lt.s32.totalorder %s33, 2
      // Predicated region
      $region77: #{tpu_custom_call.1} parent=5 // pred_check
        %p567 = pneg %p566
      $region78: #{tpu_custom_call.1} parent=5 // pred_check_branch
        %569 = sbr.rel (%p567) target = $region80
      $region79: #{tpu_custom_call.1} parent=5 // pred_region
        // Predicated region
        $region81: #{tpu_custom_call.1} parent=79 // pred_check
          %p570 = pneg %p53
        $region82: #{tpu_custom_call.1} parent=79 // pred_check_branch
          %572 = sbr.rel (%p570) target = $region84
        $region83: #{tpu_custom_call.1} parent=79 // pred_region
          %s573 = sand.u32 %s43, 1
          %s574 = scalar_lea.sflag [#allocation3], %s573
          %s575 = sand.u32 %s43, 1
          %s576 = smul.addr %s575, 8
          %s577 = scalar_lea.vmem [#allocation2], %s576
          %s579 = ssub.s32 128, 128
          %580 = vsyncadd %s574, %s579
          %s581 = smul.addr %s33, 128
          %s582 = scalar_lea.hbm %s0, %s581
          %s584 = sshll.u32 %s577, 4
          %s585 = int_to_ptr.vmem [resolvable:$true] %s584
          %587 = dma.hbm_to_vmem [thread:$0]  %s582, 128, %s585, %s574
        $region84: #{tpu_custom_call.1} parent=79 // pred_fallthru
          _
        // Predicated region
        $region85: #{tpu_custom_call.1} parent=79 // pred_check
          %p588 = pneg %p79
        $region86: #{tpu_custom_call.1} parent=79 // pred_check_branch
          %590 = sbr.rel (%p588) target = $region88
        $region87: #{tpu_custom_call.1} parent=79 // pred_region
          %p591 = scmp.lt.s32.totalorder %s33, 1
          %s592 = scalar_select %p591, %s33, 1
          %s593 = scalar_lea.vmem %s1, %s592
        $region88: #{tpu_custom_call.1} parent=79 // pred_fallthru
          _
      $region80: #{tpu_custom_call.1} parent=5 // pred_fallthru
        _
      %p594 = scmp.le.s32.totalorder 1, %s33
      %p595 = scmp.lt.s32.totalorder %s33, 3
      %p596 = pnand %p594, %p595
      %p597 = pneg %p596
      // Predicated region
      $region89: #{tpu_custom_call.1} parent=5 // pred_check
        _
      $region90: #{tpu_custom_call.1} parent=5 // pred_check_branch
        %599 = sbr.rel (%p596) target = $region92
      $region91: #{tpu_custom_call.1} parent=5 // pred_region
        %s600 = ssub.s32 %s33, 1
        %s601 = sand.u32 %s46, 1
        %s602 = scalar_lea.sflag [#allocation3], %s601
        %s603 = sand.u32 %s46, 1
        %s604 = smul.addr %s603, 8
        %s605 = scalar_lea.vmem [#allocation2], %s604
        // Predicated region
        $region93: #{tpu_custom_call.1} parent=91 // pred_check
          %p606 = pneg %p59
        $region94: #{tpu_custom_call.1} parent=91 // pred_check_branch
          %608 = sbr.rel (%p606) target = $region96
        $region95: #{tpu_custom_call.1} parent=91 // pred_region
          %609 = dma.done %s602, 128
        $region96: #{tpu_custom_call.1} parent=91 // pred_fallthru
          _
        // Predicated region
        $region97: #{tpu_custom_call.1} parent=91 // pred_check
          %p610 = pneg %p106
        $region98: #{tpu_custom_call.1} parent=91 // pred_check_branch
          %612 = sbr.rel (%p610) target = $region100
        $region99: #{tpu_custom_call.1} parent=91 // pred_region
          %613 = dma.done [#allocation6], 16
        $region100: #{tpu_custom_call.1} parent=91 // pred_fallthru
          _
        // Predicated region
        $region101: #{tpu_custom_call.1} parent=91 // pred_check
          %p614 = pneg %p127
        $region102: #{tpu_custom_call.1} parent=91 // pred_check_branch
          %616 = sbr.rel (%p614) target = $region104
        $region103: #{tpu_custom_call.1} parent=91 // pred_region
          %617 = dma.done [#allocation6], 16
        $region104: #{tpu_custom_call.1} parent=91 // pred_fallthru
          _
        // Predicated region
        $region105: #{tpu_custom_call.1} parent=91 // pred_check
          %p618 = pneg %p169
        $region106: #{tpu_custom_call.1} parent=91 // pred_check_branch
          %620 = sbr.rel (%p618) target = $region108
        $region107: #{tpu_custom_call.1} parent=91 // pred_region
          %621 = dma.done [#allocation9], 32
        $region108: #{tpu_custom_call.1} parent=91 // pred_fallthru
          _
        // Predicated region
        $region109: #{tpu_custom_call.1} parent=91 // pred_check
          %p622 = pneg %p211
        $region110: #{tpu_custom_call.1} parent=91 // pred_check_branch
          %624 = sbr.rel (%p622) target = $region112
        $region111: #{tpu_custom_call.1} parent=91 // pred_region
          %625 = dma.done [#allocation9], 32
        $region112: #{tpu_custom_call.1} parent=91 // pred_fallthru
          _
        // Predicated region
        $region113: #{tpu_custom_call.1} parent=91 // pred_check
          %p626 = pneg %p232
        $region114: #{tpu_custom_call.1} parent=91 // pred_check_branch
          %628 = sbr.rel (%p626) target = $region116
        $region115: #{tpu_custom_call.1} parent=91 // pred_region
          %629 = dma.done [#allocation12], 32
        $region116: #{tpu_custom_call.1} parent=91 // pred_fallthru
          _
        // Predicated region
        $region117: #{tpu_custom_call.1} parent=91 // pred_check
          %p630 = pneg %p253
        $region118: #{tpu_custom_call.1} parent=91 // pred_check_branch
          %632 = sbr.rel (%p630) target = $region120
        $region119: #{tpu_custom_call.1} parent=91 // pred_region
          %633 = dma.done [#allocation12], 32
        $region120: #{tpu_custom_call.1} parent=91 // pred_fallthru
          _
        %s634 = sand.u32 %s46, 1
        %s635 = scalar_lea.sflag [#allocation3], %s634
        %s636 = sand.u32 %s46, 1
        %s637 = smul.addr %s636, 8
        %s638 = scalar_lea.vmem [#allocation2], %s637
        %p639 = pneg %p59
        %p640 = pneg %p56
        %p641 = scmp.lt.s32.totalorder %s38, 1
        %s642 = scalar_select %p641, %s38, 1
        %s643 = scalar_lea.vmem %s1, %s642
        %p644 = pneg %p85
        %p645 = pneg %p82
        %p646 = pneg %p106
        %p647 = pneg %p103
        %p648 = pneg %p127
        %p649 = pneg %p124
        %p650 = pneg %p148
        %p651 = pneg %p145
        %p652 = pneg %p169
        %p653 = pneg %p166
        %p654 = pneg %p190
        %p655 = pneg %p187
        %p656 = pneg %p211
        %p657 = pneg %p208
        %p658 = pneg %p232
        %p659 = pneg %p229
        %p660 = pneg %p253
        %p661 = pneg %p250
        %p662 = pneg %p274
        %p663 = pneg %p271
        %p664 = pneg %p295
        %p665 = pneg %p292
        %p666 = pneg %p316
        %p667 = pneg %p313
        %p668 = pneg %p337
        %p669 = pneg %p334
        %p670 = pneg %p358
        %p671 = pneg %p355
        %p672 = pneg %p379
        %p673 = pneg %p376
        %p674 = pneg %p400
        %p675 = pneg %p397
        %p676 = pneg %p421
        %p677 = pneg %p418
        %p678 = pneg %p447
        %p679 = pneg %p444
        %s680 = sand.u32 %s434, 1
        %s681 = scalar_lea.sflag [#allocation4], %s680
        %s682 = sand.u32 %s434, 1
        %s683 = smul.addr %s682, 8
        %s684 = scalar_lea.vmem [#allocation14], %s683
        %p685 = scmp.lt.s32.totalorder %s38, 1
        %s686 = scalar_select %p685, %s38, 1
        %s687 = scalar_lea.vmem %s1, %s686
        %v688 = vld [vmem:[%s605] sm:$0xff]
        %v689 = vld [vmem:[#allocation5] sm:$0x1]
        %v690 = vld [vmem:[#allocation7] sm:$0x1]
        %vm691 = vcmask 261120
        %v692 = vsel %vm691, %v688, 0.0
        %693 = vadd.xlane.f32.xlu0 %v692
        %v694 = vpop.xlane.xlu0 %693
        %v695 = vrcp.pop 32.0
        %v696 = vmul.f32 %v694, %v695
        %v697 = vsub.f32 %v688, %v696
        %v698 = vmul.f32 %v697, %v697
        %v699 = vsel %vm691, %v698, 0.0
        %700 = vadd.xlane.f32.xlu0 %v699
        %v701 = vpop.xlane.xlu0 %700
        %v702 = vmul.f32 %v701, %v695
        %v703 = vadd.f32 %v702, 1e-12
        %v704 = vrsqrt.pop %v703
        %v705 = vmul.f32 %v697, %v704
        %v707 = vlaneseq
        %v708 = vshrl.u32 %v707, 7
        %v709 = vsub.s32 0, %v708
        %v710 = vrot.slane %v689, %v709
        %v712 = vmul.f32 %v705, %v710
        %v714 = vlaneseq
        %v715 = vshrl.u32 %v714, 7
        %v716 = vsub.s32 0, %v715
        %v717 = vrot.slane %v690, %v716
        %v719 = vadd.f32 %v712, %v717
        %v720 = vld [vmem:[%s687] sm:$0x1]
        %v721 = vld [vmem:[%s4] sm:$0xff]
        %v722 = vld [vmem:[%s4 + $0x8] sm:$0xff]
        %v723 = vld [vmem:[%s4 + $0x10] sm:$0xff]
        %v724 = vld [vmem:[%s4 + $0x18] sm:$0xff]
        %v725 = vld [vmem:[#allocation8] sm:$0x1]
        %v727 = vlaneseq
        %v728 = vshrl.u32 %v727, 7
        %v729 = vsub.s32 0, %v728
        %v730 = vrot.slane %v725, %v729
        %v733 = vsel %vm691, %v719, 0
        %735 = vmatprep.subr.mxu0 0.0
        %736 = vmatpush1.msra.mxu0 %v721
        %737 = vmatprep.subr.mxu0 0.0
        %738 = vmatpush1.msra.mxu0 %v722
        %739 = vmatprep.subr.mxu0 0.0
        %740 = vmatpush1.msra.mxu0 %v723
        %741 = vmatprep.subr.mxu0 0.0
        %742 = vmatpush1.msra.mxu0 %v724
        %743 = vmatprep.subr.mxu0 0.0
        %744 = vmatpush1.msra.mxu0 0.0
        %745 = vmatprep.subr.mxu0 0.0
        %746 = vmatpush1.msra.mxu0 0.0
        %747 = vmatprep.subr.mxu0 0.0
        %748 = vmatpush1.msra.mxu0 0.0
        %749 = vmatprep.subr.mxu0 0.0
        %750 = vmatpush1.msra.mxu0 0.0
        %751 = vmatprep.subr.mxu0 0.0
        %752 = vmatpush1.msra.mxu0 0.0
        %753 = vmatprep.subr.mxu0 0.0
        %754 = vmatpush1.msra.mxu0 0.0
        %755 = vmatprep.subr.mxu0 0.0
        %756 = vmatpush1.msra.mxu0 0.0
        %757 = vmatprep.subr.mxu0 0.0
        %758 = vmatpush1.msra.mxu0 0.0
        %759 = vmatprep.subr.mxu0 0.0
        %760 = vmatpush1.msra.mxu0 0.0
        %761 = vmatprep.subr.mxu0 0.0
        %762 = vmatpush1.msra.mxu0 0.0
        %763 = vmatprep.subr.mxu0 0.0
        %764 = vmatpush1.msra.mxu0 0.0
        %765 = vmatprep.subr.mxu0 0.0
        %766 = vmatpush1.msra.mxu0 0.0
        %767 = vmatprep.subr.mxu0 0.0
        %768 = vmatpush1.msra.mxu0 0.0
        %769 = vmatprep.subr.mxu0 0.0
        %770 = vmatpush1.msra.mxu0 0.0
        %771 = vmatprep.subr.mxu0 0.0
        %772 = vmatpush1.msra.mxu0 0.0
        %773 = vmatprep.subr.mxu0 0.0
        %774 = vmatpush1.msra.mxu0 0.0
        %775 = vmatprep.subr.mxu0 0.0
        %776 = vmatpush1.msra.mxu0 0.0
        %777 = vmatprep.subr.mxu0 0.0
        %778 = vmatpush1.msra.mxu0 0.0
        %779 = vmatprep.subr.mxu0 0.0
        %780 = vmatpush1.msra.mxu0 0.0
        %781 = vmatprep.subr.mxu0 0.0
        %782 = vmatpush1.msra.mxu0 0.0
        %783 = vmatprep.subr.mxu0 0.0
        %784 = vmatpush1.msra.mxu0 0.0
        %785 = vmatprep.subr.mxu0 0.0
        %786 = vmatpush1.msra.mxu0 0.0
        %787 = vmatprep.subr.mxu0 0.0
        %788 = vmatpush1.msra.mxu0 0.0
        %789 = vmatprep.subr.mxu0 0.0
        %790 = vmatpush1.msra.mxu0 0.0
        %791 = vmatprep.subr.mxu0 0.0
        %792 = vmatpush1.msra.mxu0 0.0
        %793 = vmatprep.subr.mxu0 0.0
        %794 = vmatpush1.msra.mxu0 0.0
        %795 = vmatprep.subr.mxu0 0.0
        %796 = vmatpush1.msra.mxu0 0.0
        %797 = vmatprep.subr.mxu0 0.0
        %798 = vmatpush1.msra.mxu0 0.0
        %799 = vmatprep.mubr.f32.mxu0 0.0
        %800 = vmatmul.mubr.f32.gmra.mrb[0].mxu0 %v733
        %v801 = vpop.f32.mrb[0].mxu0
        %v802 = vadd.f32 %v730, %v801
        %v803 = vpop.f32.mrb[0].mxu0
        %804 = vdwg.mxu0
        %v805 = vld [vmem:[%s6] sm:$0xff]
        %v806 = vld [vmem:[%s6 + $0x8] sm:$0xff]
        %v807 = vld [vmem:[%s6 + $0x10] sm:$0xff]
        %v808 = vld [vmem:[%s6 + $0x18] sm:$0xff]
        %v809 = vld [vmem:[#allocation10] sm:$0x1]
        %811 = vrot.lane.b32.xlu0 %v802, 96
        %v812 = vpop.permute.xlu0 %811
        %vm813 = vcmask 130048
        %v814 = vsel %vm813, %v802, 0
        %v816 = vsel %vm813, %v812, 0
        %818 = vmatprep.subr.mxu0 0.0
        %819 = vmatpush1.xpose.msra.mxu0 %v816
        %820 = vmatprep.subr.mxu0 0.0
        %821 = vmatpush1.xpose.msra.mxu0 0.0
        %822 = vmatprep.subr.mxu0 0.0
        %823 = vmatpush1.xpose.msra.mxu0 0.0
        %824 = vmatprep.subr.mxu0 0.0
        %825 = vmatpush1.xpose.msra.mxu0 0.0
        %826 = vmatprep.subr.mxu0 0.0
        %827 = vmatpush1.xpose.msra.mxu0 0.0
        %828 = vmatprep.subr.mxu0 0.0
        %829 = vmatpush1.xpose.msra.mxu0 0.0
        %830 = vmatprep.subr.mxu0 0.0
        %831 = vmatpush1.xpose.msra.mxu0 0.0
        %832 = vmatprep.subr.mxu0 0.0
        %833 = vmatpush1.xpose.msra.mxu0 0.0
        %834 = vmatprep.subr.mxu0 0.0
        %835 = vmatpush1.xpose.msra.mxu0 0.0
        %836 = vmatprep.subr.mxu0 0.0
        %837 = vmatpush1.xpose.msra.mxu0 0.0
        %838 = vmatprep.subr.mxu0 0.0
        %839 = vmatpush1.xpose.msra.mxu0 0.0
        %840 = vmatprep.subr.mxu0 0.0
        %841 = vmatpush1.xpose.msra.mxu0 0.0
        %842 = vmatprep.subr.mxu0 0.0
        %843 = vmatpush1.xpose.msra.mxu0 0.0
        %844 = vmatprep.subr.mxu0 0.0
        %845 = vmatpush1.xpose.msra.mxu0 0.0
        %846 = vmatprep.subr.mxu0 0.0
        %847 = vmatpush1.xpose.msra.mxu0 0.0
        %848 = vmatprep.subr.mxu0 0.0
        %849 = vmatpush1.xpose.msra.mxu0 0.0
        %850 = vmatprep.subr.mxu0 0.0
        %851 = vmatpush1.xpose.msra.mxu0 0.0
        %852 = vmatprep.subr.mxu0 0.0
        %853 = vmatpush1.xpose.msra.mxu0 0.0
        %854 = vmatprep.subr.mxu0 0.0
        %855 = vmatpush1.xpose.msra.mxu0 0.0
        %856 = vmatprep.subr.mxu0 0.0
        %857 = vmatpush1.xpose.msra.mxu0 0.0
        %858 = vmatprep.subr.mxu0 0.0
        %859 = vmatpush1.xpose.msra.mxu0 0.0
        %860 = vmatprep.subr.mxu0 0.0
        %861 = vmatpush1.xpose.msra.mxu0 0.0
        %862 = vmatprep.subr.mxu0 0.0
        %863 = vmatpush1.xpose.msra.mxu0 0.0
        %864 = vmatprep.subr.mxu0 0.0
        %865 = vmatpush1.xpose.msra.mxu0 0.0
        %866 = vmatprep.subr.mxu0 0.0
        %867 = vmatpush1.xpose.msra.mxu0 0.0
        %868 = vmatprep.subr.mxu0 0.0
        %869 = vmatpush1.xpose.msra.mxu0 0.0
        %870 = vmatprep.subr.mxu0 0.0
        %871 = vmatpush1.xpose.msra.mxu0 0.0
        %872 = vmatprep.subr.mxu0 0.0
        %873 = vmatpush1.xpose.msra.mxu0 0.0
        %874 = vmatprep.subr.mxu0 0.0
        %875 = vmatpush1.xpose.msra.mxu0 0.0
        %876 = vmatprep.subr.mxu0 0.0
        %877 = vmatpush1.xpose.msra.mxu0 0.0
        %878 = vmatprep.subr.mxu0 0.0
        %879 = vmatpush1.xpose.msra.mxu0 0.0
        %880 = vmatprep.subr.mxu0 0.0
        %881 = vmatpush1.xpose.msra.mxu0 0.0
        %882 = vmatprep.mubr.f32.mxu0 0.0
        %883 = vmatmul.mubr.f32.gmra.mrb[0].mxu0 %v814
        %v884 = vpop.f32.mrb[0].mxu0
        %v885 = vadd.f32 0.0, %v884
        %v886 = vpop.f32.mrb[0].mxu0
        %887 = vdwg.mxu0
        %v888 = vmul.f32 %v885, 0.25
        %v890 = vlaneseq
        %v891 = vshrl.u32 %v890, 7
        %v892 = vsub.s32 0, %v891
        %v893 = vrot.slane %v720, %v892
        %v895 = vadd.f32 %v888, %v893
        %vm896 = vcmask 64512
        %v897 = vsel %vm896, %v895, -inf
        %898 = vmax.xlane.f32.xlu0 %v897
        %v899 = vpop.xlane.xlu0 %898
        %v900 = vsub.f32 %v895, %v899
        %v901 = vmul.f32 %v900, 1.442695
        %v902 = vpow.pop %v901
        %v903 = vsel %vm896, %v902, 0.0
        %904 = vadd.xlane.f32.xlu0 %v903
        %v905 = vpop.xlane.xlu0 %904
        %v906 = vrcp.pop %v905
        %v907 = vmul.f32 %v902, %v906
        %908 = vrot.lane.b32.xlu0 %v802, 64
        %v909 = vpop.permute.xlu0 %908
        %v912 = vsel %vm896, %v907, 0
        %914 = vmatprep.subr.mxu0 0.0
        %915 = vmatpush1.msra.mxu0 %v909
        %916 = vmatprep.subr.mxu0 0.0
        %917 = vmatpush1.msra.mxu0 0.0
        %918 = vmatprep.subr.mxu0 0.0
        %919 = vmatpush1.msra.mxu0 0.0
        %920 = vmatprep.subr.mxu0 0.0
        %921 = vmatpush1.msra.mxu0 0.0
        %922 = vmatprep.subr.mxu0 0.0
        %923 = vmatpush1.msra.mxu0 0.0
        %924 = vmatprep.subr.mxu0 0.0
        %925 = vmatpush1.msra.mxu0 0.0
        %926 = vmatprep.subr.mxu0 0.0
        %927 = vmatpush1.msra.mxu0 0.0
        %928 = vmatprep.subr.mxu0 0.0
        %929 = vmatpush1.msra.mxu0 0.0
        %930 = vmatprep.subr.mxu0 0.0
        %931 = vmatpush1.msra.mxu0 0.0
        %932 = vmatprep.subr.mxu0 0.0
        %933 = vmatpush1.msra.mxu0 0.0
        %934 = vmatprep.subr.mxu0 0.0
        %935 = vmatpush1.msra.mxu0 0.0
        %936 = vmatprep.subr.mxu0 0.0
        %937 = vmatpush1.msra.mxu0 0.0
        %938 = vmatprep.subr.mxu0 0.0
        %939 = vmatpush1.msra.mxu0 0.0
        %940 = vmatprep.subr.mxu0 0.0
        %941 = vmatpush1.msra.mxu0 0.0
        %942 = vmatprep.subr.mxu0 0.0
        %943 = vmatpush1.msra.mxu0 0.0
        %944 = vmatprep.subr.mxu0 0.0
        %945 = vmatpush1.msra.mxu0 0.0
        %946 = vmatprep.subr.mxu0 0.0
        %947 = vmatpush1.msra.mxu0 0.0
        %948 = vmatprep.subr.mxu0 0.0
        %949 = vmatpush1.msra.mxu0 0.0
        %950 = vmatprep.subr.mxu0 0.0
        %951 = vmatpush1.msra.mxu0 0.0
        %952 = vmatprep.subr.mxu0 0.0
        %953 = vmatpush1.msra.mxu0 0.0
        %954 = vmatprep.subr.mxu0 0.0
        %955 = vmatpush1.msra.mxu0 0.0
        %956 = vmatprep.subr.mxu0 0.0
        %957 = vmatpush1.msra.mxu0 0.0
        %958 = vmatprep.subr.mxu0 0.0
        %959 = vmatpush1.msra.mxu0 0.0
        %960 = vmatprep.subr.mxu0 0.0
        %961 = vmatpush1.msra.mxu0 0.0
        %962 = vmatprep.subr.mxu0 0.0
        %963 = vmatpush1.msra.mxu0 0.0
        %964 = vmatprep.subr.mxu0 0.0
        %965 = vmatpush1.msra.mxu0 0.0
        %966 = vmatprep.subr.mxu0 0.0
        %967 = vmatpush1.msra.mxu0 0.0
        %968 = vmatprep.subr.mxu0 0.0
        %969 = vmatpush1.msra.mxu0 0.0
        %970 = vmatprep.subr.mxu0 0.0
        %971 = vmatpush1.msra.mxu0 0.0
        %972 = vmatprep.subr.mxu0 0.0
        %973 = vmatpush1.msra.mxu0 0.0
        %974 = vmatprep.subr.mxu0 0.0
        %975 = vmatpush1.msra.mxu0 0.0
        %976 = vmatprep.subr.mxu0 0.0
        %977 = vmatpush1.msra.mxu0 0.0
        %978 = vmatprep.mubr.f32.mxu0 0.0
        %979 = vmatmul.mubr.f32.gmra.mrb[0].mxu0 %v912
        %v980 = vpop.f32.mrb[0].mxu0
        %v981 = vadd.f32 0.0, %v980
        %v982 = vpop.f32.mrb[0].mxu0
        %983 = vdwg.mxu0
        %v985 = vsel %vm813, %v981, 0
        %987 = vmatprep.subr.mxu0 0.0
        %988 = vmatpush1.msra.mxu0 %v805
        %989 = vmatprep.subr.mxu0 0.0
        %990 = vmatpush1.msra.mxu0 %v806
        %991 = vmatprep.subr.mxu0 0.0
        %992 = vmatpush1.msra.mxu0 0.0
        %993 = vmatprep.subr.mxu0 0.0
        %994 = vmatpush1.msra.mxu0 0.0
        %995 = vmatprep.subr.mxu0 0.0
        %996 = vmatpush1.msra.mxu0 0.0
        %997 = vmatprep.subr.mxu0 0.0
        %998 = vmatpush1.msra.mxu0 0.0
        %999 = vmatprep.subr.mxu0 0.0
        %1000 = vmatpush1.msra.mxu0 0.0
        %1001 = vmatprep.subr.mxu0 0.0
        %1002 = vmatpush1.msra.mxu0 0.0
        %1003 = vmatprep.subr.mxu0 0.0
        %1004 = vmatpush1.msra.mxu0 0.0
        %1005 = vmatprep.subr.mxu0 0.0
        %1006 = vmatpush1.msra.mxu0 0.0
        %1007 = vmatprep.subr.mxu0 0.0
        %1008 = vmatpush1.msra.mxu0 0.0
        %1009 = vmatprep.subr.mxu0 0.0
        %1010 = vmatpush1.msra.mxu0 0.0
        %1011 = vmatprep.subr.mxu0 0.0
        %1012 = vmatpush1.msra.mxu0 0.0
        %1013 = vmatprep.subr.mxu0 0.0
        %1014 = vmatpush1.msra.mxu0 0.0
        %1015 = vmatprep.subr.mxu0 0.0
        %1016 = vmatpush1.msra.mxu0 0.0
        %1017 = vmatprep.subr.mxu0 0.0
        %1018 = vmatpush1.msra.mxu0 0.0
        %1019 = vmatprep.subr.mxu0 0.0
        %1020 = vmatpush1.msra.mxu0 0.0
        %1021 = vmatprep.subr.mxu0 0.0
        %1022 = vmatpush1.msra.mxu0 0.0
        %1023 = vmatprep.subr.mxu0 0.0
        %1024 = vmatpush1.msra.mxu0 0.0
        %1025 = vmatprep.subr.mxu0 0.0
        %1026 = vmatpush1.msra.mxu0 0.0
        %1027 = vmatprep.subr.mxu0 0.0
        %1028 = vmatpush1.msra.mxu0 0.0
        %1029 = vmatprep.subr.mxu0 0.0
        %1030 = vmatpush1.msra.mxu0 0.0
        %1031 = vmatprep.subr.mxu0 0.0
        %1032 = vmatpush1.msra.mxu0 0.0
        %1033 = vmatprep.subr.mxu0 0.0
        %1034 = vmatpush1.msra.mxu0 0.0
        %1035 = vmatprep.subr.mxu0 0.0
        %1036 = vmatpush1.msra.mxu0 0.0
        %1037 = vmatprep.subr.mxu0 0.0
        %1038 = vmatpush1.msra.mxu0 0.0
        %1039 = vmatprep.subr.mxu0 0.0
        %1040 = vmatpush1.msra.mxu0 0.0
        %1041 = vmatprep.subr.mxu0 0.0
        %1042 = vmatpush1.msra.mxu0 0.0
        %1043 = vmatprep.subr.mxu0 0.0
        %1044 = vmatpush1.msra.mxu0 0.0
        %1045 = vmatprep.subr.mxu0 0.0
        %1046 = vmatpush1.msra.mxu0 0.0
        %1047 = vmatprep.subr.mxu0 0.0
        %1048 = vmatpush1.msra.mxu0 0.0
        %1049 = vmatprep.subr.mxu0 0.0
        %1050 = vmatpush1.msra.mxu0 0.0
        %1051 = vmatprep.mubr.f32.mxu0 0.0
        %1052 = vmatmul.mubr.f32.gmra.mrb[0].mxu0 %v985
        %v1053 = vpop.f32.mrb[0].mxu0
        %v1054 = vadd.f32 0.0, %v1053
        %v1055 = vpop.f32.mrb[0].mxu0
        %1056 = vdwg.mxu0
        %v1058 = vlaneseq
        %v1059 = vshrl.u32 %v1058, 7
        %v1060 = vsub.s32 0, %v1059
        %v1061 = vrot.slane %v809, %v1060
        %v1063 = vadd.f32 %v1061, %v1054
        %1064 = vrot.lane.b32.xlu0 %v802, 112
        %v1065 = vpop.permute.xlu0 %1064
        %1066 = vrot.lane.b32.xlu0 %v802, 80
        %v1067 = vpop.permute.xlu0 %1066
        %v1068 = vsel %vm813, %v1065, 0
        %v1070 = vsel %vm813, %v1067, 0
        %1072 = vmatprep.subr.mxu0 0.0
        %1073 = vmatpush1.xpose.msra.mxu0 %v1070
        %1074 = vmatprep.subr.mxu0 0.0
        %1075 = vmatpush1.xpose.msra.mxu0 0.0
        %1076 = vmatprep.subr.mxu0 0.0
        %1077 = vmatpush1.xpose.msra.mxu0 0.0
        %1078 = vmatprep.subr.mxu0 0.0
        %1079 = vmatpush1.xpose.msra.mxu0 0.0
        %1080 = vmatprep.subr.mxu0 0.0
        %1081 = vmatpush1.xpose.msra.mxu0 0.0
        %1082 = vmatprep.subr.mxu0 0.0
        %1083 = vmatpush1.xpose.msra.mxu0 0.0
        %1084 = vmatprep.subr.mxu0 0.0
        %1085 = vmatpush1.xpose.msra.mxu0 0.0
        %1086 = vmatprep.subr.mxu0 0.0
        %1087 = vmatpush1.xpose.msra.mxu0 0.0
        %1088 = vmatprep.subr.mxu0 0.0
        %1089 = vmatpush1.xpose.msra.mxu0 0.0
        %1090 = vmatprep.subr.mxu0 0.0
        %1091 = vmatpush1.xpose.msra.mxu0 0.0
        %1092 = vmatprep.subr.mxu0 0.0
        %1093 = vmatpush1.xpose.msra.mxu0 0.0
        %1094 = vmatprep.subr.mxu0 0.0
        %1095 = vmatpush1.xpose.msra.mxu0 0.0
        %1096 = vmatprep.subr.mxu0 0.0
        %1097 = vmatpush1.xpose.msra.mxu0 0.0
        %1098 = vmatprep.subr.mxu0 0.0
        %1099 = vmatpush1.xpose.msra.mxu0 0.0
        %1100 = vmatprep.subr.mxu0 0.0
        %1101 = vmatpush1.xpose.msra.mxu0 0.0
        %1102 = vmatprep.subr.mxu0 0.0
        %1103 = vmatpush1.xpose.msra.mxu0 0.0
        %1104 = vmatprep.subr.mxu0 0.0
        %1105 = vmatpush1.xpose.msra.mxu0 0.0
        %1106 = vmatprep.subr.mxu0 0.0
        %1107 = vmatpush1.xpose.msra.mxu0 0.0
        %1108 = vmatprep.subr.mxu0 0.0
        %1109 = vmatpush1.xpose.msra.mxu0 0.0
        %1110 = vmatprep.subr.mxu0 0.0
        %1111 = vmatpush1.xpose.msra.mxu0 0.0
        %1112 = vmatprep.subr.mxu0 0.0
        %1113 = vmatpush1.xpose.msra.mxu0 0.0
        %1114 = vmatprep.subr.mxu0 0.0
        %1115 = vmatpush1.xpose.msra.mxu0 0.0
        %1116 = vmatprep.subr.mxu0 0.0
        %1117 = vmatpush1.xpose.msra.mxu0 0.0
        %1118 = vmatprep.subr.mxu0 0.0
        %1119 = vmatpush1.xpose.msra.mxu0 0.0
        %1120 = vmatprep.subr.mxu0 0.0
        %1121 = vmatpush1.xpose.msra.mxu0 0.0
        %1122 = vmatprep.subr.mxu0 0.0
        %1123 = vmatpush1.xpose.msra.mxu0 0.0
        %1124 = vmatprep.subr.mxu0 0.0
        %1125 = vmatpush1.xpose.msra.mxu0 0.0
        %1126 = vmatprep.subr.mxu0 0.0
        %1127 = vmatpush1.xpose.msra.mxu0 0.0
        %1128 = vmatprep.subr.mxu0 0.0
        %1129 = vmatpush1.xpose.msra.mxu0 0.0
        %1130 = vmatprep.subr.mxu0 0.0
        %1131 = vmatpush1.xpose.msra.mxu0 0.0
        %1132 = vmatprep.subr.mxu0 0.0
        %1133 = vmatpush1.xpose.msra.mxu0 0.0
        %1134 = vmatprep.subr.mxu0 0.0
        %1135 = vmatpush1.xpose.msra.mxu0 0.0
        %1136 = vmatprep.mubr.f32.mxu0 0.0
        %1137 = vmatmul.mubr.f32.gmra.mrb[0].mxu0 %v1068
        %v1138 = vpop.f32.mrb[0].mxu0
        %v1139 = vadd.f32 0.0, %v1138
        %v1140 = vpop.f32.mrb[0].mxu0
        %1141 = vdwg.mxu0
        %v1142 = vmul.f32 %v1139, 0.25
        %v1143 = vadd.f32 %v1142, %v893
        %v1144 = vsel %vm896, %v1143, -inf
        %1145 = vmax.xlane.f32.xlu0 %v1144
        %v1146 = vpop.xlane.xlu0 %1145
        %v1147 = vsub.f32 %v1143, %v1146
        %v1148 = vmul.f32 %v1147, 1.442695
        %v1149 = vpow.pop %v1148
        %v1150 = vsel %vm896, %v1149, 0.0
        %1151 = vadd.xlane.f32.xlu0 %v1150
        %v1152 = vpop.xlane.xlu0 %1151
        %v1153 = vrcp.pop %v1152
        %v1154 = vmul.f32 %v1149, %v1153
        %1155 = vrot.lane.b32.xlu0 %v802, 48
        %v1156 = vpop.permute.xlu0 %1155
        %v1159 = vsel %vm896, %v1154, 0
        %1161 = vmatprep.subr.mxu0 0.0
        %1162 = vmatpush1.msra.mxu0 %v1156
        %1163 = vmatprep.subr.mxu0 0.0
        %1164 = vmatpush1.msra.mxu0 0.0
        %1165 = vmatprep.subr.mxu0 0.0
        %1166 = vmatpush1.msra.mxu0 0.0
        %1167 = vmatprep.subr.mxu0 0.0
        %1168 = vmatpush1.msra.mxu0 0.0
        %1169 = vmatprep.subr.mxu0 0.0
        %1170 = vmatpush1.msra.mxu0 0.0
        %1171 = vmatprep.subr.mxu0 0.0
        %1172 = vmatpush1.msra.mxu0 0.0
        %1173 = vmatprep.subr.mxu0 0.0
        %1174 = vmatpush1.msra.mxu0 0.0
        %1175 = vmatprep.subr.mxu0 0.0
        %1176 = vmatpush1.msra.mxu0 0.0
        %1177 = vmatprep.subr.mxu0 0.0
        %1178 = vmatpush1.msra.mxu0 0.0
        %1179 = vmatprep.subr.mxu0 0.0
        %1180 = vmatpush1.msra.mxu0 0.0
        %1181 = vmatprep.subr.mxu0 0.0
        %1182 = vmatpush1.msra.mxu0 0.0
        %1183 = vmatprep.subr.mxu0 0.0
        %1184 = vmatpush1.msra.mxu0 0.0
        %1185 = vmatprep.subr.mxu0 0.0
        %1186 = vmatpush1.msra.mxu0 0.0
        %1187 = vmatprep.subr.mxu0 0.0
        %1188 = vmatpush1.msra.mxu0 0.0
        %1189 = vmatprep.subr.mxu0 0.0
        %1190 = vmatpush1.msra.mxu0 0.0
        %1191 = vmatprep.subr.mxu0 0.0
        %1192 = vmatpush1.msra.mxu0 0.0
        %1193 = vmatprep.subr.mxu0 0.0
        %1194 = vmatpush1.msra.mxu0 0.0
        %1195 = vmatprep.subr.mxu0 0.0
        %1196 = vmatpush1.msra.mxu0 0.0
        %1197 = vmatprep.subr.mxu0 0.0
        %1198 = vmatpush1.msra.mxu0 0.0
        %1199 = vmatprep.subr.mxu0 0.0
        %1200 = vmatpush1.msra.mxu0 0.0
        %1201 = vmatprep.subr.mxu0 0.0
        %1202 = vmatpush1.msra.mxu0 0.0
        %1203 = vmatprep.subr.mxu0 0.0
        %1204 = vmatpush1.msra.mxu0 0.0
        %1205 = vmatprep.subr.mxu0 0.0
        %1206 = vmatpush1.msra.mxu0 0.0
        %1207 = vmatprep.subr.mxu0 0.0
        %1208 = vmatpush1.msra.mxu0 0.0
        %1209 = vmatprep.subr.mxu0 0.0
        %1210 = vmatpush1.msra.mxu0 0.0
        %1211 = vmatprep.subr.mxu0 0.0
        %1212 = vmatpush1.msra.mxu0 0.0
        %1213 = vmatprep.subr.mxu0 0.0
        %1214 = vmatpush1.msra.mxu0 0.0
        %1215 = vmatprep.subr.mxu0 0.0
        %1216 = vmatpush1.msra.mxu0 0.0
        %1217 = vmatprep.subr.mxu0 0.0
        %1218 = vmatpush1.msra.mxu0 0.0
        %1219 = vmatprep.subr.mxu0 0.0
        %1220 = vmatpush1.msra.mxu0 0.0
        %1221 = vmatprep.subr.mxu0 0.0
        %1222 = vmatpush1.msra.mxu0 0.0
        %1223 = vmatprep.subr.mxu0 0.0
        %1224 = vmatpush1.msra.mxu0 0.0
        %1225 = vmatprep.mubr.f32.mxu0 0.0
        %1226 = vmatmul.mubr.f32.gmra.mrb[0].mxu0 %v1159
        %v1227 = vpop.f32.mrb[0].mxu0
        %v1228 = vadd.f32 0.0, %v1227
        %v1229 = vpop.f32.mrb[0].mxu0
        %1230 = vdwg.mxu0
        %v1232 = vsel %vm813, %v1228, 0
        %1234 = vmatprep.subr.mxu0 0.0
        %1235 = vmatpush1.msra.mxu0 %v807
        %1236 = vmatprep.subr.mxu0 0.0
        %1237 = vmatpush1.msra.mxu0 %v808
        %1238 = vmatprep.subr.mxu0 0.0
        %1239 = vmatpush1.msra.mxu0 0.0
        %1240 = vmatprep.subr.mxu0 0.0
        %1241 = vmatpush1.msra.mxu0 0.0
        %1242 = vmatprep.subr.mxu0 0.0
        %1243 = vmatpush1.msra.mxu0 0.0
        %1244 = vmatprep.subr.mxu0 0.0
        %1245 = vmatpush1.msra.mxu0 0.0
        %1246 = vmatprep.subr.mxu0 0.0
        %1247 = vmatpush1.msra.mxu0 0.0
        %1248 = vmatprep.subr.mxu0 0.0
        %1249 = vmatpush1.msra.mxu0 0.0
        %1250 = vmatprep.subr.mxu0 0.0
        %1251 = vmatpush1.msra.mxu0 0.0
        %1252 = vmatprep.subr.mxu0 0.0
        %1253 = vmatpush1.msra.mxu0 0.0
        %1254 = vmatprep.subr.mxu0 0.0
        %1255 = vmatpush1.msra.mxu0 0.0
        %1256 = vmatprep.subr.mxu0 0.0
        %1257 = vmatpush1.msra.mxu0 0.0
        %1258 = vmatprep.subr.mxu0 0.0
        %1259 = vmatpush1.msra.mxu0 0.0
        %1260 = vmatprep.subr.mxu0 0.0
        %1261 = vmatpush1.msra.mxu0 0.0
        %1262 = vmatprep.subr.mxu0 0.0
        %1263 = vmatpush1.msra.mxu0 0.0
        %1264 = vmatprep.subr.mxu0 0.0
        %1265 = vmatpush1.msra.mxu0 0.0
        %1266 = vmatprep.subr.mxu0 0.0
        %1267 = vmatpush1.msra.mxu0 0.0
        %1268 = vmatprep.subr.mxu0 0.0
        %1269 = vmatpush1.msra.mxu0 0.0
        %1270 = vmatprep.subr.mxu0 0.0
        %1271 = vmatpush1.msra.mxu0 0.0
        %1272 = vmatprep.subr.mxu0 0.0
        %1273 = vmatpush1.msra.mxu0 0.0
        %1274 = vmatprep.subr.mxu0 0.0
        %1275 = vmatpush1.msra.mxu0 0.0
        %1276 = vmatprep.subr.mxu0 0.0
        %1277 = vmatpush1.msra.mxu0 0.0
        %1278 = vmatprep.subr.mxu0 0.0
        %1279 = vmatpush1.msra.mxu0 0.0
        %1280 = vmatprep.subr.mxu0 0.0
        %1281 = vmatpush1.msra.mxu0 0.0
        %1282 = vmatprep.subr.mxu0 0.0
        %1283 = vmatpush1.msra.mxu0 0.0
        %1284 = vmatprep.subr.mxu0 0.0
        %1285 = vmatpush1.msra.mxu0 0.0
        %1286 = vmatprep.subr.mxu0 0.0
        %1287 = vmatpush1.msra.mxu0 0.0
        %1288 = vmatprep.subr.mxu0 0.0
        %1289 = vmatpush1.msra.mxu0 0.0
        %1290 = vmatprep.subr.mxu0 0.0
        %1291 = vmatpush1.msra.mxu0 0.0
        %1292 = vmatprep.subr.mxu0 0.0
        %1293 = vmatpush1.msra.mxu0 0.0
        %1294 = vmatprep.subr.mxu0 0.0
        %1295 = vmatpush1.msra.mxu0 0.0
        %1296 = vmatprep.subr.mxu0 0.0
        %1297 = vmatpush1.msra.mxu0 0.0
        %1298 = vmatprep.mubr.f32.mxu0 0.0
        %1299 = vmatmul.mubr.f32.gmra.mrb[0].mxu0 %v1232
        %v1300 = vpop.f32.mrb[0].mxu0
        %v1301 = vadd.f32 0.0, %v1300
        %v1302 = vpop.f32.mrb[0].mxu0
        %1303 = vdwg.mxu0
        %v1304 = vadd.f32 %v1063, %v1301
        %v1305 = vadd.f32 %v1304, %v719
        %v1306 = vld [vmem:[#allocation11] sm:$0x1]
        %v1307 = vld [vmem:[#allocation13] sm:$0x1]
        %v1308 = vsel %vm691, %v1305, 0.0
        %1309 = vadd.xlane.f32.xlu0 %v1308
        %v1310 = vpop.xlane.xlu0 %1309
        %v1311 = vmul.f32 %v1310, %v695
        %v1312 = vsub.f32 %v1305, %v1311
        %v1313 = vmul.f32 %v1312, %v1312
        %v1314 = vsel %vm691, %v1313, 0.0
        %1315 = vadd.xlane.f32.xlu0 %v1314
        %v1316 = vpop.xlane.xlu0 %1315
        %v1317 = vmul.f32 %v1316, %v695
        %v1318 = vadd.f32 %v1317, 1e-12
        %v1319 = vrsqrt.pop %v1318
        %v1320 = vmul.f32 %v1312, %v1319
        %v1322 = vlaneseq
        %v1323 = vshrl.u32 %v1322, 7
        %v1324 = vsub.s32 0, %v1323
        %v1325 = vrot.slane %v1306, %v1324
        %v1327 = vmul.f32 %v1320, %v1325
        %v1329 = vlaneseq
        %v1330 = vshrl.u32 %v1329, 7
        %v1331 = vsub.s32 0, %v1330
        %v1332 = vrot.slane %v1307, %v1331
        %v1334 = vadd.f32 %v1327, %v1332
        %v1335 = vld [vmem:[%s10] sm:$0xff]
        %v1336 = vld [vmem:[%s10 + $0x8] sm:$0xff]
        %v1337 = vld [vmem:[%s10 + $0x10] sm:$0xff]
        %v1338 = vld [vmem:[%s10 + $0x18] sm:$0xff]
        %v1339 = vld [vmem:[%s11] sm:$0x1]
        %v1341 = vlaneseq
        %v1342 = vshrl.u32 %v1341, 7
        %v1343 = vsub.s32 0, %v1342
        %v1344 = vrot.slane %v1339, %v1343
        %v1347 = vsel %vm691, %v1334, 0
        %1349 = vmatprep.subr.mxu0 0.0
        %1350 = vmatpush1.msra.mxu0 %v1335
        %1351 = vmatprep.subr.mxu0 0.0
        %1352 = vmatpush1.msra.mxu0 %v1336
        %1353 = vmatprep.subr.mxu0 0.0
        %1354 = vmatpush1.msra.mxu0 %v1337
        %1355 = vmatprep.subr.mxu0 0.0
        %1356 = vmatpush1.msra.mxu0 %v1338
        %1357 = vmatprep.subr.mxu0 0.0
        %1358 = vmatpush1.msra.mxu0 0.0
        %1359 = vmatprep.subr.mxu0 0.0
        %1360 = vmatpush1.msra.mxu0 0.0
        %1361 = vmatprep.subr.mxu0 0.0
        %1362 = vmatpush1.msra.mxu0 0.0
        %1363 = vmatprep.subr.mxu0 0.0
        %1364 = vmatpush1.msra.mxu0 0.0
        %1365 = vmatprep.subr.mxu0 0.0
        %1366 = vmatpush1.msra.mxu0 0.0
        %1367 = vmatprep.subr.mxu0 0.0
        %1368 = vmatpush1.msra.mxu0 0.0
        %1369 = vmatprep.subr.mxu0 0.0
        %1370 = vmatpush1.msra.mxu0 0.0
        %1371 = vmatprep.subr.mxu0 0.0
        %1372 = vmatpush1.msra.mxu0 0.0
        %1373 = vmatprep.subr.mxu0 0.0
        %1374 = vmatpush1.msra.mxu0 0.0
        %1375 = vmatprep.subr.mxu0 0.0
        %1376 = vmatpush1.msra.mxu0 0.0
        %1377 = vmatprep.subr.mxu0 0.0
        %1378 = vmatpush1.msra.mxu0 0.0
        %1379 = vmatprep.subr.mxu0 0.0
        %1380 = vmatpush1.msra.mxu0 0.0
        %1381 = vmatprep.subr.mxu0 0.0
        %1382 = vmatpush1.msra.mxu0 0.0
        %1383 = vmatprep.subr.mxu0 0.0
        %1384 = vmatpush1.msra.mxu0 0.0
        %1385 = vmatprep.subr.mxu0 0.0
        %1386 = vmatpush1.msra.mxu0 0.0
        %1387 = vmatprep.subr.mxu0 0.0
        %1388 = vmatpush1.msra.mxu0 0.0
        %1389 = vmatprep.subr.mxu0 0.0
        %1390 = vmatpush1.msra.mxu0 0.0
        %1391 = vmatprep.subr.mxu0 0.0
        %1392 = vmatpush1.msra.mxu0 0.0
        %1393 = vmatprep.subr.mxu0 0.0
        %1394 = vmatpush1.msra.mxu0 0.0
        %1395 = vmatprep.subr.mxu0 0.0
        %1396 = vmatpush1.msra.mxu0 0.0
        %1397 = vmatprep.subr.mxu0 0.0
        %1398 = vmatpush1.msra.mxu0 0.0
        %1399 = vmatprep.subr.mxu0 0.0
        %1400 = vmatpush1.msra.mxu0 0.0
        %1401 = vmatprep.subr.mxu0 0.0
        %1402 = vmatpush1.msra.mxu0 0.0
        %1403 = vmatprep.subr.mxu0 0.0
        %1404 = vmatpush1.msra.mxu0 0.0
        %1405 = vmatprep.subr.mxu0 0.0
        %1406 = vmatpush1.msra.mxu0 0.0
        %1407 = vmatprep.subr.mxu0 0.0
        %1408 = vmatpush1.msra.mxu0 0.0
        %1409 = vmatprep.subr.mxu0 0.0
        %1410 = vmatpush1.msra.mxu0 0.0
        %1411 = vmatprep.subr.mxu0 0.0
        %1412 = vmatpush1.msra.mxu0 0.0
        %1413 = vmatprep.mubr.f32.mxu0 0.0
        %1414 = vmatmul.mubr.f32.gmra.mrb[0].mxu0 %v1347
        %v1415 = vpop.f32.mrb[0].mxu0
        %v1416 = vadd.f32 %v1344, %v1415
        %v1417 = vpop.f32.mrb[0].mxu0
        %1418 = vdwg.mxu0
        %v1419 = vmul.f32 %v1416, 0.5
        %v1420 = vmul.f32 %v1416, 0.044715
        %v1421 = vmul.f32 %v1420, %v1416
        %v1422 = vmul.f32 %v1421, %v1416
        %v1423 = vadd.f32 %v1416, %v1422
        %v1424 = vmul.f32 %v1423, 0.7978846
        %v1425 = vtanh.pop %v1424
        %v1426 = vadd.f32 %v1425, 1.0
        %v1427 = vmul.f32 %v1419, %v1426
        %v1428 = vld [vmem:[%s12] sm:$0xff]
        %v1429 = vld [vmem:[%s12 + $0x8] sm:$0xff]
        %v1430 = vld [vmem:[%s12 + $0x10] sm:$0xff]
        %v1431 = vld [vmem:[%s12 + $0x18] sm:$0xff]
        %v1432 = vld [vmem:[%s12 + $0x20] sm:$0xff]
        %v1433 = vld [vmem:[%s12 + $0x28] sm:$0xff]
        %v1434 = vld [vmem:[%s12 + $0x30] sm:$0xff]
        %v1435 = vld [vmem:[%s12 + $0x38] sm:$0xff]
        %v1436 = vld [vmem:[%s13] sm:$0x1]
        %v1438 = vlaneseq
        %v1439 = vshrl.u32 %v1438, 7
        %v1440 = vsub.s32 0, %v1439
        %v1441 = vrot.slane %v1436, %v1440
        %vm1443 = vcmask 523264
        %v1445 = vsel %vm1443, %v1427, 0
        %1447 = vmatprep.subr.mxu0 0.0
        %1448 = vmatpush1.msra.mxu0 %v1428
        %1449 = vmatprep.subr.mxu0 0.0
        %1450 = vmatpush1.msra.mxu0 %v1429
        %1451 = vmatprep.subr.mxu0 0.0
        %1452 = vmatpush1.msra.mxu0 %v1430
        %1453 = vmatprep.subr.mxu0 0.0
        %1454 = vmatpush1.msra.mxu0 %v1431
        %1455 = vmatprep.subr.mxu0 0.0
        %1456 = vmatpush1.msra.mxu0 %v1432
        %1457 = vmatprep.subr.mxu0 0.0
        %1458 = vmatpush1.msra.mxu0 %v1433
        %1459 = vmatprep.subr.mxu0 0.0
        %1460 = vmatpush1.msra.mxu0 %v1434
        %1461 = vmatprep.subr.mxu0 0.0
        %1462 = vmatpush1.msra.mxu0 %v1435
        %1463 = vmatprep.subr.mxu0 0.0
        %1464 = vmatpush1.msra.mxu0 0.0
        %1465 = vmatprep.subr.mxu0 0.0
        %1466 = vmatpush1.msra.mxu0 0.0
        %1467 = vmatprep.subr.mxu0 0.0
        %1468 = vmatpush1.msra.mxu0 0.0
        %1469 = vmatprep.subr.mxu0 0.0
        %1470 = vmatpush1.msra.mxu0 0.0
        %1471 = vmatprep.subr.mxu0 0.0
        %1472 = vmatpush1.msra.mxu0 0.0
        %1473 = vmatprep.subr.mxu0 0.0
        %1474 = vmatpush1.msra.mxu0 0.0
        %1475 = vmatprep.subr.mxu0 0.0
        %1476 = vmatpush1.msra.mxu0 0.0
        %1477 = vmatprep.subr.mxu0 0.0
        %1478 = vmatpush1.msra.mxu0 0.0
        %1479 = vmatprep.subr.mxu0 0.0
        %1480 = vmatpush1.msra.mxu0 0.0
        %1481 = vmatprep.subr.mxu0 0.0
        %1482 = vmatpush1.msra.mxu0 0.0
        %1483 = vmatprep.subr.mxu0 0.0
        %1484 = vmatpush1.msra.mxu0 0.0
        %1485 = vmatprep.subr.mxu0 0.0
        %1486 = vmatpush1.msra.mxu0 0.0
        %1487 = vmatprep.subr.mxu0 0.0
        %1488 = vmatpush1.msra.mxu0 0.0
        %1489 = vmatprep.subr.mxu0 0.0
        %1490 = vmatpush1.msra.mxu0 0.0
        %1491 = vmatprep.subr.mxu0 0.0
        %1492 = vmatpush1.msra.mxu0 0.0
        %1493 = vmatprep.subr.mxu0 0.0
        %1494 = vmatpush1.msra.mxu0 0.0
        %1495 = vmatprep.subr.mxu0 0.0
        %1496 = vmatpush1.msra.mxu0 0.0
        %1497 = vmatprep.subr.mxu0 0.0
        %1498 = vmatpush1.msra.mxu0 0.0
        %1499 = vmatprep.subr.mxu0 0.0
        %1500 = vmatpush1.msra.mxu0 0.0
        %1501 = vmatprep.subr.mxu0 0.0
        %1502 = vmatpush1.msra.mxu0 0.0
        %1503 = vmatprep.subr.mxu0 0.0
        %1504 = vmatpush1.msra.mxu0 0.0
        %1505 = vmatprep.subr.mxu0 0.0
        %1506 = vmatpush1.msra.mxu0 0.0
        %1507 = vmatprep.subr.mxu0 0.0
        %1508 = vmatpush1.msra.mxu0 0.0
        %1509 = vmatprep.subr.mxu0 0.0
        %1510 = vmatpush1.msra.mxu0 0.0
        %1511 = vmatprep.mubr.f32.mxu0 0.0
        %1512 = vmatmul.mubr.f32.gmra.mrb[0].mxu0 %v1445
        %v1513 = vpop.f32.mrb[0].mxu0
        %v1514 = vadd.f32 %v1441, %v1513
        %v1515 = vpop.f32.mrb[0].mxu0
        %1516 = vdwg.mxu0
        %v1517 = vadd.f32 %v1514, %v1334
        %v1518 = vld [vmem:[%s14] sm:$0x1]
        %v1519 = vld [vmem:[%s15] sm:$0x1]
        %v1520 = vsel %vm691, %v1517, 0.0
        %1521 = vadd.xlane.f32.xlu0 %v1520
        %v1522 = vpop.xlane.xlu0 %1521
        %v1523 = vmul.f32 %v1522, %v695
        %v1524 = vsub.f32 %v1517, %v1523
        %v1525 = vmul.f32 %v1524, %v1524
        %v1526 = vsel %vm691, %v1525, 0.0
        %1527 = vadd.xlane.f32.xlu0 %v1526
        %v1528 = vpop.xlane.xlu0 %1527
        %v1529 = vmul.f32 %v1528, %v695
        %v1530 = vadd.f32 %v1529, 1e-12
        %v1531 = vrsqrt.pop %v1530
        %v1532 = vmul.f32 %v1524, %v1531
        %v1534 = vlaneseq
        %v1535 = vshrl.u32 %v1534, 7
        %v1536 = vsub.s32 0, %v1535
        %v1537 = vrot.slane %v1518, %v1536
        %v1539 = vmul.f32 %v1532, %v1537
        %v1541 = vlaneseq
        %v1542 = vshrl.u32 %v1541, 7
        %v1543 = vsub.s32 0, %v1542
        %v1544 = vrot.slane %v1519, %v1543
        %v1546 = vadd.f32 %v1539, %v1544
        %s1547 = scalar_lea.vmem %s4, 32
        %v1548 = vld [vmem:[%s1547] sm:$0xff]
        %v1549 = vld [vmem:[%s1547 + $0x8] sm:$0xff]
        %v1550 = vld [vmem:[%s1547 + $0x10] sm:$0xff]
        %v1551 = vld [vmem:[%s1547 + $0x18] sm:$0xff]
        %s1552 = scalar_lea.vmem [#allocation8], 1
        %v1553 = vld [vmem:[%s1552] sm:$0x1]
        %v1555 = vlaneseq
        %v1556 = vshrl.u32 %v1555, 7
        %v1557 = vsub.s32 0, %v1556
        %v1558 = vrot.slane %v1553, %v1557
        %v1561 = vsel %vm691, %v1546, 0
        %1563 = vmatprep.subr.mxu0 0.0
        %1564 = vmatpush1.msra.mxu0 %v1548
        %1565 = vmatprep.subr.mxu0 0.0
        %1566 = vmatpush1.msra.mxu0 %v1549
        %1567 = vmatprep.subr.mxu0 0.0
        %1568 = vmatpush1.msra.mxu0 %v1550
        %1569 = vmatprep.subr.mxu0 0.0
        %1570 = vmatpush1.msra.mxu0 %v1551
        %1571 = vmatprep.subr.mxu0 0.0
        %1572 = vmatpush1.msra.mxu0 0.0
        %1573 = vmatprep.subr.mxu0 0.0
        %1574 = vmatpush1.msra.mxu0 0.0
        %1575 = vmatprep.subr.mxu0 0.0
        %1576 = vmatpush1.msra.mxu0 0.0
        %1577 = vmatprep.subr.mxu0 0.0
        %1578 = vmatpush1.msra.mxu0 0.0
        %1579 = vmatprep.subr.mxu0 0.0
        %1580 = vmatpush1.msra.mxu0 0.0
        %1581 = vmatprep.subr.mxu0 0.0
        %1582 = vmatpush1.msra.mxu0 0.0
        %1583 = vmatprep.subr.mxu0 0.0
        %1584 = vmatpush1.msra.mxu0 0.0
        %1585 = vmatprep.subr.mxu0 0.0
        %1586 = vmatpush1.msra.mxu0 0.0
        %1587 = vmatprep.subr.mxu0 0.0
        %1588 = vmatpush1.msra.mxu0 0.0
        %1589 = vmatprep.subr.mxu0 0.0
        %1590 = vmatpush1.msra.mxu0 0.0
        %1591 = vmatprep.subr.mxu0 0.0
        %1592 = vmatpush1.msra.mxu0 0.0
        %1593 = vmatprep.subr.mxu0 0.0
        %1594 = vmatpush1.msra.mxu0 0.0
        %1595 = vmatprep.subr.mxu0 0.0
        %1596 = vmatpush1.msra.mxu0 0.0
        %1597 = vmatprep.subr.mxu0 0.0
        %1598 = vmatpush1.msra.mxu0 0.0
        %1599 = vmatprep.subr.mxu0 0.0
        %1600 = vmatpush1.msra.mxu0 0.0
        %1601 = vmatprep.subr.mxu0 0.0
        %1602 = vmatpush1.msra.mxu0 0.0
        %1603 = vmatprep.subr.mxu0 0.0
        %1604 = vmatpush1.msra.mxu0 0.0
        %1605 = vmatprep.subr.mxu0 0.0
        %1606 = vmatpush1.msra.mxu0 0.0
        %1607 = vmatprep.subr.mxu0 0.0
        %1608 = vmatpush1.msra.mxu0 0.0
        %1609 = vmatprep.subr.mxu0 0.0
        %1610 = vmatpush1.msra.mxu0 0.0
        %1611 = vmatprep.subr.mxu0 0.0
        %1612 = vmatpush1.msra.mxu0 0.0
        %1613 = vmatprep.subr.mxu0 0.0
        %1614 = vmatpush1.msra.mxu0 0.0
        %1615 = vmatprep.subr.mxu0 0.0
        %1616 = vmatpush1.msra.mxu0 0.0
        %1617 = vmatprep.subr.mxu0 0.0
        %1618 = vmatpush1.msra.mxu0 0.0
        %1619 = vmatprep.subr.mxu0 0.0
        %1620 = vmatpush1.msra.mxu0 0.0
        %1621 = vmatprep.subr.mxu0 0.0
        %1622 = vmatpush1.msra.mxu0 0.0
        %1623 = vmatprep.subr.mxu0 0.0
        %1624 = vmatpush1.msra.mxu0 0.0
        %1625 = vmatprep.subr.mxu0 0.0
        %1626 = vmatpush1.msra.mxu0 0.0
        %1627 = vmatprep.mubr.f32.mxu0 0.0
        %1628 = vmatmul.mubr.f32.gmra.mrb[0].mxu0 %v1561
        %v1629 = vpop.f32.mrb[0].mxu0
        %v1630 = vadd.f32 %v1558, %v1629
        %v1631 = vpop.f32.mrb[0].mxu0
        %1632 = vdwg.mxu0
        %s1633 = scalar_lea.vmem %s6, 32
        %v1634 = vld [vmem:[%s1633] sm:$0xff]
        %v1635 = vld [vmem:[%s1633 + $0x8] sm:$0xff]
        %v1636 = vld [vmem:[%s1633 + $0x10] sm:$0xff]
        %v1637 = vld [vmem:[%s1633 + $0x18] sm:$0xff]
        %s1638 = scalar_lea.vmem [#allocation10], 1
        %v1639 = vld [vmem:[%s1638] sm:$0x1]
        %1641 = vrot.lane.b32.xlu0 %v1630, 96
        %v1642 = vpop.permute.xlu0 %1641
        %v1643 = vsel %vm813, %v1630, 0
        %v1645 = vsel %vm813, %v1642, 0
        %1647 = vmatprep.subr.mxu0 0.0
        %1648 = vmatpush1.xpose.msra.mxu0 %v1645
        %1649 = vmatprep.subr.mxu0 0.0
        %1650 = vmatpush1.xpose.msra.mxu0 0.0
        %1651 = vmatprep.subr.mxu0 0.0
        %1652 = vmatpush1.xpose.msra.mxu0 0.0
        %1653 = vmatprep.subr.mxu0 0.0
        %1654 = vmatpush1.xpose.msra.mxu0 0.0
        %1655 = vmatprep.subr.mxu0 0.0
        %1656 = vmatpush1.xpose.msra.mxu0 0.0
        %1657 = vmatprep.subr.mxu0 0.0
        %1658 = vmatpush1.xpose.msra.mxu0 0.0
        %1659 = vmatprep.subr.mxu0 0.0
        %1660 = vmatpush1.xpose.msra.mxu0 0.0
        %1661 = vmatprep.subr.mxu0 0.0
        %1662 = vmatpush1.xpose.msra.mxu0 0.0
        %1663 = vmatprep.subr.mxu0 0.0
        %1664 = vmatpush1.xpose.msra.mxu0 0.0
        %1665 = vmatprep.subr.mxu0 0.0
        %1666 = vmatpush1.xpose.msra.mxu0 0.0
        %1667 = vmatprep.subr.mxu0 0.0
        %1668 = vmatpush1.xpose.msra.mxu0 0.0
        %1669 = vmatprep.subr.mxu0 0.0
        %1670 = vmatpush1.xpose.msra.mxu0 0.0
        %1671 = vmatprep.subr.mxu0 0.0
        %1672 = vmatpush1.xpose.msra.mxu0 0.0
        %1673 = vmatprep.subr.mxu0 0.0
        %1674 = vmatpush1.xpose.msra.mxu0 0.0
        %1675 = vmatprep.subr.mxu0 0.0
        %1676 = vmatpush1.xpose.msra.mxu0 0.0
        %1677 = vmatprep.subr.mxu0 0.0
        %1678 = vmatpush1.xpose.msra.mxu0 0.0
        %1679 = vmatprep.subr.mxu0 0.0
        %1680 = vmatpush1.xpose.msra.mxu0 0.0
        %1681 = vmatprep.subr.mxu0 0.0
        %1682 = vmatpush1.xpose.msra.mxu0 0.0
        %1683 = vmatprep.subr.mxu0 0.0
        %1684 = vmatpush1.xpose.msra.mxu0 0.0
        %1685 = vmatprep.subr.mxu0 0.0
        %1686 = vmatpush1.xpose.msra.mxu0 0.0
        %1687 = vmatprep.subr.mxu0 0.0
        %1688 = vmatpush1.xpose.msra.mxu0 0.0
        %1689 = vmatprep.subr.mxu0 0.0
        %1690 = vmatpush1.xpose.msra.mxu0 0.0
        %1691 = vmatprep.subr.mxu0 0.0
        %1692 = vmatpush1.xpose.msra.mxu0 0.0
        %1693 = vmatprep.subr.mxu0 0.0
        %1694 = vmatpush1.xpose.msra.mxu0 0.0
        %1695 = vmatprep.subr.mxu0 0.0
        %1696 = vmatpush1.xpose.msra.mxu0 0.0
        %1697 = vmatprep.subr.mxu0 0.0
        %1698 = vmatpush1.xpose.msra.mxu0 0.0
        %1699 = vmatprep.subr.mxu0 0.0
        %1700 = vmatpush1.xpose.msra.mxu0 0.0
        %1701 = vmatprep.subr.mxu0 0.0
        %1702 = vmatpush1.xpose.msra.mxu0 0.0
        %1703 = vmatprep.subr.mxu0 0.0
        %1704 = vmatpush1.xpose.msra.mxu0 0.0
        %1705 = vmatprep.subr.mxu0 0.0
        %1706 = vmatpush1.xpose.msra.mxu0 0.0
        %1707 = vmatprep.subr.mxu0 0.0
        %1708 = vmatpush1.xpose.msra.mxu0 0.0
        %1709 = vmatprep.subr.mxu0 0.0
        %1710 = vmatpush1.xpose.msra.mxu0 0.0
        %1711 = vmatprep.mubr.f32.mxu0 0.0
        %1712 = vmatmul.mubr.f32.gmra.mrb[0].mxu0 %v1643
        %v1713 = vpop.f32.mrb[0].mxu0
        %v1714 = vadd.f32 0.0, %v1713
        %v1715 = vpop.f32.mrb[0].mxu0
        %1716 = vdwg.mxu0
        %v1717 = vmul.f32 %v1714, 0.25
        %v1718 = vadd.f32 %v1717, %v893
        %v1719 = vsel %vm896, %v1718, -inf
        %1720 = vmax.xlane.f32.xlu0 %v1719
        %v1721 = vpop.xlane.xlu0 %1720
        %v1722 = vsub.f32 %v1718, %v1721
        %v1723 = vmul.f32 %v1722, 1.442695
        %v1724 = vpow.pop %v1723
        %v1725 = vsel %vm896, %v1724, 0.0
        %1726 = vadd.xlane.f32.xlu0 %v1725
        %v1727 = vpop.xlane.xlu0 %1726
        %v1728 = vrcp.pop %v1727
        %v1729 = vmul.f32 %v1724, %v1728
        %1730 = vrot.lane.b32.xlu0 %v1630, 64
        %v1731 = vpop.permute.xlu0 %1730
        %v1734 = vsel %vm896, %v1729, 0
        %1736 = vmatprep.subr.mxu0 0.0
        %1737 = vmatpush1.msra.mxu0 %v1731
        %1738 = vmatprep.subr.mxu0 0.0
        %1739 = vmatpush1.msra.mxu0 0.0
        %1740 = vmatprep.subr.mxu0 0.0
        %1741 = vmatpush1.msra.mxu0 0.0
        %1742 = vmatprep.subr.mxu0 0.0
        %1743 = vmatpush1.msra.mxu0 0.0
        %1744 = vmatprep.subr.mxu0 0.0
        %1745 = vmatpush1.msra.mxu0 0.0
        %1746 = vmatprep.subr.mxu0 0.0
        %1747 = vmatpush1.msra.mxu0 0.0
        %1748 = vmatprep.subr.mxu0 0.0
        %1749 = vmatpush1.msra.mxu0 0.0
        %1750 = vmatprep.subr.mxu0 0.0
        %1751 = vmatpush1.msra.mxu0 0.0
        %1752 = vmatprep.subr.mxu0 0.0
        %1753 = vmatpush1.msra.mxu0 0.0
        %1754 = vmatprep.subr.mxu0 0.0
        %1755 = vmatpush1.msra.mxu0 0.0
        %1756 = vmatprep.subr.mxu0 0.0
        %1757 = vmatpush1.msra.mxu0 0.0
        %1758 = vmatprep.subr.mxu0 0.0
        %1759 = vmatpush1.msra.mxu0 0.0
        %1760 = vmatprep.subr.mxu0 0.0
        %1761 = vmatpush1.msra.mxu0 0.0
        %1762 = vmatprep.subr.mxu0 0.0
        %1763 = vmatpush1.msra.mxu0 0.0
        %1764 = vmatprep.subr.mxu0 0.0
        %1765 = vmatpush1.msra.mxu0 0.0
        %1766 = vmatprep.subr.mxu0 0.0
        %1767 = vmatpush1.msra.mxu0 0.0
        %1768 = vmatprep.subr.mxu0 0.0
        %1769 = vmatpush1.msra.mxu0 0.0
        %1770 = vmatprep.subr.mxu0 0.0
        %1771 = vmatpush1.msra.mxu0 0.0
        %1772 = vmatprep.subr.mxu0 0.0
        %1773 = vmatpush1.msra.mxu0 0.0
        %1774 = vmatprep.subr.mxu0 0.0
        %1775 = vmatpush1.msra.mxu0 0.0
        %1776 = vmatprep.subr.mxu0 0.0
        %1777 = vmatpush1.msra.mxu0 0.0
        %1778 = vmatprep.subr.mxu0 0.0
        %1779 = vmatpush1.msra.mxu0 0.0
        %1780 = vmatprep.subr.mxu0 0.0
        %1781 = vmatpush1.msra.mxu0 0.0
        %1782 = vmatprep.subr.mxu0 0.0
        %1783 = vmatpush1.msra.mxu0 0.0
        %1784 = vmatprep.subr.mxu0 0.0
        %1785 = vmatpush1.msra.mxu0 0.0
        %1786 = vmatprep.subr.mxu0 0.0
        %1787 = vmatpush1.msra.mxu0 0.0
        %1788 = vmatprep.subr.mxu0 0.0
        %1789 = vmatpush1.msra.mxu0 0.0
        %1790 = vmatprep.subr.mxu0 0.0
        %1791 = vmatpush1.msra.mxu0 0.0
        %1792 = vmatprep.subr.mxu0 0.0
        %1793 = vmatpush1.msra.mxu0 0.0
        %1794 = vmatprep.subr.mxu0 0.0
        %1795 = vmatpush1.msra.mxu0 0.0
        %1796 = vmatprep.subr.mxu0 0.0
        %1797 = vmatpush1.msra.mxu0 0.0
        %1798 = vmatprep.subr.mxu0 0.0
        %1799 = vmatpush1.msra.mxu0 0.0
        %1800 = vmatprep.mubr.f32.mxu0 0.0
        %1801 = vmatmul.mubr.f32.gmra.mrb[0].mxu0 %v1734
        %v1802 = vpop.f32.mrb[0].mxu0
        %v1803 = vadd.f32 0.0, %v1802
        %v1804 = vpop.f32.mrb[0].mxu0
        %1805 = vdwg.mxu0
        %v1807 = vsel %vm813, %v1803, 0
        %1809 = vmatprep.subr.mxu0 0.0
        %1810 = vmatpush1.msra.mxu0 %v1634
        %1811 = vmatprep.subr.mxu0 0.0
        %1812 = vmatpush1.msra.mxu0 %v1635
        %1813 = vmatprep.subr.mxu0 0.0
        %1814 = vmatpush1.msra.mxu0 0.0
        %1815 = vmatprep.subr.mxu0 0.0
        %1816 = vmatpush1.msra.mxu0 0.0
        %1817 = vmatprep.subr.mxu0 0.0
        %1818 = vmatpush1.msra.mxu0 0.0
        %1819 = vmatprep.subr.mxu0 0.0
        %1820 = vmatpush1.msra.mxu0 0.0
        %1821 = vmatprep.subr.mxu0 0.0
        %1822 = vmatpush1.msra.mxu0 0.0
        %1823 = vmatprep.subr.mxu0 0.0
        %1824 = vmatpush1.msra.mxu0 0.0
        %1825 = vmatprep.subr.mxu0 0.0
        %1826 = vmatpush1.msra.mxu0 0.0
        %1827 = vmatprep.subr.mxu0 0.0
        %1828 = vmatpush1.msra.mxu0 0.0
        %1829 = vmatprep.subr.mxu0 0.0
        %1830 = vmatpush1.msra.mxu0 0.0
        %1831 = vmatprep.subr.mxu0 0.0
        %1832 = vmatpush1.msra.mxu0 0.0
        %1833 = vmatprep.subr.mxu0 0.0
        %1834 = vmatpush1.msra.mxu0 0.0
        %1835 = vmatprep.subr.mxu0 0.0
        %1836 = vmatpush1.msra.mxu0 0.0
        %1837 = vmatprep.subr.mxu0 0.0
        %1838 = vmatpush1.msra.mxu0 0.0
        %1839 = vmatprep.subr.mxu0 0.0
        %1840 = vmatpush1.msra.mxu0 0.0
        %1841 = vmatprep.subr.mxu0 0.0
        %1842 = vmatpush1.msra.mxu0 0.0
        %1843 = vmatprep.subr.mxu0 0.0
        %1844 = vmatpush1.msra.mxu0 0.0
        %1845 = vmatprep.subr.mxu0 0.0
        %1846 = vmatpush1.msra.mxu0 0.0
        %1847 = vmatprep.subr.mxu0 0.0
        %1848 = vmatpush1.msra.mxu0 0.0
        %1849 = vmatprep.subr.mxu0 0.0
        %1850 = vmatpush1.msra.mxu0 0.0
        %1851 = vmatprep.subr.mxu0 0.0
        %1852 = vmatpush1.msra.mxu0 0.0
        %1853 = vmatprep.subr.mxu0 0.0
        %1854 = vmatpush1.msra.mxu0 0.0
        %1855 = vmatprep.subr.mxu0 0.0
        %1856 = vmatpush1.msra.mxu0 0.0
        %1857 = vmatprep.subr.mxu0 0.0
        %1858 = vmatpush1.msra.mxu0 0.0
        %1859 = vmatprep.subr.mxu0 0.0
        %1860 = vmatpush1.msra.mxu0 0.0
        %1861 = vmatprep.subr.mxu0 0.0
        %1862 = vmatpush1.msra.mxu0 0.0
        %1863 = vmatprep.subr.mxu0 0.0
        %1864 = vmatpush1.msra.mxu0 0.0
        %1865 = vmatprep.subr.mxu0 0.0
        %1866 = vmatpush1.msra.mxu0 0.0
        %1867 = vmatprep.subr.mxu0 0.0
        %1868 = vmatpush1.msra.mxu0 0.0
        %1869 = vmatprep.subr.mxu0 0.0
        %1870 = vmatpush1.msra.mxu0 0.0
        %1871 = vmatprep.subr.mxu0 0.0
        %1872 = vmatpush1.msra.mxu0 0.0
        %1873 = vmatprep.mubr.f32.mxu0 0.0
        %1874 = vmatmul.mubr.f32.gmra.mrb[0].mxu0 %v1807
        %v1875 = vpop.f32.mrb[0].mxu0
        %v1876 = vadd.f32 0.0, %v1875
        %v1877 = vpop.f32.mrb[0].mxu0
        %1878 = vdwg.mxu0
        %v1880 = vlaneseq
        %v1881 = vshrl.u32 %v1880, 7
        %v1882 = vsub.s32 0, %v1881
        %v1883 = vrot.slane %v1639, %v1882
        %v1885 = vadd.f32 %v1883, %v1876
        %1886 = vrot.lane.b32.xlu0 %v1630, 112
        %v1887 = vpop.permute.xlu0 %1886
        %1888 = vrot.lane.b32.xlu0 %v1630, 80
        %v1889 = vpop.permute.xlu0 %1888
        %v1890 = vsel %vm813, %v1887, 0
        %v1892 = vsel %vm813, %v1889, 0
        %1894 = vmatprep.subr.mxu0 0.0
        %1895 = vmatpush1.xpose.msra.mxu0 %v1892
        %1896 = vmatprep.subr.mxu0 0.0
        %1897 = vmatpush1.xpose.msra.mxu0 0.0
        %1898 = vmatprep.subr.mxu0 0.0
        %1899 = vmatpush1.xpose.msra.mxu0 0.0
        %1900 = vmatprep.subr.mxu0 0.0
        %1901 = vmatpush1.xpose.msra.mxu0 0.0
        %1902 = vmatprep.subr.mxu0 0.0
        %1903 = vmatpush1.xpose.msra.mxu0 0.0
        %1904 = vmatprep.subr.mxu0 0.0
        %1905 = vmatpush1.xpose.msra.mxu0 0.0
        %1906 = vmatprep.subr.mxu0 0.0
        %1907 = vmatpush1.xpose.msra.mxu0 0.0
        %1908 = vmatprep.subr.mxu0 0.0
        %1909 = vmatpush1.xpose.msra.mxu0 0.0
        %1910 = vmatprep.subr.mxu0 0.0
        %1911 = vmatpush1.xpose.msra.mxu0 0.0
        %1912 = vmatprep.subr.mxu0 0.0
        %1913 = vmatpush1.xpose.msra.mxu0 0.0
        %1914 = vmatprep.subr.mxu0 0.0
        %1915 = vmatpush1.xpose.msra.mxu0 0.0
        %1916 = vmatprep.subr.mxu0 0.0
        %1917 = vmatpush1.xpose.msra.mxu0 0.0
        %1918 = vmatprep.subr.mxu0 0.0
        %1919 = vmatpush1.xpose.msra.mxu0 0.0
        %1920 = vmatprep.subr.mxu0 0.0
        %1921 = vmatpush1.xpose.msra.mxu0 0.0
        %1922 = vmatprep.subr.mxu0 0.0
        %1923 = vmatpush1.xpose.msra.mxu0 0.0
        %1924 = vmatprep.subr.mxu0 0.0
        %1925 = vmatpush1.xpose.msra.mxu0 0.0
        %1926 = vmatprep.subr.mxu0 0.0
        %1927 = vmatpush1.xpose.msra.mxu0 0.0
        %1928 = vmatprep.subr.mxu0 0.0
        %1929 = vmatpush1.xpose.msra.mxu0 0.0
        %1930 = vmatprep.subr.mxu0 0.0
        %1931 = vmatpush1.xpose.msra.mxu0 0.0
        %1932 = vmatprep.subr.mxu0 0.0
        %1933 = vmatpush1.xpose.msra.mxu0 0.0
        %1934 = vmatprep.subr.mxu0 0.0
        %1935 = vmatpush1.xpose.msra.mxu0 0.0
        %1936 = vmatprep.subr.mxu0 0.0
        %1937 = vmatpush1.xpose.msra.mxu0 0.0
        %1938 = vmatprep.subr.mxu0 0.0
        %1939 = vmatpush1.xpose.msra.mxu0 0.0
        %1940 = vmatprep.subr.mxu0 0.0
        %1941 = vmatpush1.xpose.msra.mxu0 0.0
        %1942 = vmatprep.subr.mxu0 0.0
        %1943 = vmatpush1.xpose.msra.mxu0 0.0
        %1944 = vmatprep.subr.mxu0 0.0
        %1945 = vmatpush1.xpose.msra.mxu0 0.0
        %1946 = vmatprep.subr.mxu0 0.0
        %1947 = vmatpush1.xpose.msra.mxu0 0.0
        %1948 = vmatprep.subr.mxu0 0.0
        %1949 = vmatpush1.xpose.msra.mxu0 0.0
        %1950 = vmatprep.subr.mxu0 0.0
        %1951 = vmatpush1.xpose.msra.mxu0 0.0
        %1952 = vmatprep.subr.mxu0 0.0
        %1953 = vmatpush1.xpose.msra.mxu0 0.0
        %1954 = vmatprep.subr.mxu0 0.0
        %1955 = vmatpush1.xpose.msra.mxu0 0.0
        %1956 = vmatprep.subr.mxu0 0.0
        %1957 = vmatpush1.xpose.msra.mxu0 0.0
        %1958 = vmatprep.mubr.f32.mxu0 0.0
        %1959 = vmatmul.mubr.f32.gmra.mrb[0].mxu0 %v1890
        %v1960 = vpop.f32.mrb[0].mxu0
        %v1961 = vadd.f32 0.0, %v1960
        %v1962 = vpop.f32.mrb[0].mxu0
        %1963 = vdwg.mxu0
        %v1964 = vmul.f32 %v1961, 0.25
        %v1965 = vadd.f32 %v1964, %v893
        %v1966 = vsel %vm896, %v1965, -inf
        %1967 = vmax.xlane.f32.xlu0 %v1966
        %v1968 = vpop.xlane.xlu0 %1967
        %v1969 = vsub.f32 %v1965, %v1968
        %v1970 = vmul.f32 %v1969, 1.442695
        %v1971 = vpow.pop %v1970
        %v1972 = vsel %vm896, %v1971, 0.0
        %1973 = vadd.xlane.f32.xlu0 %v1972
        %v1974 = vpop.xlane.xlu0 %1973
        %v1975 = vrcp.pop %v1974
        %v1976 = vmul.f32 %v1971, %v1975
        %1977 = vrot.lane.b32.xlu0 %v1630, 48
        %v1978 = vpop.permute.xlu0 %1977
        %v1981 = vsel %vm896, %v1976, 0
        %1983 = vmatprep.subr.mxu0 0.0
        %1984 = vmatpush1.msra.mxu0 %v1978
        %1985 = vmatprep.subr.mxu0 0.0
        %1986 = vmatpush1.msra.mxu0 0.0
        %1987 = vmatprep.subr.mxu0 0.0
        %1988 = vmatpush1.msra.mxu0 0.0
        %1989 = vmatprep.subr.mxu0 0.0
        %1990 = vmatpush1.msra.mxu0 0.0
        %1991 = vmatprep.subr.mxu0 0.0
        %1992 = vmatpush1.msra.mxu0 0.0
        %1993 = vmatprep.subr.mxu0 0.0
        %1994 = vmatpush1.msra.mxu0 0.0
        %1995 = vmatprep.subr.mxu0 0.0
        %1996 = vmatpush1.msra.mxu0 0.0
        %1997 = vmatprep.subr.mxu0 0.0
        %1998 = vmatpush1.msra.mxu0 0.0
        %1999 = vmatprep.subr.mxu0 0.0
        %2000 = vmatpush1.msra.mxu0 0.0
        %2001 = vmatprep.subr.mxu0 0.0
        %2002 = vmatpush1.msra.mxu0 0.0
        %2003 = vmatprep.subr.mxu0 0.0
        %2004 = vmatpush1.msra.mxu0 0.0
        %2005 = vmatprep.subr.mxu0 0.0
        %2006 = vmatpush1.msra.mxu0 0.0
        %2007 = vmatprep.subr.mxu0 0.0
        %2008 = vmatpush1.msra.mxu0 0.0
        %2009 = vmatprep.subr.mxu0 0.0
        %2010 = vmatpush1.msra.mxu0 0.0
        %2011 = vmatprep.subr.mxu0 0.0
        %2012 = vmatpush1.msra.mxu0 0.0
        %2013 = vmatprep.subr.mxu0 0.0
        %2014 = vmatpush1.msra.mxu0 0.0
        %2015 = vmatprep.subr.mxu0 0.0
        %2016 = vmatpush1.msra.mxu0 0.0
        %2017 = vmatprep.subr.mxu0 0.0
        %2018 = vmatpush1.msra.mxu0 0.0
        %2019 = vmatprep.subr.mxu0 0.0
        %2020 = vmatpush1.msra.mxu0 0.0
        %2021 = vmatprep.subr.mxu0 0.0
        %2022 = vmatpush1.msra.mxu0 0.0
        %2023 = vmatprep.subr.mxu0 0.0
        %2024 = vmatpush1.msra.mxu0 0.0
        %2025 = vmatprep.subr.mxu0 0.0
        %2026 = vmatpush1.msra.mxu0 0.0
        %2027 = vmatprep.subr.mxu0 0.0
        %2028 = vmatpush1.msra.mxu0 0.0
        %2029 = vmatprep.subr.mxu0 0.0
        %2030 = vmatpush1.msra.mxu0 0.0
        %2031 = vmatprep.subr.mxu0 0.0
        %2032 = vmatpush1.msra.mxu0 0.0
        %2033 = vmatprep.subr.mxu0 0.0
        %2034 = vmatpush1.msra.mxu0 0.0
        %2035 = vmatprep.subr.mxu0 0.0
        %2036 = vmatpush1.msra.mxu0 0.0
        %2037 = vmatprep.subr.mxu0 0.0
        %2038 = vmatpush1.msra.mxu0 0.0
        %2039 = vmatprep.subr.mxu0 0.0
        %2040 = vmatpush1.msra.mxu0 0.0
        %2041 = vmatprep.subr.mxu0 0.0
        %2042 = vmatpush1.msra.mxu0 0.0
        %2043 = vmatprep.subr.mxu0 0.0
        %2044 = vmatpush1.msra.mxu0 0.0
        %2045 = vmatprep.subr.mxu0 0.0
        %2046 = vmatpush1.msra.mxu0 0.0
        %2047 = vmatprep.mubr.f32.mxu0 0.0
        %2048 = vmatmul.mubr.f32.gmra.mrb[0].mxu0 %v1981
        %v2049 = vpop.f32.mrb[0].mxu0
        %v2050 = vadd.f32 0.0, %v2049
        %v2051 = vpop.f32.mrb[0].mxu0
        %2052 = vdwg.mxu0
        %v2054 = vsel %vm813, %v2050, 0
        %2056 = vmatprep.subr.mxu0 0.0
        %2057 = vmatpush1.msra.mxu0 %v1636
        %2058 = vmatprep.subr.mxu0 0.0
        %2059 = vmatpush1.msra.mxu0 %v1637
        %2060 = vmatprep.subr.mxu0 0.0
        %2061 = vmatpush1.msra.mxu0 0.0
        %2062 = vmatprep.subr.mxu0 0.0
        %2063 = vmatpush1.msra.mxu0 0.0
        %2064 = vmatprep.subr.mxu0 0.0
        %2065 = vmatpush1.msra.mxu0 0.0
        %2066 = vmatprep.subr.mxu0 0.0
        %2067 = vmatpush1.msra.mxu0 0.0
        %2068 = vmatprep.subr.mxu0 0.0
        %2069 = vmatpush1.msra.mxu0 0.0
        %2070 = vmatprep.subr.mxu0 0.0
        %2071 = vmatpush1.msra.mxu0 0.0
        %2072 = vmatprep.subr.mxu0 0.0
        %2073 = vmatpush1.msra.mxu0 0.0
        %2074 = vmatprep.subr.mxu0 0.0
        %2075 = vmatpush1.msra.mxu0 0.0
        %2076 = vmatprep.subr.mxu0 0.0
        %2077 = vmatpush1.msra.mxu0 0.0
        %2078 = vmatprep.subr.mxu0 0.0
        %2079 = vmatpush1.msra.mxu0 0.0
        %2080 = vmatprep.subr.mxu0 0.0
        %2081 = vmatpush1.msra.mxu0 0.0
        %2082 = vmatprep.subr.mxu0 0.0
        %2083 = vmatpush1.msra.mxu0 0.0
        %2084 = vmatprep.subr.mxu0 0.0
        %2085 = vmatpush1.msra.mxu0 0.0
        %2086 = vmatprep.subr.mxu0 0.0
        %2087 = vmatpush1.msra.mxu0 0.0
        %2088 = vmatprep.subr.mxu0 0.0
        %2089 = vmatpush1.msra.mxu0 0.0
        %2090 = vmatprep.subr.mxu0 0.0
        %2091 = vmatpush1.msra.mxu0 0.0
        %2092 = vmatprep.subr.mxu0 0.0
        %2093 = vmatpush1.msra.mxu0 0.0
        %2094 = vmatprep.subr.mxu0 0.0
        %2095 = vmatpush1.msra.mxu0 0.0
        %2096 = vmatprep.subr.mxu0 0.0
        %2097 = vmatpush1.msra.mxu0 0.0
        %2098 = vmatprep.subr.mxu0 0.0
        %2099 = vmatpush1.msra.mxu0 0.0
        %2100 = vmatprep.subr.mxu0 0.0
        %2101 = vmatpush1.msra.mxu0 0.0
        %2102 = vmatprep.subr.mxu0 0.0
        %2103 = vmatpush1.msra.mxu0 0.0
        %2104 = vmatprep.subr.mxu0 0.0
        %2105 = vmatpush1.msra.mxu0 0.0
        %2106 = vmatprep.subr.mxu0 0.0
        %2107 = vmatpush1.msra.mxu0 0.0
        %2108 = vmatprep.subr.mxu0 0.0
        %2109 = vmatpush1.msra.mxu0 0.0
        %2110 = vmatprep.subr.mxu0 0.0
        %2111 = vmatpush1.msra.mxu0 0.0
        %2112 = vmatprep.subr.mxu0 0.0
        %2113 = vmatpush1.msra.mxu0 0.0
        %2114 = vmatprep.subr.mxu0 0.0
        %2115 = vmatpush1.msra.mxu0 0.0
        %2116 = vmatprep.subr.mxu0 0.0
        %2117 = vmatpush1.msra.mxu0 0.0
        %2118 = vmatprep.subr.mxu0 0.0
        %2119 = vmatpush1.msra.mxu0 0.0
        %2120 = vmatprep.mubr.f32.mxu0 0.0
        %2121 = vmatmul.mubr.f32.gmra.mrb[0].mxu0 %v2054
        %v2122 = vpop.f32.mrb[0].mxu0
        %v2123 = vadd.f32 0.0, %v2122
        %v2124 = vpop.f32.mrb[0].mxu0
        %2125 = vdwg.mxu0
        %v2126 = vadd.f32 %v1885, %v2123
        %v2127 = vadd.f32 %v2126, %v1546
        %s2128 = scalar_lea.vmem [#allocation11], 1
        %v2129 = vld [vmem:[%s2128] sm:$0x1]
        %s2130 = scalar_lea.vmem [#allocation13], 1
        %v2131 = vld [vmem:[%s2130] sm:$0x1]
        %v2132 = vsel %vm691, %v2127, 0.0
        %2133 = vadd.xlane.f32.xlu0 %v2132
        %v2134 = vpop.xlane.xlu0 %2133
        %v2135 = vmul.f32 %v2134, %v695
        %v2136 = vsub.f32 %v2127, %v2135
        %v2137 = vmul.f32 %v2136, %v2136
        %v2138 = vsel %vm691, %v2137, 0.0
        %2139 = vadd.xlane.f32.xlu0 %v2138
        %v2140 = vpop.xlane.xlu0 %2139
        %v2141 = vmul.f32 %v2140, %v695
        %v2142 = vadd.f32 %v2141, 1e-12
        %v2143 = vrsqrt.pop %v2142
        %v2144 = vmul.f32 %v2136, %v2143
        %v2146 = vlaneseq
        %v2147 = vshrl.u32 %v2146, 7
        %v2148 = vsub.s32 0, %v2147
        %v2149 = vrot.slane %v2129, %v2148
        %v2151 = vmul.f32 %v2144, %v2149
        %v2153 = vlaneseq
        %v2154 = vshrl.u32 %v2153, 7
        %v2155 = vsub.s32 0, %v2154
        %v2156 = vrot.slane %v2131, %v2155
        %v2158 = vadd.f32 %v2151, %v2156
        %s2159 = scalar_lea.vmem %s10, 32
        %v2160 = vld [vmem:[%s2159] sm:$0xff]
        %v2161 = vld [vmem:[%s2159 + $0x8] sm:$0xff]
        %v2162 = vld [vmem:[%s2159 + $0x10] sm:$0xff]
        %v2163 = vld [vmem:[%s2159 + $0x18] sm:$0xff]
        %s2164 = scalar_lea.vmem %s11, 1
        %v2165 = vld [vmem:[%s2164] sm:$0x1]
        %v2167 = vlaneseq
        %v2168 = vshrl.u32 %v2167, 7
        %v2169 = vsub.s32 0, %v2168
        %v2170 = vrot.slane %v2165, %v2169
        %v2173 = vsel %vm691, %v2158, 0
        %2175 = vmatprep.subr.mxu0 0.0
        %2176 = vmatpush1.msra.mxu0 %v2160
        %2177 = vmatprep.subr.mxu0 0.0
        %2178 = vmatpush1.msra.mxu0 %v2161
        %2179 = vmatprep.subr.mxu0 0.0
        %2180 = vmatpush1.msra.mxu0 %v2162
        %2181 = vmatprep.subr.mxu0 0.0
        %2182 = vmatpush1.msra.mxu0 %v2163
        %2183 = vmatprep.subr.mxu0 0.0
        %2184 = vmatpush1.msra.mxu0 0.0
        %2185 = vmatprep.subr.mxu0 0.0
        %2186 = vmatpush1.msra.mxu0 0.0
        %2187 = vmatprep.subr.mxu0 0.0
        %2188 = vmatpush1.msra.mxu0 0.0
        %2189 = vmatprep.subr.mxu0 0.0
        %2190 = vmatpush1.msra.mxu0 0.0
        %2191 = vmatprep.subr.mxu0 0.0
        %2192 = vmatpush1.msra.mxu0 0.0
        %2193 = vmatprep.subr.mxu0 0.0
        %2194 = vmatpush1.msra.mxu0 0.0
        %2195 = vmatprep.subr.mxu0 0.0
        %2196 = vmatpush1.msra.mxu0 0.0
        %2197 = vmatprep.subr.mxu0 0.0
        %2198 = vmatpush1.msra.mxu0 0.0
        %2199 = vmatprep.subr.mxu0 0.0
        %2200 = vmatpush1.msra.mxu0 0.0
        %2201 = vmatprep.subr.mxu0 0.0
        %2202 = vmatpush1.msra.mxu0 0.0
        %2203 = vmatprep.subr.mxu0 0.0
        %2204 = vmatpush1.msra.mxu0 0.0
        %2205 = vmatprep.subr.mxu0 0.0
        %2206 = vmatpush1.msra.mxu0 0.0
        %2207 = vmatprep.subr.mxu0 0.0
        %2208 = vmatpush1.msra.mxu0 0.0
        %2209 = vmatprep.subr.mxu0 0.0
        %2210 = vmatpush1.msra.mxu0 0.0
        %2211 = vmatprep.subr.mxu0 0.0
        %2212 = vmatpush1.msra.mxu0 0.0
        %2213 = vmatprep.subr.mxu0 0.0
        %2214 = vmatpush1.msra.mxu0 0.0
        %2215 = vmatprep.subr.mxu0 0.0
        %2216 = vmatpush1.msra.mxu0 0.0
        %2217 = vmatprep.subr.mxu0 0.0
        %2218 = vmatpush1.msra.mxu0 0.0
        %2219 = vmatprep.subr.mxu0 0.0
        %2220 = vmatpush1.msra.mxu0 0.0
        %2221 = vmatprep.subr.mxu0 0.0
        %2222 = vmatpush1.msra.mxu0 0.0
        %2223 = vmatprep.subr.mxu0 0.0
        %2224 = vmatpush1.msra.mxu0 0.0
        %2225 = vmatprep.subr.mxu0 0.0
        %2226 = vmatpush1.msra.mxu0 0.0
        %2227 = vmatprep.subr.mxu0 0.0
        %2228 = vmatpush1.msra.mxu0 0.0
        %2229 = vmatprep.subr.mxu0 0.0
        %2230 = vmatpush1.msra.mxu0 0.0
        %2231 = vmatprep.subr.mxu0 0.0
        %2232 = vmatpush1.msra.mxu0 0.0
        %2233 = vmatprep.subr.mxu0 0.0
        %2234 = vmatpush1.msra.mxu0 0.0
        %2235 = vmatprep.subr.mxu0 0.0
        %2236 = vmatpush1.msra.mxu0 0.0
        %2237 = vmatprep.subr.mxu0 0.0
        %2238 = vmatpush1.msra.mxu0 0.0
        %2239 = vmatprep.mubr.f32.mxu0 0.0
        %2240 = vmatmul.mubr.f32.gmra.mrb[0].mxu0 %v2173
        %v2241 = vpop.f32.mrb[0].mxu0
        %v2242 = vadd.f32 %v2170, %v2241
        %v2243 = vpop.f32.mrb[0].mxu0
        %2244 = vdwg.mxu0
        %v2245 = vmul.f32 %v2242, 0.5
        %v2246 = vmul.f32 %v2242, 0.044715
        %v2247 = vmul.f32 %v2246, %v2242
        %v2248 = vmul.f32 %v2247, %v2242
        %v2249 = vadd.f32 %v2242, %v2248
        %v2250 = vmul.f32 %v2249, 0.7978846
        %v2251 = vtanh.pop %v2250
        %v2252 = vadd.f32 %v2251, 1.0
        %v2253 = vmul.f32 %v2245, %v2252
        %s2254 = scalar_lea.vmem %s12, 64
        %v2255 = vld [vmem:[%s2254] sm:$0xff]
        %v2256 = vld [vmem:[%s2254 + $0x8] sm:$0xff]
        %v2257 = vld [vmem:[%s2254 + $0x10] sm:$0xff]
        %v2258 = vld [vmem:[%s2254 + $0x18] sm:$0xff]
        %v2259 = vld [vmem:[%s2254 + $0x20] sm:$0xff]
        %v2260 = vld [vmem:[%s2254 + $0x28] sm:$0xff]
        %v2261 = vld [vmem:[%s2254 + $0x30] sm:$0xff]
        %v2262 = vld [vmem:[%s2254 + $0x38] sm:$0xff]
        %s2263 = scalar_lea.vmem %s13, 1
        %v2264 = vld [vmem:[%s2263] sm:$0x1]
        %v2266 = vlaneseq
        %v2267 = vshrl.u32 %v2266, 7
        %v2268 = vsub.s32 0, %v2267
        %v2269 = vrot.slane %v2264, %v2268
        %v2272 = vsel %vm1443, %v2253, 0
        %2274 = vmatprep.subr.mxu0 0.0
        %2275 = vmatpush1.msra.mxu0 %v2255
        %2276 = vmatprep.subr.mxu0 0.0
        %2277 = vmatpush1.msra.mxu0 %v2256
        %2278 = vmatprep.subr.mxu0 0.0
        %2279 = vmatpush1.msra.mxu0 %v2257
        %2280 = vmatprep.subr.mxu0 0.0
        %2281 = vmatpush1.msra.mxu0 %v2258
        %2282 = vmatprep.subr.mxu0 0.0
        %2283 = vmatpush1.msra.mxu0 %v2259
        %2284 = vmatprep.subr.mxu0 0.0
        %2285 = vmatpush1.msra.mxu0 %v2260
        %2286 = vmatprep.subr.mxu0 0.0
        %2287 = vmatpush1.msra.mxu0 %v2261
        %2288 = vmatprep.subr.mxu0 0.0
        %2289 = vmatpush1.msra.mxu0 %v2262
        %2290 = vmatprep.subr.mxu0 0.0
        %2291 = vmatpush1.msra.mxu0 0.0
        %2292 = vmatprep.subr.mxu0 0.0
        %2293 = vmatpush1.msra.mxu0 0.0
        %2294 = vmatprep.subr.mxu0 0.0
        %2295 = vmatpush1.msra.mxu0 0.0
        %2296 = vmatprep.subr.mxu0 0.0
        %2297 = vmatpush1.msra.mxu0 0.0
        %2298 = vmatprep.subr.mxu0 0.0
        %2299 = vmatpush1.msra.mxu0 0.0
        %2300 = vmatprep.subr.mxu0 0.0
        %2301 = vmatpush1.msra.mxu0 0.0
        %2302 = vmatprep.subr.mxu0 0.0
        %2303 = vmatpush1.msra.mxu0 0.0
        %2304 = vmatprep.subr.mxu0 0.0
        %2305 = vmatpush1.msra.mxu0 0.0
        %2306 = vmatprep.subr.mxu0 0.0
        %2307 = vmatpush1.msra.mxu0 0.0
        %2308 = vmatprep.subr.mxu0 0.0
        %2309 = vmatpush1.msra.mxu0 0.0
        %2310 = vmatprep.subr.mxu0 0.0
        %2311 = vmatpush1.msra.mxu0 0.0
        %2312 = vmatprep.subr.mxu0 0.0
        %2313 = vmatpush1.msra.mxu0 0.0
        %2314 = vmatprep.subr.mxu0 0.0
        %2315 = vmatpush1.msra.mxu0 0.0
        %2316 = vmatprep.subr.mxu0 0.0
        %2317 = vmatpush1.msra.mxu0 0.0
        %2318 = vmatprep.subr.mxu0 0.0
        %2319 = vmatpush1.msra.mxu0 0.0
        %2320 = vmatprep.subr.mxu0 0.0
        %2321 = vmatpush1.msra.mxu0 0.0
        %2322 = vmatprep.subr.mxu0 0.0
        %2323 = vmatpush1.msra.mxu0 0.0
        %2324 = vmatprep.subr.mxu0 0.0
        %2325 = vmatpush1.msra.mxu0 0.0
        %2326 = vmatprep.subr.mxu0 0.0
        %2327 = vmatpush1.msra.mxu0 0.0
        %2328 = vmatprep.subr.mxu0 0.0
        %2329 = vmatpush1.msra.mxu0 0.0
        %2330 = vmatprep.subr.mxu0 0.0
        %2331 = vmatpush1.msra.mxu0 0.0
        %2332 = vmatprep.subr.mxu0 0.0
        %2333 = vmatpush1.msra.mxu0 0.0
        %2334 = vmatprep.subr.mxu0 0.0
        %2335 = vmatpush1.msra.mxu0 0.0
        %2336 = vmatprep.subr.mxu0 0.0
        %2337 = vmatpush1.msra.mxu0 0.0
        %2338 = vmatprep.mubr.f32.mxu0 0.0
        %2339 = vmatmul.mubr.f32.gmra.mrb[0].mxu0 %v2272
        %v2340 = vpop.f32.mrb[0].mxu0
        %v2341 = vadd.f32 %v2269, %v2340
        %v2342 = vpop.f32.mrb[0].mxu0
        %2343 = vdwg.mxu0
        %v2344 = vadd.f32 %v2341, %v2158
        %s2345 = scalar_lea.vmem %s14, 1
        %v2346 = vld [vmem:[%s2345] sm:$0x1]
        %s2347 = scalar_lea.vmem %s15, 1
        %v2348 = vld [vmem:[%s2347] sm:$0x1]
        %v2349 = vsel %vm691, %v2344, 0.0
        %2350 = vadd.xlane.f32.xlu0 %v2349
        %v2351 = vpop.xlane.xlu0 %2350
        %v2352 = vmul.f32 %v2351, %v695
        %v2353 = vsub.f32 %v2344, %v2352
        %v2354 = vmul.f32 %v2353, %v2353
        %v2355 = vsel %vm691, %v2354, 0.0
        %2356 = vadd.xlane.f32.xlu0 %v2355
        %v2357 = vpop.xlane.xlu0 %2356
        %v2358 = vmul.f32 %v2357, %v695
        %v2359 = vadd.f32 %v2358, 1e-12
        %v2360 = vrsqrt.pop %v2359
        %v2361 = vmul.f32 %v2353, %v2360
        %v2363 = vlaneseq
        %v2364 = vshrl.u32 %v2363, 7
        %v2365 = vsub.s32 0, %v2364
        %v2366 = vrot.slane %v2346, %v2365
        %v2368 = vmul.f32 %v2361, %v2366
        %v2370 = vlaneseq
        %v2371 = vshrl.u32 %v2370, 7
        %v2372 = vsub.s32 0, %v2371
        %v2373 = vrot.slane %v2348, %v2372
        %v2375 = vadd.f32 %v2368, %v2373
        %v2376 = vld [vmem:[%s16] sm:$0xff]
        %v2377 = vld [vmem:[%s16 + $0x8] sm:$0xff]
        %v2378 = vld [vmem:[%s16 + $0x10] sm:$0xff]
        %v2379 = vld [vmem:[%s16 + $0x18] sm:$0xff]
        %v2380 = vld [vmem:[%s17] sm:$0x1]
        %v2382 = vlaneseq
        %v2383 = vshrl.u32 %v2382, 7
        %v2384 = vsub.s32 0, %v2383
        %v2385 = vrot.slane %v2380, %v2384
        %v2388 = vsel %vm691, %v2375, 0
        %2390 = vmatprep.subr.mxu0 0.0
        %2391 = vmatpush1.msra.mxu0 %v2376
        %2392 = vmatprep.subr.mxu0 0.0
        %2393 = vmatpush1.msra.mxu0 %v2377
        %2394 = vmatprep.subr.mxu0 0.0
        %2395 = vmatpush1.msra.mxu0 %v2378
        %2396 = vmatprep.subr.mxu0 0.0
        %2397 = vmatpush1.msra.mxu0 %v2379
        %2398 = vmatprep.subr.mxu0 0.0
        %2399 = vmatpush1.msra.mxu0 0.0
        %2400 = vmatprep.subr.mxu0 0.0
        %2401 = vmatpush1.msra.mxu0 0.0
        %2402 = vmatprep.subr.mxu0 0.0
        %2403 = vmatpush1.msra.mxu0 0.0
        %2404 = vmatprep.subr.mxu0 0.0
        %2405 = vmatpush1.msra.mxu0 0.0
        %2406 = vmatprep.subr.mxu0 0.0
        %2407 = vmatpush1.msra.mxu0 0.0
        %2408 = vmatprep.subr.mxu0 0.0
        %2409 = vmatpush1.msra.mxu0 0.0
        %2410 = vmatprep.subr.mxu0 0.0
        %2411 = vmatpush1.msra.mxu0 0.0
        %2412 = vmatprep.subr.mxu0 0.0
        %2413 = vmatpush1.msra.mxu0 0.0
        %2414 = vmatprep.subr.mxu0 0.0
        %2415 = vmatpush1.msra.mxu0 0.0
        %2416 = vmatprep.subr.mxu0 0.0
        %2417 = vmatpush1.msra.mxu0 0.0
        %2418 = vmatprep.subr.mxu0 0.0
        %2419 = vmatpush1.msra.mxu0 0.0
        %2420 = vmatprep.subr.mxu0 0.0
        %2421 = vmatpush1.msra.mxu0 0.0
        %2422 = vmatprep.subr.mxu0 0.0
        %2423 = vmatpush1.msra.mxu0 0.0
        %2424 = vmatprep.subr.mxu0 0.0
        %2425 = vmatpush1.msra.mxu0 0.0
        %2426 = vmatprep.subr.mxu0 0.0
        %2427 = vmatpush1.msra.mxu0 0.0
        %2428 = vmatprep.subr.mxu0 0.0
        %2429 = vmatpush1.msra.mxu0 0.0
        %2430 = vmatprep.subr.mxu0 0.0
        %2431 = vmatpush1.msra.mxu0 0.0
        %2432 = vmatprep.subr.mxu0 0.0
        %2433 = vmatpush1.msra.mxu0 0.0
        %2434 = vmatprep.subr.mxu0 0.0
        %2435 = vmatpush1.msra.mxu0 0.0
        %2436 = vmatprep.subr.mxu0 0.0
        %2437 = vmatpush1.msra.mxu0 0.0
        %2438 = vmatprep.subr.mxu0 0.0
        %2439 = vmatpush1.msra.mxu0 0.0
        %2440 = vmatprep.subr.mxu0 0.0
        %2441 = vmatpush1.msra.mxu0 0.0
        %2442 = vmatprep.subr.mxu0 0.0
        %2443 = vmatpush1.msra.mxu0 0.0
        %2444 = vmatprep.subr.mxu0 0.0
        %2445 = vmatpush1.msra.mxu0 0.0
        %2446 = vmatprep.subr.mxu0 0.0
        %2447 = vmatpush1.msra.mxu0 0.0
        %2448 = vmatprep.subr.mxu0 0.0
        %2449 = vmatpush1.msra.mxu0 0.0
        %2450 = vmatprep.subr.mxu0 0.0
        %2451 = vmatpush1.msra.mxu0 0.0
        %2452 = vmatprep.subr.mxu0 0.0
        %2453 = vmatpush1.msra.mxu0 0.0
        %2454 = vmatprep.mubr.f32.mxu0 0.0
        %2455 = vmatmul.mubr.f32.gmra.mrb[0].mxu0 %v2388
        %v2456 = vpop.f32.mrb[0].mxu0
        %v2457 = vadd.f32 %v2385, %v2456
        %v2458 = vpop.f32.mrb[0].mxu0
        %2459 = vdwg.mxu0
        %2460 = vst [vmem:[%s684] sm:$0xff] %v2457
        %s2461 = sand.u32 %s434, 1
        %s2462 = scalar_lea.sflag [#allocation4], %s2461
        %s2463 = sand.u32 %s434, 1
        %s2464 = smul.addr %s2463, 8
        %s2465 = scalar_lea.vmem [#allocation14], %s2464
        // Predicated region
        $region121: #{tpu_custom_call.1} parent=91 // pred_check
          %p2466 = pneg %p444
        $region122: #{tpu_custom_call.1} parent=91 // pred_check_branch
          %2468 = sbr.rel (%p2466) target = $region124
        $region123: #{tpu_custom_call.1} parent=91 // pred_region
          %s2470 = ssub.s32 128, 128
          %2471 = vsyncadd %s2462, %s2470
          %s2472 = smul.addr %s38, 128
          %s2473 = scalar_lea.hbm %s18, %s2472
          %s2475 = sshll.u32 %s2465, 4
          %s2476 = int_to_ptr.vmem [resolvable:$true] %s2475
          %2478 = dma.vmem_to_hbm [thread:$0]  %s2476, 128, %s2473, %s2462
        $region124: #{tpu_custom_call.1} parent=91 // pred_fallthru
          _
      $region92: #{tpu_custom_call.1} parent=5 // pred_fallthru
        _
      %p2479 = scmp.le.s32.totalorder 2, %s33
      // Predicated region
      $region125: #{tpu_custom_call.1} parent=5 // pred_check
        %p2480 = pneg %p2479
      $region126: #{tpu_custom_call.1} parent=5 // pred_check_branch
        %2482 = sbr.rel (%p2480) target = $region128
      $region127: #{tpu_custom_call.1} parent=5 // pred_region
        %s2483 = ssub.s32 %s33, 2
        // Predicated region
        $region129: #{tpu_custom_call.1} parent=127 // pred_check
          %p2484 = pneg %p450
        $region130: #{tpu_custom_call.1} parent=127 // pred_check_branch
          %2486 = sbr.rel (%p2484) target = $region132
        $region131: #{tpu_custom_call.1} parent=127 // pred_region
          %s2487 = sand.u32 %s435, 1
          %s2488 = scalar_lea.sflag [#allocation4], %s2487
          %s2489 = sand.u32 %s435, 1
          %s2490 = smul.addr %s2489, 8
          %s2491 = scalar_lea.vmem [#allocation14], %s2490
          %2492 = dma.done %s2488, 128
        $region132: #{tpu_custom_call.1} parent=127 // pred_fallthru
          _
      $region128: #{tpu_custom_call.1} parent=5 // pred_fallthru
        _
    $region6: #{tpu_custom_call.1} parent=1 // loop_footer
      %s37 = sadd.s32 1, %s33
    $region7: #{tpu_custom_call.1} parent=1 // loop_footer_branch
      %32 = sbr.rel target = $region3
    $region8: #{tpu_custom_call.1} parent=1 // loop_exit
      _
    %2493 = vsyncpa [#allocation3], 1
    %s2494 = scalar_lea.sflag [#allocation3], 1
    %2495 = vsyncpa %s2494, 1
    %2496 = vsyncpa [#allocation6], 1
    %2497 = vsyncpa [#allocation9], 1
    %2498 = vsyncpa [#allocation12], 1
    %2499 = vsyncpa [#allocation4], 1
    %s2500 = scalar_lea.sflag [#allocation4], 1
    %2501 = vsyncpa %s2500, 1

</llo_original>
